<compile_context>
chip_gen: v5e
topology: v5e:2x2
jax: 0.10.0
libtpu: 0.0.40
codegen_flags: <defaults>
</compile_context>

<pallas_src>
import jax
import jax.numpy as jnp
from jax import lax
from jax.experimental import pallas as pl
from jax.experimental.pallas import tpu as pltpu


def _round_up(x, m):
    return (x + m - 1) // m * m


# ----------------------------------------------------------------------------
# Kernel 1: Gi = X @ W_ih + (b_ih + b_hh[r,z]) for both directions, row-tiled.
# x [2, R, Ep] bf16, wih [2, Ep, 3Hp] bf16, bias [2, 1, 3Hp] f32
#   -> gi [2, R, 3Hp] bf16       (R = Tp * Bp, tiled in TM-row blocks)
# ----------------------------------------------------------------------------
def _gi_kernel(x_ref, wih_ref, b_ref, gi_ref):
    acc = jnp.dot(x_ref[...], wih_ref[...], preferred_element_type=jnp.float32)
    gi_ref[...] = (acc + b_ref[...]).astype(gi_ref.dtype)


def gi_matmul(x, wih, bias, *, tm):
    D, R, Ep = x.shape
    G = wih.shape[-1]
    return pl.pallas_call(
        _gi_kernel,
        out_shape=jax.ShapeDtypeStruct((D, R, G), jnp.bfloat16),
        grid_spec=pltpu.PrefetchScalarGridSpec(
            num_scalar_prefetch=0,
            grid=(D, R // tm),
            in_specs=[pl.BlockSpec((None, tm, Ep), lambda d, m: (d, m, 0)),
                      pl.BlockSpec((None, Ep, G), lambda d, m: (d, 0, 0)),
                      pl.BlockSpec((None, 1, G), lambda d, m: (d, 0, 0))],
            out_specs=pl.BlockSpec((None, tm, G), lambda d, m: (d, m, 0))),
        compiler_params=pltpu.CompilerParams(
            dimension_semantics=("parallel", "parallel"),
            vmem_limit_bytes=32 * 1024 * 1024),
    )(x, wih, bias)


# ----------------------------------------------------------------------------
# Kernel 2: GRU recurrence, grid = (direction, time-chunk).  Each grid step
# runs CT timesteps with an unrolled fori_loop; only h @ W_hh per step.
# Gates packed [r|z|n] along lanes (each Hp wide).  Padded timesteps keep h
# and emit zeros (pad_packed_sequence semantics).
# ----------------------------------------------------------------------------
def _bigru_kernel(gi_ref, whh_ref, bhhn_ref, len_ref, out_ref, hT_ref, h_scr):
    tc = pl.program_id(1)
    ct = gi_ref.shape[0]
    Hp = h_scr.shape[-1]

    @pl.when(tc == 0)
    def _():
        h_scr[...] = jnp.zeros_like(h_scr)

    whh = whh_ref[...]                      # bf16 [Hp, 3Hp] (resident)
    bhh_n = bhhn_ref[...]                   # f32  [1, Hp]
    lens = len_ref[...]                     # i32  [Bp, Hp]  (loaded once per chunk)
    t_base = tc * ct

    def step(i, h):
        gi = gi_ref[i].astype(jnp.float32)                       # [Bp, 3Hp]
        gh = jnp.dot(h.astype(jnp.bfloat16), whh,
                     preferred_element_type=jnp.float32)         # [Bp, 3Hp]
        r = jax.nn.sigmoid(gi[:, :Hp] + gh[:, :Hp])
        z = jax.nn.sigmoid(gi[:, Hp:2 * Hp] + gh[:, Hp:2 * Hp])
        n = jnp.tanh(gi[:, 2 * Hp:] + r * (gh[:, 2 * Hp:] + bhh_n))
        h_new = (1.0 - z) * n + z * h
        valid = lens > (t_base + i)                              # [Bp, Hp] bool
        out_ref[i] = jnp.where(valid, h_new, 0.0)
        return jnp.where(valid, h_new, h)

    h_last = lax.fori_loop(0, ct, step, h_scr[...], unroll=True)
    h_scr[...] = h_last

    @pl.when(tc == pl.num_programs(1) - 1)
    def _():
        hT_ref[...] = h_last


def bigru(gi, whh, bhh_n, len_bcast, *, ct):
    """gi: [2, Tp, Bp, 3Hp] bf16; whh: [2, Hp, 3Hp] bf16; bhh_n: [2, 1, Hp] f32;
    len_bcast: [Bp, Hp] i32 -> (out [2, Tp, Bp, Hp] f32, hT [2, Bp, Hp] f32)."""
    D, Tp, Bp, G = gi.shape
    Hp = G // 3
    return pl.pallas_call(
        _bigru_kernel,
        out_shape=(jax.ShapeDtypeStruct((D, Tp, Bp, Hp), jnp.float32),
                   jax.ShapeDtypeStruct((D, Bp, Hp), jnp.float32)),
        grid_spec=pltpu.PrefetchScalarGridSpec(
            num_scalar_prefetch=0,
            grid=(D, Tp // ct),
            in_specs=[pl.BlockSpec((None, ct, Bp, G), lambda d, t: (d, t, 0, 0)),
                      pl.BlockSpec((None, Hp, G), lambda d, t: (d, 0, 0)),
                      pl.BlockSpec((None, 1, Hp), lambda d, t: (d, 0, 0)),
                      pl.BlockSpec((Bp, Hp), lambda d, t: (0, 0))],
            out_specs=[pl.BlockSpec((None, ct, Bp, Hp), lambda d, t: (d, t, 0, 0)),
                       pl.BlockSpec((None, Bp, Hp), lambda d, t: (d, 0, 0))],
            scratch_shapes=[pltpu.VMEM((Bp, Hp), jnp.float32)]),
        compiler_params=pltpu.CompilerParams(
            dimension_semantics=("parallel", "arbitrary"),
            vmem_limit_bytes=32 * 1024 * 1024),
    )(gi, whh, bhh_n, len_bcast)


# ----------------------------------------------------------------------------
# Weight padding helpers (zero-pad each packed gate block He -> Hp; padded
# lanes provably stay exactly zero through the recurrence).
# ----------------------------------------------------------------------------
def _pad_gates_lastdim(w, h, hp):
    if hp == h:
        return w
    parts = jnp.split(w, 3, axis=-1)
    pad = [(0, 0)] * (w.ndim - 1) + [(0, hp - h)]
    return jnp.concatenate([jnp.pad(p, pad) for p in parts], axis=-1)


# ----------------------------------------------------------------------------
# Encoder forward (matches the PyTorch Encoder.forward semantics).
# Returns (out [B, T, 2*He], hidden [1, B, Hd]).
# ----------------------------------------------------------------------------
def encoder_forward(params, x, lengths):
    B, T = x.shape
    E = params["embed"].shape[1]
    He = params["enc_whh_f"].shape[0]

    Bp = _round_up(max(B, 16), 16)     # bf16-dense sublane packing
    Hp = _round_up(He, 128)            # lane-aligned hidden (128-wide gate slices)
    Ep = _round_up(E, 128)             # lane-aligned contraction dim for Gi matmul
    CT = min(16, T)                    # timesteps per recurrence grid step
    Tp = _round_up(T, CT)

    # Embedding (gather) + eval-mode dropout (identity) -- plain XLA glue.
    emb = jnp.take(params["embed"], x, axis=0)                     # [B, T, E]

    lengths = lengths.astype(jnp.int32)
    t_idx = jnp.arange(T, dtype=jnp.int32)[None, :]
    valid = t_idx < lengths[:, None]                               # [B, T] bool
    # Reverse each sequence within its own length for the backward direction.
    rev_idx = jnp.where(valid, lengths[:, None] - 1 - t_idx, 0)    # [B, T]
    emb_rev = jnp.take_along_axis(emb, rev_idx[:, :, None], axis=1)

    # Pad batch / time / feature; padded rows get length 0 so they stay zero.
    def pad_x(e):
        return jnp.pad(e, ((0, Bp - B), (0, Tp - T), (0, Ep - E)))

    emb_p, emb_rev_p = pad_x(emb), pad_x(emb_rev)
    len_p = jnp.pad(lengths, (0, Bp - B))
    len_bcast = jnp.broadcast_to(len_p[:, None], (Bp, Hp)).astype(jnp.int32)

    # Stack directions, time-major, flatten rows for the hoisted Gi matmul.
    x_stack = jnp.stack([jnp.transpose(emb_p, (1, 0, 2)),
                         jnp.transpose(emb_rev_p, (1, 0, 2))], axis=0)  # [2,Tp,Bp,Ep]
    x_flat = x_stack.reshape(2, Tp * Bp, Ep).astype(jnp.bfloat16)

    # Pack + pad weights (bf16 for MXU), fold b_ih + b_hh[r,z] into gi bias.
    def prep_wih(w):
        w = _pad_gates_lastdim(w, He, Hp)
        return jnp.pad(w, ((0, Ep - E), (0, 0))).astype(jnp.bfloat16)

    def prep_whh(w):
        w = _pad_gates_lastdim(w, He, Hp)
        return jnp.pad(w, ((0, Hp - He), (0, 0))).astype(jnp.bfloat16)

    def fold_bias(bih, bhh):
        b = _pad_gates_lastdim(bih, He, Hp)
        ph = Hp - He
        bhh_r = jnp.pad(bhh[:He], (0, ph))
        bhh_z = jnp.pad(bhh[He:2 * He], (0, ph))
        return b + jnp.concatenate([bhh_r, bhh_z, jnp.zeros((Hp,), b.dtype)])

    def n_bias(bhh):
        return jnp.pad(bhh[2 * He:], (0, Hp - He))

    wih = jnp.stack([prep_wih(params["enc_wih_f"]), prep_wih(params["enc_wih_b"])])
    whh = jnp.stack([prep_whh(params["enc_whh_f"]), prep_whh(params["enc_whh_b"])])
    bias_gi = jnp.stack([fold_bias(params["enc_bih_f"], params["enc_bhh_f"]),
                         fold_bias(params["enc_bih_b"], params["enc_bhh_b"])]
                        )[:, None, :].astype(jnp.float32)
    bhh_n = jnp.stack([n_bias(params["enc_bhh_f"]),
                       n_bias(params["enc_bhh_b"])])[:, None, :].astype(jnp.float32)

    # Row tile for the Gi matmul: ~512 rows, a whole number of timesteps.
    ctm = max(1, min(Tp, 512 // Bp))
    while Tp % ctm:
        ctm -= 1
    tm = ctm * Bp

    # Hoisted input-to-hidden gates (row-tiled big matmul, bf16 in/out, f32 acc).
    gi = gi_matmul(x_flat, wih, bias_gi, tm=tm).reshape(2, Tp, Bp, 3 * Hp)

    # Recurrence (both directions in one pallas_call, CT timesteps per grid step).
    out_tm, hT = bigru(gi, whh, bhh_n, len_bcast, ct=CT)   # [2,Tp,Bp,Hp], [2,Bp,Hp]

    out_f = jnp.transpose(out_tm[0, :T], (1, 0, 2))[:B, :, :He]     # [B, T, He]
    out_r = jnp.transpose(out_tm[1, :T], (1, 0, 2))[:B, :, :He]     # reversed order
    out_b = jnp.take_along_axis(out_r, rev_idx[:, :, None], axis=1)
    out_b = jnp.where(valid[:, :, None], out_b, 0.0)

    out = jnp.concatenate([out_f, out_b], axis=-1)                  # [B, T, 2He]
    # TODO(synk): pad_packed_sequence trims time to max(lengths); static T with
    # zeroed padding is kept instead (data-dependent output shape).

    # hidden = tanh(fc(cat(h_fwd, h_bwd))).unsqueeze(0) -- plain XLA (a single
    # tiny (B, 2He)x(2He, Hd) matmul does not amortize a pallas_call).
    h_cat = jnp.concatenate([hT[0][:B, :He], hT[1][:B, :He]], axis=-1)
    hidden = jnp.tanh(h_cat @ params["fc_w"] + params["fc_b"])[None]   # [1, B, Hd]
    return out, hidden


# ----------------------------------------------------------------------------
# Deterministic parameter init (gates packed in PyTorch (r, z, n) order along
# the last dim, weights stored already transposed so kernels do x @ W).
# ----------------------------------------------------------------------------
def init_params(key, vocab_size, embed_size, enc_hidden, dec_hidden):
    ks = iter(jax.random.split(key, 16))

    def w(shape, scale=0.1):
        return scale * jax.random.normal(next(ks), shape, dtype=jnp.float32)

    E, He, Hd = embed_size, enc_hidden, dec_hidden
    return {
        "embed": w((vocab_size, E)),
        # forward direction
        "enc_wih_f": w((E, 3 * He)), "enc_whh_f": w((He, 3 * He)),
        "enc_bih_f": w((3 * He,)), "enc_bhh_f": w((3 * He,)),
        # backward direction
        "enc_wih_b": w((E, 3 * He)), "enc_whh_b": w((He, 3 * He)),
        "enc_bih_b": w((3 * He,)), "enc_bhh_b": w((3 * He,)),
        # fc: enc_hidden * 2 -> dec_hidden
        "fc_w": w((2 * He, Hd)), "fc_b": w((Hd,)),
    }


if __name__ == "__main__":
    key = jax.random.PRNGKey(0)
    k_params, k_x = jax.random.split(key, 2)

    B, T = 2, 8
    V, E, He, Hd = 48, 32, 32, 32

    params = init_params(k_params, V, E, He, Hd)
    x = jax.random.randint(k_x, (B, T), 0, V, dtype=jnp.int32)
    lengths = jnp.array([8, 5], dtype=jnp.int32)

    out, hidden = jax.jit(encoder_forward)(params, x, lengths)
    jax.block_until_ready((out, hidden))

    assert out.shape == (B, T, 2 * He), out.shape
    assert hidden.shape == (1, B, Hd), hidden.shape
    assert bool(jnp.all(jnp.isfinite(out))) and bool(jnp.all(jnp.isfinite(hidden)))
    # pad_packed_sequence semantics: padded timesteps of `out` are zero.
    assert bool(jnp.all(out[1, 5:] == 0.0))
    print("KERNEL_OK")
</pallas_src>

<mosaic_0001>
module attributes {stable_mosaic.version = 11 : i64} {
  func.func @_gi_kernel(%arg0: i32, %arg1: i32, %arg2: memref<1x128x128xbf16, #tpu.memory_space<vmem>>, %arg3: memref<1x128x384xbf16, #tpu.memory_space<vmem>>, %arg4: memref<1x1x384xf32, #tpu.memory_space<vmem>>, %arg5: memref<1x128x384xbf16, #tpu.memory_space<vmem>>) attributes {dimension_semantics = [#tpu.dimension_semantics<parallel>, #tpu.dimension_semantics<parallel>], iteration_bounds = array<i64: 2, 1>, scalar_prefetch = 0 : i64, scratch_operands = 0 : i64, tpu.core_type = #tpu.core_type<tc>, window_params = [{transform_indices = @transform_0, window_bounds = array<i64: 1, 128, 128>}, {transform_indices = @transform_1, window_bounds = array<i64: 1, 128, 384>}, {transform_indices = @transform_2, window_bounds = array<i64: 1, 1, 384>}, {transform_indices = @transform_3, window_bounds = array<i64: 1, 128, 384>}]} {
    %c0 = arith.constant 0 : index
    %c0_0 = arith.constant 0 : index
    %c0_1 = arith.constant 0 : index
    %0 = vector.load %arg2[%c0, %c0_0, %c0_1] : memref<1x128x128xbf16, #tpu.memory_space<vmem>>, vector<1x128x128xbf16>
    %1 = vector.shape_cast %0 : vector<1x128x128xbf16> to vector<128x128xbf16>
    %c0_2 = arith.constant 0 : index
    %c0_3 = arith.constant 0 : index
    %c0_4 = arith.constant 0 : index
    %2 = vector.load %arg3[%c0_2, %c0_3, %c0_4] : memref<1x128x384xbf16, #tpu.memory_space<vmem>>, vector<1x128x384xbf16>
    %3 = vector.shape_cast %2 : vector<1x128x384xbf16> to vector<128x384xbf16>
    %cst = arith.constant dense<0.000000e+00> : vector<128x384xf32>
    %4 = tpu.matmul %1, %3, %cst {dimension_numbers = #tpu.dot_dimension_numbers<[1], [0], [0], [1], [0, 0, 1, 1], [], []>} : vector<128x128xbf16>, vector<128x384xbf16>, vector<128x384xf32> -> vector<128x384xf32>
    %c0_5 = arith.constant 0 : index
    %c0_6 = arith.constant 0 : index
    %c0_7 = arith.constant 0 : index
    %5 = vector.load %arg4[%c0_5, %c0_6, %c0_7] : memref<1x1x384xf32, #tpu.memory_space<vmem>>, vector<1x1x384xf32>
    %6 = vector.shape_cast %5 : vector<1x1x384xf32> to vector<1x384xf32>
    %7 = vector.broadcast %6 : vector<1x384xf32> to vector<128x384xf32>
    %8 = arith.addf %4, %7 : vector<128x384xf32>
    %9 = arith.truncf %8 : vector<128x384xf32> to vector<128x384xbf16>
    %c0_8 = arith.constant 0 : index
    %c0_9 = arith.constant 0 : index
    %c0_10 = arith.constant 0 : index
    %10 = vector.load %arg5[%c0_8, %c0_9, %c0_10] : memref<1x128x384xbf16, #tpu.memory_space<vmem>>, vector<1x128x384xbf16>
    %11 = vector.shape_cast %10 : vector<1x128x384xbf16> to vector<128x384xbf16>
    %12 = vector.shape_cast %9 : vector<128x384xbf16> to vector<1x128x384xbf16>
    tpu.vector_store %arg5[%c0_8, %c0_9, %c0_10], %12 {strides = array<i32>} : memref<1x128x384xbf16, #tpu.memory_space<vmem>>, vector<1x128x384xbf16>,
    return
  }
  func.func @transform_0(%arg0: i32, %arg1: i32) -> (i32, i32, i32) {
    %c0_i32 = arith.constant 0 : i32
    %c0_i32_0 = arith.constant 0 : i32
    return %arg0, %arg1, %c0_i32 : i32, i32, i32
  }
  func.func @transform_1(%arg0: i32, %arg1: i32) -> (i32, i32, i32) {
    %c0_i32 = arith.constant 0 : i32
    %c0_i32_0 = arith.constant 0 : i32
    %c0_i32_1 = arith.constant 0 : i32
    return %arg0, %c0_i32, %c0_i32_0 : i32, i32, i32
  }
  func.func @transform_2(%arg0: i32, %arg1: i32) -> (i32, i32, i32) {
    %c0_i32 = arith.constant 0 : i32
    %c0_i32_0 = arith.constant 0 : i32
    %c0_i32_1 = arith.constant 0 : i32
    return %arg0, %c0_i32, %c0_i32_0 : i32, i32, i32
  }
  func.func @transform_3(%arg0: i32, %arg1: i32) -> (i32, i32, i32) {
    %c0_i32 = arith.constant 0 : i32
    %c0_i32_0 = arith.constant 0 : i32
    return %arg0, %arg1, %c0_i32 : i32, i32, i32
  }
}

module attributes {stable_mosaic.version = 11 : i64} {
  func.func @_bigru_kernel(%arg0: i32, %arg1: i32, %arg2: memref<1x8x16x384xbf16, #tpu.memory_space<vmem>>, %arg3: memref<1x128x384xbf16, #tpu.memory_space<vmem>>, %arg4: memref<1x1x128xf32, #tpu.memory_space<vmem>>, %arg5: memref<16x128xi32, #tpu.memory_space<vmem>>, %arg6: memref<1x8x16x128xf32, #tpu.memory_space<vmem>>, %arg7: memref<1x16x128xf32, #tpu.memory_space<vmem>>, %arg8: memref<16x128xf32, #tpu.memory_space<vmem>>) attributes {dimension_semantics = [#tpu.dimension_semantics<parallel>, #tpu.dimension_semantics<arbitrary>], iteration_bounds = array<i64: 2, 1>, scalar_prefetch = 0 : i64, scratch_operands = 1 : i64, tpu.core_type = #tpu.core_type<tc>, window_params = [{transform_indices = @transform_0, window_bounds = array<i64: 1, 8, 16, 384>}, {transform_indices = @transform_1, window_bounds = array<i64: 1, 128, 384>}, {transform_indices = @transform_2, window_bounds = array<i64: 1, 1, 128>}, {pipeline_mode = #tpu.pipeline_mode<synchronous>, transform_indices = @transform_3, window_bounds = array<i64: 16, 128>}, {transform_indices = @transform_4, window_bounds = array<i64: 1, 8, 16, 128>}, {transform_indices = @transform_5, window_bounds = array<i64: 1, 16, 128>}]} {
    %c0_i32 = arith.constant 0 : i32
    %0 = arith.cmpi eq, %arg1, %c0_i32 : i32
    %1 = arith.extui %0 : i1 to i32
    %c0_i32_0 = arith.constant 0 : i32
    %2 = arith.cmpi ne, %1, %c0_i32_0 : i32
    scf.if %2 {
      %cst_103 = arith.constant 0.000000e+00 : f32
      %366 = vector.broadcast %cst_103 : f32 to vector<16x128xf32>
      %c0_104 = arith.constant 0 : index
      %c0_105 = arith.constant 0 : index
      %367 = vector.load %arg8[%c0_104, %c0_105] : memref<16x128xf32, #tpu.memory_space<vmem>>, vector<16x128xf32>
      tpu.vector_store %arg8[%c0_104, %c0_105], %366 {strides = array<i32>} : memref<16x128xf32, #tpu.memory_space<vmem>>, vector<16x128xf32>,
    } else {
    }
    %c0 = arith.constant 0 : index
    %c0_1 = arith.constant 0 : index
    %c0_2 = arith.constant 0 : index
    %3 = vector.load %arg3[%c0, %c0_1, %c0_2] : memref<1x128x384xbf16, #tpu.memory_space<vmem>>, vector<1x128x384xbf16>
    %4 = vector.shape_cast %3 : vector<1x128x384xbf16> to vector<128x384xbf16>
    %c0_3 = arith.constant 0 : index
    %c0_4 = arith.constant 0 : index
    %c0_5 = arith.constant 0 : index
    %5 = vector.load %arg4[%c0_3, %c0_4, %c0_5] : memref<1x1x128xf32, #tpu.memory_space<vmem>>, vector<1x1x128xf32>
    %6 = vector.shape_cast %5 : vector<1x1x128xf32> to vector<1x128xf32>
    %c0_6 = arith.constant 0 : index
    %c0_7 = arith.constant 0 : index
    %7 = vector.load %arg5[%c0_6, %c0_7] : memref<16x128xi32, #tpu.memory_space<vmem>>, vector<16x128xi32>
    %c8_i32 = arith.constant 8 : i32
    %8 = arith.muli %arg1, %c8_i32 : i32
    %c0_8 = arith.constant 0 : index
    %c0_9 = arith.constant 0 : index
    %9 = vector.load %arg8[%c0_8, %c0_9] : memref<16x128xf32, #tpu.memory_space<vmem>>, vector<16x128xf32>
    %c0_i32_10 = arith.constant 0 : i32
    %c0_11 = arith.constant 0 : index
    %10 = arith.index_cast %c0_i32_10 : i32 to index
    %c0_12 = arith.constant 0 : index
    %c0_13 = arith.constant 0 : index
    %11 = vector.load %arg2[%c0_11, %10, %c0_12, %c0_13] : memref<1x8x16x384xbf16, #tpu.memory_space<vmem>>, vector<1x1x16x384xbf16>
    %12 = vector.shape_cast %11 : vector<1x1x16x384xbf16> to vector<16x384xbf16>
    %13 = arith.extf %12 : vector<16x384xbf16> to vector<16x384xf32>
    %14 = arith.truncf %9 : vector<16x128xf32> to vector<16x128xbf16>
    %cst = arith.constant dense<0.000000e+00> : vector<16x384xf32>
    %15 = tpu.matmul %14, %4, %cst {dimension_numbers = #tpu.dot_dimension_numbers<[1], [0], [0], [1], [0, 0, 1, 1], [], []>} : vector<16x128xbf16>, vector<128x384xbf16>, vector<16x384xf32> -> vector<16x384xf32>
    %16 = vector.extract_strided_slice %13 {offsets = [0, 0], sizes = [16, 128], strides = [1, 1]} : vector<16x384xf32> to vector<16x128xf32>
    %17 = vector.extract_strided_slice %15 {offsets = [0, 0], sizes = [16, 128], strides = [1, 1]} : vector<16x384xf32> to vector<16x128xf32>
    %18 = arith.addf %16, %17 : vector<16x128xf32>
    %19 = arith.negf %18 : vector<16x128xf32>
    %20 = math.exp %19 : vector<16x128xf32>
    %cst_14 = arith.constant 1.000000e+00 : f32
    %21 = vector.broadcast %cst_14 : f32 to vector<16x128xf32>
    %22 = arith.addf %21, %20 : vector<16x128xf32>
    %23 = arith.divf %21, %22 : vector<16x128xf32>
    %24 = vector.extract_strided_slice %13 {offsets = [0, 128], sizes = [16, 128], strides = [1, 1]} : vector<16x384xf32> to vector<16x128xf32>
    %25 = vector.extract_strided_slice %15 {offsets = [0, 128], sizes = [16, 128], strides = [1, 1]} : vector<16x384xf32> to vector<16x128xf32>
    %26 = arith.addf %24, %25 : vector<16x128xf32>
    %27 = arith.negf %26 : vector<16x128xf32>
    %28 = math.exp %27 : vector<16x128xf32>
    %cst_15 = arith.constant 1.000000e+00 : f32
    %29 = vector.broadcast %cst_15 : f32 to vector<16x128xf32>
    %30 = arith.addf %29, %28 : vector<16x128xf32>
    %31 = arith.divf %29, %30 : vector<16x128xf32>
    %32 = vector.extract_strided_slice %13 {offsets = [0, 256], sizes = [16, 128], strides = [1, 1]} : vector<16x384xf32> to vector<16x128xf32>
    %33 = vector.extract_strided_slice %15 {offsets = [0, 256], sizes = [16, 128], strides = [1, 1]} : vector<16x384xf32> to vector<16x128xf32>
    %34 = vector.broadcast %6 : vector<1x128xf32> to vector<16x128xf32>
    %35 = arith.addf %33, %34 : vector<16x128xf32>
    %36 = arith.mulf %23, %35 : vector<16x128xf32>
    %37 = arith.addf %32, %36 : vector<16x128xf32>
    %38 = math.tanh %37 : vector<16x128xf32>
    %cst_16 = arith.constant 1.000000e+00 : f32
    %39 = vector.broadcast %cst_16 : f32 to vector<16x128xf32>
    %40 = arith.subf %39, %31 : vector<16x128xf32>
    %41 = arith.mulf %40, %38 : vector<16x128xf32>
    %42 = arith.mulf %31, %9 : vector<16x128xf32>
    %43 = arith.addf %41, %42 : vector<16x128xf32>
    %44 = arith.addi %8, %c0_i32_10 : i32
    %45 = vector.broadcast %44 : i32 to vector<16x128xi32>
    %46 = arith.cmpi sgt, %7, %45 : vector<16x128xi32>
    %cst_17 = arith.constant 0.000000e+00 : f32
    %47 = vector.broadcast %cst_17 : f32 to vector<16x128xf32>
    %48 = arith.select %46, %43, %47 : vector<16x128xi1>, vector<16x128xf32>
    %c0_18 = arith.constant 0 : index
    %49 = arith.index_cast %c0_i32_10 : i32 to index
    %c0_19 = arith.constant 0 : index
    %c0_20 = arith.constant 0 : index
    %50 = vector.load %arg6[%c0_18, %49, %c0_19, %c0_20] : memref<1x8x16x128xf32, #tpu.memory_space<vmem>>, vector<1x1x16x128xf32>
    %51 = vector.shape_cast %50 : vector<1x1x16x128xf32> to vector<16x128xf32>
    %52 = vector.shape_cast %48 : vector<16x128xf32> to vector<1x1x16x128xf32>
    tpu.vector_store %arg6[%c0_18, %49, %c0_19, %c0_20], %52 {strides = array<i32>} : memref<1x8x16x128xf32, #tpu.memory_space<vmem>>, vector<1x1x16x128xf32>,
    %53 = arith.select %46, %43, %9 : vector<16x128xi1>, vector<16x128xf32>
    %c1_i32 = arith.constant 1 : i32
    %c0_21 = arith.constant 0 : index
    %54 = arith.index_cast %c1_i32 : i32 to index
    %c0_22 = arith.constant 0 : index
    %c0_23 = arith.constant 0 : index
    %55 = vector.load %arg2[%c0_21, %54, %c0_22, %c0_23] : memref<1x8x16x384xbf16, #tpu.memory_space<vmem>>, vector<1x1x16x384xbf16>
    %56 = vector.shape_cast %55 : vector<1x1x16x384xbf16> to vector<16x384xbf16>
    %57 = arith.extf %56 : vector<16x384xbf16> to vector<16x384xf32>
    %58 = arith.truncf %53 : vector<16x128xf32> to vector<16x128xbf16>
    %cst_24 = arith.constant dense<0.000000e+00> : vector<16x384xf32>
    %59 = tpu.matmul %58, %4, %cst_24 {dimension_numbers = #tpu.dot_dimension_numbers<[1], [0], [0], [1], [0, 0, 1, 1], [], []>} : vector<16x128xbf16>, vector<128x384xbf16>, vector<16x384xf32> -> vector<16x384xf32>
    %60 = vector.extract_strided_slice %57 {offsets = [0, 0], sizes = [16, 128], strides = [1, 1]} : vector<16x384xf32> to vector<16x128xf32>
    %61 = vector.extract_strided_slice %59 {offsets = [0, 0], sizes = [16, 128], strides = [1, 1]} : vector<16x384xf32> to vector<16x128xf32>
    %62 = arith.addf %60, %61 : vector<16x128xf32>
    %63 = arith.negf %62 : vector<16x128xf32>
    %64 = math.exp %63 : vector<16x128xf32>
    %cst_25 = arith.constant 1.000000e+00 : f32
    %65 = vector.broadcast %cst_25 : f32 to vector<16x128xf32>
    %66 = arith.addf %65, %64 : vector<16x128xf32>
    %67 = arith.divf %65, %66 : vector<16x128xf32>
    %68 = vector.extract_strided_slice %57 {offsets = [0, 128], sizes = [16, 128], strides = [1, 1]} : vector<16x384xf32> to vector<16x128xf32>
    %69 = vector.extract_strided_slice %59 {offsets = [0, 128], sizes = [16, 128], strides = [1, 1]} : vector<16x384xf32> to vector<16x128xf32>
    %70 = arith.addf %68, %69 : vector<16x128xf32>
    %71 = arith.negf %70 : vector<16x128xf32>
    %72 = math.exp %71 : vector<16x128xf32>
    %cst_26 = arith.constant 1.000000e+00 : f32
    %73 = vector.broadcast %cst_26 : f32 to vector<16x128xf32>
    %74 = arith.addf %73, %72 : vector<16x128xf32>
    %75 = arith.divf %73, %74 : vector<16x128xf32>
    %76 = vector.extract_strided_slice %57 {offsets = [0, 256], sizes = [16, 128], strides = [1, 1]} : vector<16x384xf32> to vector<16x128xf32>
    %77 = vector.extract_strided_slice %59 {offsets = [0, 256], sizes = [16, 128], strides = [1, 1]} : vector<16x384xf32> to vector<16x128xf32>
    %78 = vector.broadcast %6 : vector<1x128xf32> to vector<16x128xf32>
    %79 = arith.addf %77, %78 : vector<16x128xf32>
    %80 = arith.mulf %67, %79 : vector<16x128xf32>
    %81 = arith.addf %76, %80 : vector<16x128xf32>
    %82 = math.tanh %81 : vector<16x128xf32>
    %cst_27 = arith.constant 1.000000e+00 : f32
    %83 = vector.broadcast %cst_27 : f32 to vector<16x128xf32>
    %84 = arith.subf %83, %75 : vector<16x128xf32>
    %85 = arith.mulf %84, %82 : vector<16x128xf32>
    %86 = arith.mulf %75, %53 : vector<16x128xf32>
    %87 = arith.addf %85, %86 : vector<16x128xf32>
    %88 = arith.addi %8, %c1_i32 : i32
    %89 = vector.broadcast %88 : i32 to vector<16x128xi32>
    %90 = arith.cmpi sgt, %7, %89 : vector<16x128xi32>
    %cst_28 = arith.constant 0.000000e+00 : f32
    %91 = vector.broadcast %cst_28 : f32 to vector<16x128xf32>
    %92 = arith.select %90, %87, %91 : vector<16x128xi1>, vector<16x128xf32>
    %c0_29 = arith.constant 0 : index
    %93 = arith.index_cast %c1_i32 : i32 to index
    %c0_30 = arith.constant 0 : index
    %c0_31 = arith.constant 0 : index
    %94 = vector.load %arg6[%c0_29, %93, %c0_30, %c0_31] : memref<1x8x16x128xf32, #tpu.memory_space<vmem>>, vector<1x1x16x128xf32>
    %95 = vector.shape_cast %94 : vector<1x1x16x128xf32> to vector<16x128xf32>
    %96 = vector.shape_cast %92 : vector<16x128xf32> to vector<1x1x16x128xf32>
    tpu.vector_store %arg6[%c0_29, %93, %c0_30, %c0_31], %96 {strides = array<i32>} : memref<1x8x16x128xf32, #tpu.memory_space<vmem>>, vector<1x1x16x128xf32>,
    %97 = arith.select %90, %87, %53 : vector<16x128xi1>, vector<16x128xf32>
    %c2_i32 = arith.constant 2 : i32
    %c0_32 = arith.constant 0 : index
    %98 = arith.index_cast %c2_i32 : i32 to index
    %c0_33 = arith.constant 0 : index
    %c0_34 = arith.constant 0 : index
    %99 = vector.load %arg2[%c0_32, %98, %c0_33, %c0_34] : memref<1x8x16x384xbf16, #tpu.memory_space<vmem>>, vector<1x1x16x384xbf16>
    %100 = vector.shape_cast %99 : vector<1x1x16x384xbf16> to vector<16x384xbf16>
    %101 = arith.extf %100 : vector<16x384xbf16> to vector<16x384xf32>
    %102 = arith.truncf %97 : vector<16x128xf32> to vector<16x128xbf16>
    %cst_35 = arith.constant dense<0.000000e+00> : vector<16x384xf32>
    %103 = tpu.matmul %102, %4, %cst_35 {dimension_numbers = #tpu.dot_dimension_numbers<[1], [0], [0], [1], [0, 0, 1, 1], [], []>} : vector<16x128xbf16>, vector<128x384xbf16>, vector<16x384xf32> -> vector<16x384xf32>
    %104 = vector.extract_strided_slice %101 {offsets = [0, 0], sizes = [16, 128], strides = [1, 1]} : vector<16x384xf32> to vector<16x128xf32>
    %105 = vector.extract_strided_slice %103 {offsets = [0, 0], sizes = [16, 128], strides = [1, 1]} : vector<16x384xf32> to vector<16x128xf32>
    %106 = arith.addf %104, %105 : vector<16x128xf32>
    %107 = arith.negf %106 : vector<16x128xf32>
    %108 = math.exp %107 : vector<16x128xf32>
    %cst_36 = arith.constant 1.000000e+00 : f32
    %109 = vector.broadcast %cst_36 : f32 to vector<16x128xf32>
    %110 = arith.addf %109, %108 : vector<16x128xf32>
    %111 = arith.divf %109, %110 : vector<16x128xf32>
    %112 = vector.extract_strided_slice %101 {offsets = [0, 128], sizes = [16, 128], strides = [1, 1]} : vector<16x384xf32> to vector<16x128xf32>
    %113 = vector.extract_strided_slice %103 {offsets = [0, 128], sizes = [16, 128], strides = [1, 1]} : vector<16x384xf32> to vector<16x128xf32>
    %114 = arith.addf %112, %113 : vector<16x128xf32>
    %115 = arith.negf %114 : vector<16x128xf32>
    %116 = math.exp %115 : vector<16x128xf32>
    %cst_37 = arith.constant 1.000000e+00 : f32
    %117 = vector.broadcast %cst_37 : f32 to vector<16x128xf32>
    %118 = arith.addf %117, %116 : vector<16x128xf32>
    %119 = arith.divf %117, %118 : vector<16x128xf32>
    %120 = vector.extract_strided_slice %101 {offsets = [0, 256], sizes = [16, 128], strides = [1, 1]} : vector<16x384xf32> to vector<16x128xf32>
    %121 = vector.extract_strided_slice %103 {offsets = [0, 256], sizes = [16, 128], strides = [1, 1]} : vector<16x384xf32> to vector<16x128xf32>
    %122 = vector.broadcast %6 : vector<1x128xf32> to vector<16x128xf32>
    %123 = arith.addf %121, %122 : vector<16x128xf32>
    %124 = arith.mulf %111, %123 : vector<16x128xf32>
    %125 = arith.addf %120, %124 : vector<16x128xf32>
    %126 = math.tanh %125 : vector<16x128xf32>
    %cst_38 = arith.constant 1.000000e+00 : f32
    %127 = vector.broadcast %cst_38 : f32 to vector<16x128xf32>
    %128 = arith.subf %127, %119 : vector<16x128xf32>
    %129 = arith.mulf %128, %126 : vector<16x128xf32>
    %130 = arith.mulf %119, %97 : vector<16x128xf32>
    %131 = arith.addf %129, %130 : vector<16x128xf32>
    %132 = arith.addi %8, %c2_i32 : i32
    %133 = vector.broadcast %132 : i32 to vector<16x128xi32>
    %134 = arith.cmpi sgt, %7, %133 : vector<16x128xi32>
    %cst_39 = arith.constant 0.000000e+00 : f32
    %135 = vector.broadcast %cst_39 : f32 to vector<16x128xf32>
    %136 = arith.select %134, %131, %135 : vector<16x128xi1>, vector<16x128xf32>
    %c0_40 = arith.constant 0 : index
    %137 = arith.index_cast %c2_i32 : i32 to index
    %c0_41 = arith.constant 0 : index
    %c0_42 = arith.constant 0 : index
    %138 = vector.load %arg6[%c0_40, %137, %c0_41, %c0_42] : memref<1x8x16x128xf32, #tpu.memory_space<vmem>>, vector<1x1x16x128xf32>
    %139 = vector.shape_cast %138 : vector<1x1x16x128xf32> to vector<16x128xf32>
    %140 = vector.shape_cast %136 : vector<16x128xf32> to vector<1x1x16x128xf32>
    tpu.vector_store %arg6[%c0_40, %137, %c0_41, %c0_42], %140 {strides = array<i32>} : memref<1x8x16x128xf32, #tpu.memory_space<vmem>>, vector<1x1x16x128xf32>,
    %141 = arith.select %134, %131, %97 : vector<16x128xi1>, vector<16x128xf32>
    %c3_i32 = arith.constant 3 : i32
    %c0_43 = arith.constant 0 : index
    %142 = arith.index_cast %c3_i32 : i32 to index
    %c0_44 = arith.constant 0 : index
    %c0_45 = arith.constant 0 : index
    %143 = vector.load %arg2[%c0_43, %142, %c0_44, %c0_45] : memref<1x8x16x384xbf16, #tpu.memory_space<vmem>>, vector<1x1x16x384xbf16>
    %144 = vector.shape_cast %143 : vector<1x1x16x384xbf16> to vector<16x384xbf16>
    %145 = arith.extf %144 : vector<16x384xbf16> to vector<16x384xf32>
    %146 = arith.truncf %141 : vector<16x128xf32> to vector<16x128xbf16>
    %cst_46 = arith.constant dense<0.000000e+00> : vector<16x384xf32>
    %147 = tpu.matmul %146, %4, %cst_46 {dimension_numbers = #tpu.dot_dimension_numbers<[1], [0], [0], [1], [0, 0, 1, 1], [], []>} : vector<16x128xbf16>, vector<128x384xbf16>, vector<16x384xf32> -> vector<16x384xf32>
    %148 = vector.extract_strided_slice %145 {offsets = [0, 0], sizes = [16, 128], strides = [1, 1]} : vector<16x384xf32> to vector<16x128xf32>
    %149 = vector.extract_strided_slice %147 {offsets = [0, 0], sizes = [16, 128], strides = [1, 1]} : vector<16x384xf32> to vector<16x128xf32>
    %150 = arith.addf %148, %149 : vector<16x128xf32>
    %151 = arith.negf %150 : vector<16x128xf32>
    %152 = math.exp %151 : vector<16x128xf32>
    %cst_47 = arith.constant 1.000000e+00 : f32
    %153 = vector.broadcast %cst_47 : f32 to vector<16x128xf32>
    %154 = arith.addf %153, %152 : vector<16x128xf32>
    %155 = arith.divf %153, %154 : vector<16x128xf32>
    %156 = vector.extract_strided_slice %145 {offsets = [0, 128], sizes = [16, 128], strides = [1, 1]} : vector<16x384xf32> to vector<16x128xf32>
    %157 = vector.extract_strided_slice %147 {offsets = [0, 128], sizes = [16, 128], strides = [1, 1]} : vector<16x384xf32> to vector<16x128xf32>
    %158 = arith.addf %156, %157 : vector<16x128xf32>
    %159 = arith.negf %158 : vector<16x128xf32>
    %160 = math.exp %159 : vector<16x128xf32>
    %cst_48 = arith.constant 1.000000e+00 : f32
    %161 = vector.broadcast %cst_48 : f32 to vector<16x128xf32>
    %162 = arith.addf %161, %160 : vector<16x128xf32>
    %163 = arith.divf %161, %162 : vector<16x128xf32>
    %164 = vector.extract_strided_slice %145 {offsets = [0, 256], sizes = [16, 128], strides = [1, 1]} : vector<16x384xf32> to vector<16x128xf32>
    %165 = vector.extract_strided_slice %147 {offsets = [0, 256], sizes = [16, 128], strides = [1, 1]} : vector<16x384xf32> to vector<16x128xf32>
    %166 = vector.broadcast %6 : vector<1x128xf32> to vector<16x128xf32>
    %167 = arith.addf %165, %166 : vector<16x128xf32>
    %168 = arith.mulf %155, %167 : vector<16x128xf32>
    %169 = arith.addf %164, %168 : vector<16x128xf32>
    %170 = math.tanh %169 : vector<16x128xf32>
    %cst_49 = arith.constant 1.000000e+00 : f32
    %171 = vector.broadcast %cst_49 : f32 to vector<16x128xf32>
    %172 = arith.subf %171, %163 : vector<16x128xf32>
    %173 = arith.mulf %172, %170 : vector<16x128xf32>
    %174 = arith.mulf %163, %141 : vector<16x128xf32>
    %175 = arith.addf %173, %174 : vector<16x128xf32>
    %176 = arith.addi %8, %c3_i32 : i32
    %177 = vector.broadcast %176 : i32 to vector<16x128xi32>
    %178 = arith.cmpi sgt, %7, %177 : vector<16x128xi32>
    %cst_50 = arith.constant 0.000000e+00 : f32
    %179 = vector.broadcast %cst_50 : f32 to vector<16x128xf32>
    %180 = arith.select %178, %175, %179 : vector<16x128xi1>, vector<16x128xf32>
    %c0_51 = arith.constant 0 : index
    %181 = arith.index_cast %c3_i32 : i32 to index
    %c0_52 = arith.constant 0 : index
    %c0_53 = arith.constant 0 : index
    %182 = vector.load %arg6[%c0_51, %181, %c0_52, %c0_53] : memref<1x8x16x128xf32, #tpu.memory_space<vmem>>, vector<1x1x16x128xf32>
    %183 = vector.shape_cast %182 : vector<1x1x16x128xf32> to vector<16x128xf32>
    %184 = vector.shape_cast %180 : vector<16x128xf32> to vector<1x1x16x128xf32>
    tpu.vector_store %arg6[%c0_51, %181, %c0_52, %c0_53], %184 {strides = array<i32>} : memref<1x8x16x128xf32, #tpu.memory_space<vmem>>, vector<1x1x16x128xf32>,
    %185 = arith.select %178, %175, %141 : vector<16x128xi1>, vector<16x128xf32>
    %c4_i32 = arith.constant 4 : i32
    %c0_54 = arith.constant 0 : index
    %186 = arith.index_cast %c4_i32 : i32 to index
    %c0_55 = arith.constant 0 : index
    %c0_56 = arith.constant 0 : index
    %187 = vector.load %arg2[%c0_54, %186, %c0_55, %c0_56] : memref<1x8x16x384xbf16, #tpu.memory_space<vmem>>, vector<1x1x16x384xbf16>
    %188 = vector.shape_cast %187 : vector<1x1x16x384xbf16> to vector<16x384xbf16>
    %189 = arith.extf %188 : vector<16x384xbf16> to vector<16x384xf32>
    %190 = arith.truncf %185 : vector<16x128xf32> to vector<16x128xbf16>
    %cst_57 = arith.constant dense<0.000000e+00> : vector<16x384xf32>
    %191 = tpu.matmul %190, %4, %cst_57 {dimension_numbers = #tpu.dot_dimension_numbers<[1], [0], [0], [1], [0, 0, 1, 1], [], []>} : vector<16x128xbf16>, vector<128x384xbf16>, vector<16x384xf32> -> vector<16x384xf32>
    %192 = vector.extract_strided_slice %189 {offsets = [0, 0], sizes = [16, 128], strides = [1, 1]} : vector<16x384xf32> to vector<16x128xf32>
    %193 = vector.extract_strided_slice %191 {offsets = [0, 0], sizes = [16, 128], strides = [1, 1]} : vector<16x384xf32> to vector<16x128xf32>
    %194 = arith.addf %192, %193 : vector<16x128xf32>
    %195 = arith.negf %194 : vector<16x128xf32>
    %196 = math.exp %195 : vector<16x128xf32>
    %cst_58 = arith.constant 1.000000e+00 : f32
    %197 = vector.broadcast %cst_58 : f32 to vector<16x128xf32>
    %198 = arith.addf %197, %196 : vector<16x128xf32>
    %199 = arith.divf %197, %198 : vector<16x128xf32>
    %200 = vector.extract_strided_slice %189 {offsets = [0, 128], sizes = [16, 128], strides = [1, 1]} : vector<16x384xf32> to vector<16x128xf32>
    %201 = vector.extract_strided_slice %191 {offsets = [0, 128], sizes = [16, 128], strides = [1, 1]} : vector<16x384xf32> to vector<16x128xf32>
    %202 = arith.addf %200, %201 : vector<16x128xf32>
    %203 = arith.negf %202 : vector<16x128xf32>
    %204 = math.exp %203 : vector<16x128xf32>
    %cst_59 = arith.constant 1.000000e+00 : f32
    %205 = vector.broadcast %cst_59 : f32 to vector<16x128xf32>
    %206 = arith.addf %205, %204 : vector<16x128xf32>
    %207 = arith.divf %205, %206 : vector<16x128xf32>
    %208 = vector.extract_strided_slice %189 {offsets = [0, 256], sizes = [16, 128], strides = [1, 1]} : vector<16x384xf32> to vector<16x128xf32>
    %209 = vector.extract_strided_slice %191 {offsets = [0, 256], sizes = [16, 128], strides = [1, 1]} : vector<16x384xf32> to vector<16x128xf32>
    %210 = vector.broadcast %6 : vector<1x128xf32> to vector<16x128xf32>
    %211 = arith.addf %209, %210 : vector<16x128xf32>
    %212 = arith.mulf %199, %211 : vector<16x128xf32>
    %213 = arith.addf %208, %212 : vector<16x128xf32>
    %214 = math.tanh %213 : vector<16x128xf32>
    %cst_60 = arith.constant 1.000000e+00 : f32
    %215 = vector.broadcast %cst_60 : f32 to vector<16x128xf32>
    %216 = arith.subf %215, %207 : vector<16x128xf32>
    %217 = arith.mulf %216, %214 : vector<16x128xf32>
    %218 = arith.mulf %207, %185 : vector<16x128xf32>
    %219 = arith.addf %217, %218 : vector<16x128xf32>
    %220 = arith.addi %8, %c4_i32 : i32
    %221 = vector.broadcast %220 : i32 to vector<16x128xi32>
    %222 = arith.cmpi sgt, %7, %221 : vector<16x128xi32>
    %cst_61 = arith.constant 0.000000e+00 : f32
    %223 = vector.broadcast %cst_61 : f32 to vector<16x128xf32>
    %224 = arith.select %222, %219, %223 : vector<16x128xi1>, vector<16x128xf32>
    %c0_62 = arith.constant 0 : index
    %225 = arith.index_cast %c4_i32 : i32 to index
    %c0_63 = arith.constant 0 : index
    %c0_64 = arith.constant 0 : index
    %226 = vector.load %arg6[%c0_62, %225, %c0_63, %c0_64] : memref<1x8x16x128xf32, #tpu.memory_space<vmem>>, vector<1x1x16x128xf32>
    %227 = vector.shape_cast %226 : vector<1x1x16x128xf32> to vector<16x128xf32>
    %228 = vector.shape_cast %224 : vector<16x128xf32> to vector<1x1x16x128xf32>
    tpu.vector_store %arg6[%c0_62, %225, %c0_63, %c0_64], %228 {strides = array<i32>} : memref<1x8x16x128xf32, #tpu.memory_space<vmem>>, vector<1x1x16x128xf32>,
    %229 = arith.select %222, %219, %185 : vector<16x128xi1>, vector<16x128xf32>
    %c5_i32 = arith.constant 5 : i32
    %c0_65 = arith.constant 0 : index
    %230 = arith.index_cast %c5_i32 : i32 to index
    %c0_66 = arith.constant 0 : index
    %c0_67 = arith.constant 0 : index
    %231 = vector.load %arg2[%c0_65, %230, %c0_66, %c0_67] : memref<1x8x16x384xbf16, #tpu.memory_space<vmem>>, vector<1x1x16x384xbf16>
    %232 = vector.shape_cast %231 : vector<1x1x16x384xbf16> to vector<16x384xbf16>
    %233 = arith.extf %232 : vector<16x384xbf16> to vector<16x384xf32>
    %234 = arith.truncf %229 : vector<16x128xf32> to vector<16x128xbf16>
    %cst_68 = arith.constant dense<0.000000e+00> : vector<16x384xf32>
    %235 = tpu.matmul %234, %4, %cst_68 {dimension_numbers = #tpu.dot_dimension_numbers<[1], [0], [0], [1], [0, 0, 1, 1], [], []>} : vector<16x128xbf16>, vector<128x384xbf16>, vector<16x384xf32> -> vector<16x384xf32>
    %236 = vector.extract_strided_slice %233 {offsets = [0, 0], sizes = [16, 128], strides = [1, 1]} : vector<16x384xf32> to vector<16x128xf32>
    %237 = vector.extract_strided_slice %235 {offsets = [0, 0], sizes = [16, 128], strides = [1, 1]} : vector<16x384xf32> to vector<16x128xf32>
    %238 = arith.addf %236, %237 : vector<16x128xf32>
    %239 = arith.negf %238 : vector<16x128xf32>
    %240 = math.exp %239 : vector<16x128xf32>
    %cst_69 = arith.constant 1.000000e+00 : f32
    %241 = vector.broadcast %cst_69 : f32 to vector<16x128xf32>
    %242 = arith.addf %241, %240 : vector<16x128xf32>
    %243 = arith.divf %241, %242 : vector<16x128xf32>
    %244 = vector.extract_strided_slice %233 {offsets = [0, 128], sizes = [16, 128], strides = [1, 1]} : vector<16x384xf32> to vector<16x128xf32>
    %245 = vector.extract_strided_slice %235 {offsets = [0, 128], sizes = [16, 128], strides = [1, 1]} : vector<16x384xf32> to vector<16x128xf32>
    %246 = arith.addf %244, %245 : vector<16x128xf32>
    %247 = arith.negf %246 : vector<16x128xf32>
    %248 = math.exp %247 : vector<16x128xf32>
    %cst_70 = arith.constant 1.000000e+00 : f32
    %249 = vector.broadcast %cst_70 : f32 to vector<16x128xf32>
    %250 = arith.addf %249, %248 : vector<16x128xf32>
    %251 = arith.divf %249, %250 : vector<16x128xf32>
    %252 = vector.extract_strided_slice %233 {offsets = [0, 256], sizes = [16, 128], strides = [1, 1]} : vector<16x384xf32> to vector<16x128xf32>
    %253 = vector.extract_strided_slice %235 {offsets = [0, 256], sizes = [16, 128], strides = [1, 1]} : vector<16x384xf32> to vector<16x128xf32>
    %254 = vector.broadcast %6 : vector<1x128xf32> to vector<16x128xf32>
    %255 = arith.addf %253, %254 : vector<16x128xf32>
    %256 = arith.mulf %243, %255 : vector<16x128xf32>
    %257 = arith.addf %252, %256 : vector<16x128xf32>
    %258 = math.tanh %257 : vector<16x128xf32>
    %cst_71 = arith.constant 1.000000e+00 : f32
    %259 = vector.broadcast %cst_71 : f32 to vector<16x128xf32>
    %260 = arith.subf %259, %251 : vector<16x128xf32>
    %261 = arith.mulf %260, %258 : vector<16x128xf32>
    %262 = arith.mulf %251, %229 : vector<16x128xf32>
    %263 = arith.addf %261, %262 : vector<16x128xf32>
    %264 = arith.addi %8, %c5_i32 : i32
    %265 = vector.broadcast %264 : i32 to vector<16x128xi32>
    %266 = arith.cmpi sgt, %7, %265 : vector<16x128xi32>
    %cst_72 = arith.constant 0.000000e+00 : f32
    %267 = vector.broadcast %cst_72 : f32 to vector<16x128xf32>
    %268 = arith.select %266, %263, %267 : vector<16x128xi1>, vector<16x128xf32>
    %c0_73 = arith.constant 0 : index
    %269 = arith.index_cast %c5_i32 : i32 to index
    %c0_74 = arith.constant 0 : index
    %c0_75 = arith.constant 0 : index
    %270 = vector.load %arg6[%c0_73, %269, %c0_74, %c0_75] : memref<1x8x16x128xf32, #tpu.memory_space<vmem>>, vector<1x1x16x128xf32>
    %271 = vector.shape_cast %270 : vector<1x1x16x128xf32> to vector<16x128xf32>
    %272 = vector.shape_cast %268 : vector<16x128xf32> to vector<1x1x16x128xf32>
    tpu.vector_store %arg6[%c0_73, %269, %c0_74, %c0_75], %272 {strides = array<i32>} : memref<1x8x16x128xf32, #tpu.memory_space<vmem>>, vector<1x1x16x128xf32>,
    %273 = arith.select %266, %263, %229 : vector<16x128xi1>, vector<16x128xf32>
    %c6_i32 = arith.constant 6 : i32
    %c0_76 = arith.constant 0 : index
    %274 = arith.index_cast %c6_i32 : i32 to index
    %c0_77 = arith.constant 0 : index
    %c0_78 = arith.constant 0 : index
    %275 = vector.load %arg2[%c0_76, %274, %c0_77, %c0_78] : memref<1x8x16x384xbf16, #tpu.memory_space<vmem>>, vector<1x1x16x384xbf16>
    %276 = vector.shape_cast %275 : vector<1x1x16x384xbf16> to vector<16x384xbf16>
    %277 = arith.extf %276 : vector<16x384xbf16> to vector<16x384xf32>
    %278 = arith.truncf %273 : vector<16x128xf32> to vector<16x128xbf16>
    %cst_79 = arith.constant dense<0.000000e+00> : vector<16x384xf32>
    %279 = tpu.matmul %278, %4, %cst_79 {dimension_numbers = #tpu.dot_dimension_numbers<[1], [0], [0], [1], [0, 0, 1, 1], [], []>} : vector<16x128xbf16>, vector<128x384xbf16>, vector<16x384xf32> -> vector<16x384xf32>
    %280 = vector.extract_strided_slice %277 {offsets = [0, 0], sizes = [16, 128], strides = [1, 1]} : vector<16x384xf32> to vector<16x128xf32>
    %281 = vector.extract_strided_slice %279 {offsets = [0, 0], sizes = [16, 128], strides = [1, 1]} : vector<16x384xf32> to vector<16x128xf32>
    %282 = arith.addf %280, %281 : vector<16x128xf32>
    %283 = arith.negf %282 : vector<16x128xf32>
    %284 = math.exp %283 : vector<16x128xf32>
    %cst_80 = arith.constant 1.000000e+00 : f32
    %285 = vector.broadcast %cst_80 : f32 to vector<16x128xf32>
    %286 = arith.addf %285, %284 : vector<16x128xf32>
    %287 = arith.divf %285, %286 : vector<16x128xf32>
    %288 = vector.extract_strided_slice %277 {offsets = [0, 128], sizes = [16, 128], strides = [1, 1]} : vector<16x384xf32> to vector<16x128xf32>
    %289 = vector.extract_strided_slice %279 {offsets = [0, 128], sizes = [16, 128], strides = [1, 1]} : vector<16x384xf32> to vector<16x128xf32>
    %290 = arith.addf %288, %289 : vector<16x128xf32>
    %291 = arith.negf %290 : vector<16x128xf32>
    %292 = math.exp %291 : vector<16x128xf32>
    %cst_81 = arith.constant 1.000000e+00 : f32
    %293 = vector.broadcast %cst_81 : f32 to vector<16x128xf32>
    %294 = arith.addf %293, %292 : vector<16x128xf32>
    %295 = arith.divf %293, %294 : vector<16x128xf32>
    %296 = vector.extract_strided_slice %277 {offsets = [0, 256], sizes = [16, 128], strides = [1, 1]} : vector<16x384xf32> to vector<16x128xf32>
    %297 = vector.extract_strided_slice %279 {offsets = [0, 256], sizes = [16, 128], strides = [1, 1]} : vector<16x384xf32> to vector<16x128xf32>
    %298 = vector.broadcast %6 : vector<1x128xf32> to vector<16x128xf32>
    %299 = arith.addf %297, %298 : vector<16x128xf32>
    %300 = arith.mulf %287, %299 : vector<16x128xf32>
    %301 = arith.addf %296, %300 : vector<16x128xf32>
    %302 = math.tanh %301 : vector<16x128xf32>
    %cst_82 = arith.constant 1.000000e+00 : f32
    %303 = vector.broadcast %cst_82 : f32 to vector<16x128xf32>
    %304 = arith.subf %303, %295 : vector<16x128xf32>
    %305 = arith.mulf %304, %302 : vector<16x128xf32>
    %306 = arith.mulf %295, %273 : vector<16x128xf32>
    %307 = arith.addf %305, %306 : vector<16x128xf32>
    %308 = arith.addi %8, %c6_i32 : i32
    %309 = vector.broadcast %308 : i32 to vector<16x128xi32>
    %310 = arith.cmpi sgt, %7, %309 : vector<16x128xi32>
    %cst_83 = arith.constant 0.000000e+00 : f32
    %311 = vector.broadcast %cst_83 : f32 to vector<16x128xf32>
    %312 = arith.select %310, %307, %311 : vector<16x128xi1>, vector<16x128xf32>
    %c0_84 = arith.constant 0 : index
    %313 = arith.index_cast %c6_i32 : i32 to index
    %c0_85 = arith.constant 0 : index
    %c0_86 = arith.constant 0 : index
    %314 = vector.load %arg6[%c0_84, %313, %c0_85, %c0_86] : memref<1x8x16x128xf32, #tpu.memory_space<vmem>>, vector<1x1x16x128xf32>
    %315 = vector.shape_cast %314 : vector<1x1x16x128xf32> to vector<16x128xf32>
    %316 = vector.shape_cast %312 : vector<16x128xf32> to vector<1x1x16x128xf32>
    tpu.vector_store %arg6[%c0_84, %313, %c0_85, %c0_86], %316 {strides = array<i32>} : memref<1x8x16x128xf32, #tpu.memory_space<vmem>>, vector<1x1x16x128xf32>,
    %317 = arith.select %310, %307, %273 : vector<16x128xi1>, vector<16x128xf32>
    %c7_i32 = arith.constant 7 : i32
    %c0_87 = arith.constant 0 : index
    %318 = arith.index_cast %c7_i32 : i32 to index
    %c0_88 = arith.constant 0 : index
    %c0_89 = arith.constant 0 : index
    %319 = vector.load %arg2[%c0_87, %318, %c0_88, %c0_89] : memref<1x8x16x384xbf16, #tpu.memory_space<vmem>>, vector<1x1x16x384xbf16>
    %320 = vector.shape_cast %319 : vector<1x1x16x384xbf16> to vector<16x384xbf16>
    %321 = arith.extf %320 : vector<16x384xbf16> to vector<16x384xf32>
    %322 = arith.truncf %317 : vector<16x128xf32> to vector<16x128xbf16>
    %cst_90 = arith.constant dense<0.000000e+00> : vector<16x384xf32>
    %323 = tpu.matmul %322, %4, %cst_90 {dimension_numbers = #tpu.dot_dimension_numbers<[1], [0], [0], [1], [0, 0, 1, 1], [], []>} : vector<16x128xbf16>, vector<128x384xbf16>, vector<16x384xf32> -> vector<16x384xf32>
    %324 = vector.extract_strided_slice %321 {offsets = [0, 0], sizes = [16, 128], strides = [1, 1]} : vector<16x384xf32> to vector<16x128xf32>
    %325 = vector.extract_strided_slice %323 {offsets = [0, 0], sizes = [16, 128], strides = [1, 1]} : vector<16x384xf32> to vector<16x128xf32>
    %326 = arith.addf %324, %325 : vector<16x128xf32>
    %327 = arith.negf %326 : vector<16x128xf32>
    %328 = math.exp %327 : vector<16x128xf32>
    %cst_91 = arith.constant 1.000000e+00 : f32
    %329 = vector.broadcast %cst_91 : f32 to vector<16x128xf32>
    %330 = arith.addf %329, %328 : vector<16x128xf32>
    %331 = arith.divf %329, %330 : vector<16x128xf32>
    %332 = vector.extract_strided_slice %321 {offsets = [0, 128], sizes = [16, 128], strides = [1, 1]} : vector<16x384xf32> to vector<16x128xf32>
    %333 = vector.extract_strided_slice %323 {offsets = [0, 128], sizes = [16, 128], strides = [1, 1]} : vector<16x384xf32> to vector<16x128xf32>
    %334 = arith.addf %332, %333 : vector<16x128xf32>
    %335 = arith.negf %334 : vector<16x128xf32>
    %336 = math.exp %335 : vector<16x128xf32>
    %cst_92 = arith.constant 1.000000e+00 : f32
    %337 = vector.broadcast %cst_92 : f32 to vector<16x128xf32>
    %338 = arith.addf %337, %336 : vector<16x128xf32>
    %339 = arith.divf %337, %338 : vector<16x128xf32>
    %340 = vector.extract_strided_slice %321 {offsets = [0, 256], sizes = [16, 128], strides = [1, 1]} : vector<16x384xf32> to vector<16x128xf32>
    %341 = vector.extract_strided_slice %323 {offsets = [0, 256], sizes = [16, 128], strides = [1, 1]} : vector<16x384xf32> to vector<16x128xf32>
    %342 = vector.broadcast %6 : vector<1x128xf32> to vector<16x128xf32>
    %343 = arith.addf %341, %342 : vector<16x128xf32>
    %344 = arith.mulf %331, %343 : vector<16x128xf32>
    %345 = arith.addf %340, %344 : vector<16x128xf32>
    %346 = math.tanh %345 : vector<16x128xf32>
    %cst_93 = arith.constant 1.000000e+00 : f32
    %347 = vector.broadcast %cst_93 : f32 to vector<16x128xf32>
    %348 = arith.subf %347, %339 : vector<16x128xf32>
    %349 = arith.mulf %348, %346 : vector<16x128xf32>
    %350 = arith.mulf %339, %317 : vector<16x128xf32>
    %351 = arith.addf %349, %350 : vector<16x128xf32>
    %352 = arith.addi %8, %c7_i32 : i32
    %353 = vector.broadcast %352 : i32 to vector<16x128xi32>
    %354 = arith.cmpi sgt, %7, %353 : vector<16x128xi32>
    %cst_94 = arith.constant 0.000000e+00 : f32
    %355 = vector.broadcast %cst_94 : f32 to vector<16x128xf32>
    %356 = arith.select %354, %351, %355 : vector<16x128xi1>, vector<16x128xf32>
    %c0_95 = arith.constant 0 : index
    %357 = arith.index_cast %c7_i32 : i32 to index
    %c0_96 = arith.constant 0 : index
    %c0_97 = arith.constant 0 : index
    %358 = vector.load %arg6[%c0_95, %357, %c0_96, %c0_97] : memref<1x8x16x128xf32, #tpu.memory_space<vmem>>, vector<1x1x16x128xf32>
    %359 = vector.shape_cast %358 : vector<1x1x16x128xf32> to vector<16x128xf32>
    %360 = vector.shape_cast %356 : vector<16x128xf32> to vector<1x1x16x128xf32>
    tpu.vector_store %arg6[%c0_95, %357, %c0_96, %c0_97], %360 {strides = array<i32>} : memref<1x8x16x128xf32, #tpu.memory_space<vmem>>, vector<1x1x16x128xf32>,
    %361 = arith.select %354, %351, %317 : vector<16x128xi1>, vector<16x128xf32>
    %c8_i32_98 = arith.constant 8 : i32
    %c0_99 = arith.constant 0 : index
    %c0_100 = arith.constant 0 : index
    %362 = vector.load %arg8[%c0_99, %c0_100] : memref<16x128xf32, #tpu.memory_space<vmem>>, vector<16x128xf32>
    tpu.vector_store %arg8[%c0_99, %c0_100], %361 {strides = array<i32>} : memref<16x128xf32, #tpu.memory_space<vmem>>, vector<16x128xf32>,
    %c0_i32_101 = arith.constant 0 : i32
    %363 = arith.cmpi eq, %arg1, %c0_i32_101 : i32
    %364 = arith.extui %363 : i1 to i32
    %c0_i32_102 = arith.constant 0 : i32
    %365 = arith.cmpi ne, %364, %c0_i32_102 : i32
    scf.if %365 {
      %c0_103 = arith.constant 0 : index
      %c0_104 = arith.constant 0 : index
      %c0_105 = arith.constant 0 : index
      %366 = vector.load %arg7[%c0_103, %c0_104, %c0_105] : memref<1x16x128xf32, #tpu.memory_space<vmem>>, vector<1x16x128xf32>
      %367 = vector.shape_cast %366 : vector<1x16x128xf32> to vector<16x128xf32>
      %368 = vector.shape_cast %361 : vector<16x128xf32> to vector<1x16x128xf32>
      tpu.vector_store %arg7[%c0_103, %c0_104, %c0_105], %368 {strides = array<i32>} : memref<1x16x128xf32, #tpu.memory_space<vmem>>, vector<1x16x128xf32>,
    } else {
    }
    return
  }
  func.func @transform_0(%arg0: i32, %arg1: i32) -> (i32, i32, i32, i32) {
    %c0_i32 = arith.constant 0 : i32
    %c0_i32_0 = arith.constant 0 : i32
    %c0_i32_1 = arith.constant 0 : i32
    return %arg0, %arg1, %c0_i32, %c0_i32_0 : i32, i32, i32, i32
  }
  func.func @transform_1(%arg0: i32, %arg1: i32) -> (i32, i32, i32) {
    %c0_i32 = arith.constant 0 : i32
    %c0_i32_0 = arith.constant 0 : i32
    %c0_i32_1 = arith.constant 0 : i32
    return %arg0, %c0_i32, %c0_i32_0 : i32, i32, i32
  }
  func.func @transform_2(%arg0: i32, %arg1: i32) -> (i32, i32, i32) {
    %c0_i32 = arith.constant 0 : i32
    %c0_i32_0 = arith.constant 0 : i32
    %c0_i32_1 = arith.constant 0 : i32
    return %arg0, %c0_i32, %c0_i32_0 : i32, i32, i32
  }
  func.func @transform_3(%arg0: i32, %arg1: i32) -> (i32, i32) {
    %c0_i32 = arith.constant 0 : i32
    %c0_i32_0 = arith.constant 0 : i32
    %c0_i32_1 = arith.constant 0 : i32
    return %c0_i32, %c0_i32_0 : i32, i32
  }
  func.func @transform_4(%arg0: i32, %arg1: i32) -> (i32, i32, i32, i32) {
    %c0_i32 = arith.constant 0 : i32
    %c0_i32_0 = arith.constant 0 : i32
    %c0_i32_1 = arith.constant 0 : i32
    return %arg0, %arg1, %c0_i32, %c0_i32_0 : i32, i32, i32, i32
  }
  func.func @transform_5(%arg0: i32, %arg1: i32) -> (i32, i32, i32) {
    %c0_i32 = arith.constant 0 : i32
    %c0_i32_0 = arith.constant 0 : i32
    %c0_i32_1 = arith.constant 0 : i32
    return %arg0, %c0_i32, %c0_i32_0 : i32, i32, i32
  }
}

</mosaic_0001>

<llo_original>
// kernel: encoder_forward.2
$region0: #{encoder_forward.2}
  #allocation0 [shape = 'u32[]', space=smem, size = 0x4, offset = 0x4, fixed_abs, tag = 'smem constant byte address 0x4 - core index']
  #allocation1 [shape = 'u32[72,128]{1,0:T(1,128)}', space=vmem, size = 0x9000, scoped, tag = 'internal scratch']
  %s0 = inlined_call_operand.vmem [shape: bf16[2,128,128], index: 0, kind: input, shape index: {}]
  %s1 = inlined_call_operand.vmem [shape: bf16[2,128,384], index: 1, kind: input, shape index: {}]
  %s2 = inlined_call_operand.vmem [shape: f32[2,1,384], index: 2, kind: input, shape index: {}]
  %s3 = inlined_call_operand.vmem [shape: bf16[2,128,384], index: 3, kind: output, shape index: {}]
  %s4 = sld [smem:[#allocation0]]
  $region45: #{encoder_forward.2} parent=0
    _
  %s6 = ssub.s32 1, %s4
  %s7 = scalar_select 0, %s6, %s4
  loop: start=0, step=1, limit=4
  $region2: #{encoder_forward.2} parent=0 // loop_pre_header
    _
  $region3: #{encoder_forward.2} parent=0 // loop_header
    %s9 = sphi 0, %s13
    %p10 = scmp.ge.s32.totalorder %s9, 4
    %s16 = sphi 0, %s28
    %s17 = sphi 0, %s24
    %s18 = sphi 0, %s16
    %s19 = sphi 0, %s17
    %s20 = sphi 0, %s18
    %s21 = sphi 0, %s19
    %s33 = sphi 0, %s35
    %s36 = sphi 0, %s33
    %s37 = sphi 0, %s36
    %s53 = sphi 0, %s37
    %s59 = sphi 0, %s61
    %s62 = sphi 0, %s59
    %s63 = sphi 0, %s62
    %s79 = sphi 0, %s63
    %s85 = sphi 0, %s87
    %s88 = sphi 0, %s85
    %s89 = sphi 0, %s88
    %s105 = sphi 0, %s89
    %s113 = sphi 0, %s115
    %s116 = sphi 0, %s113
    %s117 = sphi 0, %s116
    %s133 = sphi 0, %s117
  $region4: #{encoder_forward.2} parent=0 // loop_header_branch
    %12 = sbr.rel (%p10) target = $region8
  $region5: #{encoder_forward.2} parent=0 // loop_body
    %s14 = ssub.s32 %s9, 1
    %s15 = ssub.s32 %s9, 2
    %s22 = sadd.s32 1, %s17
    %p23 = scmp.ge.s32.totalorder %s22, 1
    %s24 = scalar_select %p23, 0, %s22
    %s25 = sadd.s32 1, %s16
    %s26 = scalar_select %p23, %s25, %s16
    %p27 = scmp.ge.s32.totalorder %s26, 2
    %s28 = scalar_select %p27, 0, %s26
    %s29 = ssub.s32 %s16, %s28
    %s30 = ssub.s32 %s17, %s24
    %s31 = sor.u32 %s29, %s30
    %p32 = scmp.eq.s32.totalorder %s31, 0
    %s34 = sadd.s32 %s33, 1
    %s35 = scalar_select %p32, %s33, %s34
    %p38 = pneg %p32
    %p39 = scmp.eq.s32.totalorder %s9, 1
    %p40 = por %p38, %p39
    %p41 = scmp.ne.s32.totalorder %s33, %s36
    %p42 = scmp.eq.s32.totalorder %s9, 0
    %p43 = por %p41, %p42
    %p44 = scmp.ne.s32.totalorder %s33, %s36
    %p45 = scmp.eq.s32.totalorder %s14, 1
    %p46 = por %p44, %p45
    %p47 = scmp.ne.s32.totalorder %s36, %s37
    %p48 = scmp.eq.s32.totalorder %s14, 0
    %p49 = por %p47, %p48
    %p50 = scmp.ne.s32.totalorder %s36, %s37
    %p51 = scmp.eq.s32.totalorder %s15, 1
    %p52 = por %p50, %p51
    %p54 = scmp.ne.s32.totalorder %s37, %s53
    %p55 = scmp.eq.s32.totalorder %s15, 0
    %p56 = por %p54, %p55
    %s57 = ssub.s32 %s16, %s28
    %p58 = scmp.eq.s32.totalorder %s57, 0
    %s60 = sadd.s32 %s59, 1
    %s61 = scalar_select %p58, %s59, %s60
    %p64 = pneg %p58
    %p65 = scmp.eq.s32.totalorder %s9, 1
    %p66 = por %p64, %p65
    %p67 = scmp.ne.s32.totalorder %s59, %s62
    %p68 = scmp.eq.s32.totalorder %s9, 0
    %p69 = por %p67, %p68
    %p70 = scmp.ne.s32.totalorder %s59, %s62
    %p71 = scmp.eq.s32.totalorder %s14, 1
    %p72 = por %p70, %p71
    %p73 = scmp.ne.s32.totalorder %s62, %s63
    %p74 = scmp.eq.s32.totalorder %s14, 0
    %p75 = por %p73, %p74
    %p76 = scmp.ne.s32.totalorder %s62, %s63
    %p77 = scmp.eq.s32.totalorder %s15, 1
    %p78 = por %p76, %p77
    %p80 = scmp.ne.s32.totalorder %s63, %s79
    %p81 = scmp.eq.s32.totalorder %s15, 0
    %p82 = por %p80, %p81
    %s83 = ssub.s32 %s16, %s28
    %p84 = scmp.eq.s32.totalorder %s83, 0
    %s86 = sadd.s32 %s85, 1
    %s87 = scalar_select %p84, %s85, %s86
    %p90 = pneg %p84
    %p91 = scmp.eq.s32.totalorder %s9, 1
    %p92 = por %p90, %p91
    %p93 = scmp.ne.s32.totalorder %s85, %s88
    %p94 = scmp.eq.s32.totalorder %s9, 0
    %p95 = por %p93, %p94
    %p96 = scmp.ne.s32.totalorder %s85, %s88
    %p97 = scmp.eq.s32.totalorder %s14, 1
    %p98 = por %p96, %p97
    %p99 = scmp.ne.s32.totalorder %s88, %s89
    %p100 = scmp.eq.s32.totalorder %s14, 0
    %p101 = por %p99, %p100
    %p102 = scmp.ne.s32.totalorder %s88, %s89
    %p103 = scmp.eq.s32.totalorder %s15, 1
    %p104 = por %p102, %p103
    %p106 = scmp.ne.s32.totalorder %s89, %s105
    %p107 = scmp.eq.s32.totalorder %s15, 0
    %p108 = por %p106, %p107
    %s109 = ssub.s32 %s16, %s28
    %s110 = ssub.s32 %s17, %s24
    %s111 = sor.u32 %s109, %s110
    %p112 = scmp.eq.s32.totalorder %s111, 0
    %s114 = sadd.s32 %s113, 1
    %s115 = scalar_select %p112, %s113, %s114
    %p118 = pneg %p112
    %p119 = scmp.eq.s32.totalorder %s9, 1
    %p120 = por %p118, %p119
    %p121 = scmp.ne.s32.totalorder %s113, %s116
    %p122 = scmp.eq.s32.totalorder %s9, 0
    %p123 = por %p121, %p122
    %p124 = scmp.ne.s32.totalorder %s113, %s116
    %p125 = scmp.eq.s32.totalorder %s14, 1
    %p126 = por %p124, %p125
    %p127 = scmp.ne.s32.totalorder %s116, %s117
    %p128 = scmp.eq.s32.totalorder %s14, 0
    %p129 = por %p127, %p128
    %p130 = scmp.ne.s32.totalorder %s116, %s117
    %p131 = scmp.eq.s32.totalorder %s15, 1
    %p132 = por %p130, %p131
    %p134 = scmp.ne.s32.totalorder %s117, %s133
    %p135 = scmp.eq.s32.totalorder %s15, 0
    %p136 = por %p134, %p135
    %p137 = scmp.le.s32.totalorder 1, %s9
    %p138 = scmp.lt.s32.totalorder %s9, 3
    %p139 = pnand %p137, %p138
    %p140 = pneg %p139
    // Predicated region
    $region9: #{encoder_forward.2} parent=5 // pred_check
      _
    $region10: #{encoder_forward.2} parent=5 // pred_check_branch
      %142 = sbr.rel (%p139) target = $region12
    $region11: #{encoder_forward.2} parent=5 // pred_region
      %s143 = ssub.s32 %s9, 1
    $region12: #{encoder_forward.2} parent=5 // pred_fallthru
      _
    %p144 = scmp.lt.s32.totalorder %s9, 2
    // Predicated region
    $region13: #{encoder_forward.2} parent=5 // pred_check
      %p145 = pneg %p144
    $region14: #{encoder_forward.2} parent=5 // pred_check_branch
      %147 = sbr.rel (%p145) target = $region16
    $region15: #{encoder_forward.2} parent=5 // pred_region
      // Predicated region
      $region17: #{encoder_forward.2} parent=15 // pred_check
        %p148 = pneg %p43
      $region18: #{encoder_forward.2} parent=15 // pred_check_branch
        %150 = sbr.rel (%p148) target = $region20
      $region19: #{encoder_forward.2} parent=15 // pred_region
        %s151 = smul.u32 16, %s17
        %p152 = scmp.lt.s32.totalorder %s16, 1
        %s153 = scalar_select %p152, %s16, 1
        %p154 = scmp.lt.s32.totalorder %s151, 15
        %s155 = scalar_select %p154, %s151, 15
        %s156 = smul.addr %s153, 16
        %s157 = sadd.s32 %s155, %s156
        %s158 = smul.addr %s157, 4
        %s159 = scalar_lea.vmem %s0, %s158
        %s160 = smul.u32 16, %s17
      $region20: #{encoder_forward.2} parent=15 // pred_fallthru
        _
      // Predicated region
      $region21: #{encoder_forward.2} parent=15 // pred_check
        %p161 = pneg %p69
      $region22: #{encoder_forward.2} parent=15 // pred_check_branch
        %163 = sbr.rel (%p161) target = $region24
      $region23: #{encoder_forward.2} parent=15 // pred_region
        %p164 = scmp.lt.s32.totalorder %s16, 1
        %s165 = scalar_select %p164, %s16, 1
        %s166 = smul.addr %s165, 48
        %s167 = smul.addr %s166, 4
        %s168 = scalar_lea.vmem %s1, %s167
      $region24: #{encoder_forward.2} parent=15 // pred_fallthru
        _
      // Predicated region
      $region25: #{encoder_forward.2} parent=15 // pred_check
        %p169 = pneg %p95
      $region26: #{encoder_forward.2} parent=15 // pred_check_branch
        %171 = sbr.rel (%p169) target = $region28
      $region27: #{encoder_forward.2} parent=15 // pred_region
        %p172 = scmp.lt.s32.totalorder %s16, 1
        %s173 = scalar_select %p172, %s16, 1
        %s174 = smul.addr %s173, 3
        %s175 = scalar_lea.vmem %s2, %s174
      $region28: #{encoder_forward.2} parent=15 // pred_fallthru
        _
    $region16: #{encoder_forward.2} parent=5 // pred_fallthru
      _
    %p176 = scmp.le.s32.totalorder 1, %s9
    %p177 = scmp.lt.s32.totalorder %s9, 3
    %p178 = pnand %p176, %p177
    %p179 = pneg %p178
    // Predicated region
    $region29: #{encoder_forward.2} parent=5 // pred_check
      _
    $region30: #{encoder_forward.2} parent=5 // pred_check_branch
      %181 = sbr.rel (%p178) target = $region32
    $region31: #{encoder_forward.2} parent=5 // pred_region
      %s182 = ssub.s32 %s9, 1
      %s183 = smul.u32 16, %s19
      %p184 = scmp.lt.s32.totalorder %s18, 1
      %s185 = scalar_select %p184, %s18, 1
      %p186 = scmp.lt.s32.totalorder %s183, 15
      %s187 = scalar_select %p186, %s183, 15
      %s188 = smul.addr %s185, 16
      %s189 = sadd.s32 %s187, %s188
      %s190 = smul.addr %s189, 4
      %s191 = scalar_lea.vmem %s0, %s190
      %p192 = pneg %p49
      %p193 = pneg %p46
      %p194 = scmp.lt.s32.totalorder %s18, 1
      %s195 = scalar_select %p194, %s18, 1
      %s196 = smul.addr %s195, 48
      %s197 = smul.addr %s196, 4
      %s198 = scalar_lea.vmem %s1, %s197
      %p199 = pneg %p75
      %p200 = pneg %p72
      %p201 = scmp.lt.s32.totalorder %s18, 1
      %s202 = scalar_select %p201, %s18, 1
      %s203 = smul.addr %s202, 3
      %s204 = scalar_lea.vmem %s2, %s203
      %p205 = pneg %p101
      %p206 = pneg %p98
      %p207 = pneg %p129
      %p208 = pneg %p126
      %s209 = smul.u32 16, %s19
      %p210 = scmp.lt.s32.totalorder %s18, 1
      %s211 = scalar_select %p210, %s18, 1
      %p212 = scmp.lt.s32.totalorder %s209, 15
      %s213 = scalar_select %p212, %s209, 15
      %s214 = smul.addr %s213, 3
      %s215 = smul.addr %s211, 48
      %s216 = sadd.s32 %s214, %s215
      %s217 = smul.addr %s216, 4
      %s218 = scalar_lea.vmem %s3, %s217
      %s219 = smul.u32 16, %s19
      %p220 = scmp.lt.s32.totalorder %s18, 1
      %s221 = scalar_select %p220, %s18, 1
      %p222 = scmp.lt.s32.totalorder %s219, 15
      %s223 = scalar_select %p222, %s219, 15
      %s224 = smul.addr %s221, 16
      %s225 = sadd.s32 %s223, %s224
      %s226 = smul.addr %s225, 4
      %s227 = scalar_lea.vmem %s0, %s226
      %s228 = smul.u32 16, %s19
      %p229 = scmp.lt.s32.totalorder %s18, 1
      %s230 = scalar_select %p229, %s18, 1
      %s231 = smul.addr %s230, 48
      %s232 = smul.addr %s231, 4
      %s233 = scalar_lea.vmem %s1, %s232
      %p234 = scmp.lt.s32.totalorder %s18, 1
      %s235 = scalar_select %p234, %s18, 1
      %s236 = smul.addr %s235, 3
      %s237 = scalar_lea.vmem %s2, %s236
      %s238 = smul.u32 16, %s19
      %p239 = scmp.lt.s32.totalorder %s18, 1
      %s240 = scalar_select %p239, %s18, 1
      %p241 = scmp.lt.s32.totalorder %s238, 15
      %s242 = scalar_select %p241, %s238, 15
      %s243 = smul.addr %s242, 3
      %s244 = smul.addr %s240, 48
      %s245 = sadd.s32 %s243, %s244
      %s246 = smul.addr %s245, 4
      %s247 = scalar_lea.vmem %s3, %s246
      %s248 = smul.u32 16, %s19
      %v249 = vld [vmem:[%s227] sm:$0xf]
      %v250 = vld [vmem:[%s227 + $0x4] sm:$0xf]
      %v251 = vld [vmem:[%s227 + $0x8] sm:$0xf]
      %v252 = vld [vmem:[%s227 + $0xc] sm:$0xf]
      %v253 = vld [vmem:[%s227 + $0x10] sm:$0xf]
      %v254 = vld [vmem:[%s227 + $0x14] sm:$0xf]
      %v255 = vld [vmem:[%s227 + $0x18] sm:$0xf]
      %v256 = vld [vmem:[%s227 + $0x1c] sm:$0xf]
      %v257 = vld [vmem:[%s227 + $0x20] sm:$0xf]
      %v258 = vld [vmem:[%s227 + $0x24] sm:$0xf]
      %v259 = vld [vmem:[%s227 + $0x28] sm:$0xf]
      %v260 = vld [vmem:[%s227 + $0x2c] sm:$0xf]
      %v261 = vld [vmem:[%s227 + $0x30] sm:$0xf]
      %v262 = vld [vmem:[%s227 + $0x34] sm:$0xf]
      %v263 = vld [vmem:[%s227 + $0x38] sm:$0xf]
      %v264 = vld [vmem:[%s227 + $0x3c] sm:$0xf]
      %v265 = vld [vmem:[%s233] sm:$0xff]
      %v266 = vld [vmem:[%s233 + $0x8] sm:$0xf]
      %v267 = vld [vmem:[%s233 + $0xc] sm:$0xff]
      %v268 = vld [vmem:[%s233 + $0x14] sm:$0xf]
      %v269 = vld [vmem:[%s233 + $0x18] sm:$0xff]
      %v270 = vld [vmem:[%s233 + $0x20] sm:$0xf]
      %v271 = vld [vmem:[%s233 + $0x24] sm:$0xff]
      %v272 = vld [vmem:[%s233 + $0x2c] sm:$0xf]
      %v273 = vld [vmem:[%s233 + $0x30] sm:$0xff]
      %v274 = vld [vmem:[%s233 + $0x38] sm:$0xf]
      %v275 = vld [vmem:[%s233 + $0x3c] sm:$0xff]
      %v276 = vld [vmem:[%s233 + $0x44] sm:$0xf]
      %v277 = vld [vmem:[%s233 + $0x48] sm:$0xff]
      %v278 = vld [vmem:[%s233 + $0x50] sm:$0xf]
      %v279 = vld [vmem:[%s233 + $0x54] sm:$0xff]
      %v280 = vld [vmem:[%s233 + $0x5c] sm:$0xf]
      %v281 = vld [vmem:[%s233 + $0x60] sm:$0xff]
      %v282 = vld [vmem:[%s233 + $0x68] sm:$0xf]
      %v283 = vld [vmem:[%s233 + $0x6c] sm:$0xff]
      %v284 = vld [vmem:[%s233 + $0x74] sm:$0xf]
      %v285 = vld [vmem:[%s233 + $0x78] sm:$0xff]
      %v286 = vld [vmem:[%s233 + $0x80] sm:$0xf]
      %v287 = vld [vmem:[%s233 + $0x84] sm:$0xff]
      %v288 = vld [vmem:[%s233 + $0x8c] sm:$0xf]
      %v289 = vld [vmem:[%s233 + $0x90] sm:$0xff]
      %v290 = vld [vmem:[%s233 + $0x98] sm:$0xf]
      %v291 = vld [vmem:[%s233 + $0x9c] sm:$0xff]
      %v292 = vld [vmem:[%s233 + $0xa4] sm:$0xf]
      %v293 = vld [vmem:[%s233 + $0xa8] sm:$0xff]
      %v294 = vld [vmem:[%s233 + $0xb0] sm:$0xf]
      %v295 = vld [vmem:[%s233 + $0xb4] sm:$0xff]
      %v296 = vld [vmem:[%s233 + $0xbc] sm:$0xf]
      %v297 = vld [vmem:[%s237] sm:$0x7]
      %v299 = vperm.slane %v297, 0
      %v300 = vperm.slane %v297, 1
      %v301 = vperm.slane %v297, 2
      %v321 = vunpack.c.l.b16 %v249
      %v322 = vunpack.c.l.b16 %v250
      %v323 = vunpack.c.l.b16 %v251
      %v324 = vunpack.c.l.b16 %v252
      %v325 = vunpack.c.l.b16 %v253
      %v326 = vunpack.c.l.b16 %v254
      %v327 = vunpack.c.l.b16 %v255
      %v328 = vunpack.c.l.b16 %v256
      %v329 = vunpack.c.l.b16 %v257
      %v330 = vunpack.c.l.b16 %v258
      %v331 = vunpack.c.l.b16 %v259
      %v332 = vunpack.c.l.b16 %v260
      %v333 = vunpack.c.l.b16 %v261
      %v334 = vunpack.c.l.b16 %v262
      %v335 = vunpack.c.l.b16 %v263
      %v336 = vunpack.c.l.b16 %v264
      %v337 = vpack.c.b16 %v322, %v321
      %v338 = vpack.c.b16 %v324, %v323
      %v339 = vpack.c.b16 %v326, %v325
      %v340 = vpack.c.b16 %v328, %v327
      %v341 = vpack.c.b16 %v330, %v329
      %v342 = vpack.c.b16 %v332, %v331
      %v343 = vpack.c.b16 %v334, %v333
      %v344 = vpack.c.b16 %v336, %v335
      %v385 = vunpack.c.l.b16 %v265
      %v386 = vunpack.c.h.b16 %v265
      %v387 = vunpack.c.l.b16 %v266
      %v388 = vunpack.c.l.b16 %v267
      %v389 = vunpack.c.h.b16 %v267
      %v390 = vunpack.c.l.b16 %v268
      %v391 = vunpack.c.l.b16 %v269
      %v392 = vunpack.c.h.b16 %v269
      %v393 = vunpack.c.l.b16 %v270
      %v394 = vunpack.c.l.b16 %v271
      %v395 = vunpack.c.h.b16 %v271
      %v396 = vunpack.c.l.b16 %v272
      %v397 = vunpack.c.l.b16 %v273
      %v398 = vunpack.c.h.b16 %v273
      %v399 = vunpack.c.l.b16 %v274
      %v400 = vunpack.c.l.b16 %v275
      %v401 = vunpack.c.h.b16 %v275
      %v402 = vunpack.c.l.b16 %v276
      %v403 = vunpack.c.l.b16 %v277
      %v404 = vunpack.c.h.b16 %v277
      %v405 = vunpack.c.l.b16 %v278
      %v406 = vunpack.c.l.b16 %v279
      %v407 = vunpack.c.h.b16 %v279
      %v408 = vunpack.c.l.b16 %v280
      %v409 = vunpack.c.l.b16 %v281
      %v410 = vunpack.c.h.b16 %v281
      %v411 = vunpack.c.l.b16 %v282
      %v412 = vunpack.c.l.b16 %v283
      %v413 = vunpack.c.h.b16 %v283
      %v414 = vunpack.c.l.b16 %v284
      %v415 = vunpack.c.l.b16 %v285
      %v416 = vunpack.c.h.b16 %v285
      %v417 = vunpack.c.l.b16 %v286
      %v418 = vunpack.c.l.b16 %v287
      %v419 = vunpack.c.h.b16 %v287
      %v420 = vunpack.c.l.b16 %v288
      %v421 = vunpack.c.l.b16 %v289
      %v422 = vunpack.c.h.b16 %v289
      %v423 = vunpack.c.l.b16 %v290
      %v424 = vunpack.c.l.b16 %v291
      %v425 = vunpack.c.h.b16 %v291
      %v426 = vunpack.c.l.b16 %v292
      %v427 = vunpack.c.l.b16 %v293
      %v428 = vunpack.c.h.b16 %v293
      %v429 = vunpack.c.l.b16 %v294
      %v430 = vunpack.c.l.b16 %v295
      %v431 = vunpack.c.h.b16 %v295
      %v432 = vunpack.c.l.b16 %v296
      %v433 = vpack.c.b16 %v388, %v385
      %v434 = vpack.c.b16 %v389, %v386
      %v435 = vpack.c.b16 %v390, %v387
      %v436 = vpack.c.b16 %v394, %v391
      %v437 = vpack.c.b16 %v395, %v392
      %v438 = vpack.c.b16 %v396, %v393
      %v439 = vpack.c.b16 %v400, %v397
      %v440 = vpack.c.b16 %v401, %v398
      %v441 = vpack.c.b16 %v402, %v399
      %v442 = vpack.c.b16 %v406, %v403
      %v443 = vpack.c.b16 %v407, %v404
      %v444 = vpack.c.b16 %v408, %v405
      %v445 = vpack.c.b16 %v412, %v409
      %v446 = vpack.c.b16 %v413, %v410
      %v447 = vpack.c.b16 %v414, %v411
      %v448 = vpack.c.b16 %v418, %v415
      %v449 = vpack.c.b16 %v419, %v416
      %v450 = vpack.c.b16 %v420, %v417
      %v451 = vpack.c.b16 %v424, %v421
      %v452 = vpack.c.b16 %v425, %v422
      %v453 = vpack.c.b16 %v426, %v423
      %v454 = vpack.c.b16 %v430, %v427
      %v455 = vpack.c.b16 %v431, %v428
      %v456 = vpack.c.b16 %v432, %v429
      %481 = vmatpush.bf16.msra.mxu0 %v454
      %482 = vmatpush.bf16.msra.mxu0 %v451
      %483 = vmatpush.bf16.msra.mxu0 %v448
      %484 = vmatpush.bf16.msra.mxu0 %v445
      %485 = vmatpush.bf16.msra.mxu0 %v442
      %486 = vmatpush.bf16.msra.mxu0 %v439
      %487 = vmatpush.bf16.msra.mxu0 %v436
      %488 = vmatpush.bf16.msra.mxu0 %v433
      %489 = vmatmul.bf16.gmra.mxu0 %v337
      %v490 = vpop.f32.mrf.mxu0
      %v491 = vadd.f32 %v299, %v490
      %v492 = vpop.f32.mrf.mxu0
      %v493 = vadd.f32 %v299, %v492
      %494 = vmatmul.bf16.gmra.mxu0 %v338
      %v495 = vpop.f32.mrf.mxu0
      %v496 = vadd.f32 %v299, %v495
      %v497 = vpop.f32.mrf.mxu0
      %v498 = vadd.f32 %v299, %v497
      %499 = vmatmul.bf16.gmra.mxu0 %v339
      %v500 = vpop.f32.mrf.mxu0
      %v501 = vadd.f32 %v299, %v500
      %v502 = vpop.f32.mrf.mxu0
      %v503 = vadd.f32 %v299, %v502
      %504 = vmatmul.bf16.gmra.mxu0 %v340
      %v505 = vpop.f32.mrf.mxu0
      %v506 = vadd.f32 %v299, %v505
      %v507 = vpop.f32.mrf.mxu0
      %v508 = vadd.f32 %v299, %v507
      %509 = vmatmul.bf16.gmra.mxu0 %v341
      %v510 = vpop.f32.mrf.mxu0
      %v511 = vadd.f32 %v299, %v510
      %v512 = vpop.f32.mrf.mxu0
      %v513 = vadd.f32 %v299, %v512
      %514 = vmatmul.bf16.gmra.mxu0 %v342
      %v515 = vpop.f32.mrf.mxu0
      %v516 = vadd.f32 %v299, %v515
      %v517 = vpop.f32.mrf.mxu0
      %v518 = vadd.f32 %v299, %v517
      %519 = vmatmul.bf16.gmra.mxu0 %v343
      %v520 = vpop.f32.mrf.mxu0
      %v521 = vadd.f32 %v299, %v520
      %v522 = vpop.f32.mrf.mxu0
      %v523 = vadd.f32 %v299, %v522
      %524 = vmatmul.bf16.gmra.mxu0 %v344
      %v525 = vpop.f32.mrf.mxu0
      %v526 = vadd.f32 %v299, %v525
      %v527 = vpop.f32.mrf.mxu0
      %v528 = vadd.f32 %v299, %v527
      %529 = vdwg.mxu0
      %530 = vmatpush.bf16.msra.mxu0 %v455
      %531 = vmatpush.bf16.msra.mxu0 %v452
      %532 = vmatpush.bf16.msra.mxu0 %v449
      %533 = vmatpush.bf16.msra.mxu0 %v446
      %534 = vmatpush.bf16.msra.mxu0 %v443
      %535 = vmatpush.bf16.msra.mxu0 %v440
      %536 = vmatpush.bf16.msra.mxu0 %v437
      %537 = vmatpush.bf16.msra.mxu0 %v434
      %538 = vmatmul.bf16.gmra.mxu0 %v337
      %v539 = vpop.f32.mrf.mxu0
      %v540 = vadd.f32 %v300, %v539
      %v541 = vpop.f32.mrf.mxu0
      %v542 = vadd.f32 %v300, %v541
      %543 = vmatmul.bf16.gmra.mxu0 %v338
      %v544 = vpop.f32.mrf.mxu0
      %v545 = vadd.f32 %v300, %v544
      %v546 = vpop.f32.mrf.mxu0
      %v547 = vadd.f32 %v300, %v546
      %548 = vmatmul.bf16.gmra.mxu0 %v339
      %v549 = vpop.f32.mrf.mxu0
      %v550 = vadd.f32 %v300, %v549
      %v551 = vpop.f32.mrf.mxu0
      %v552 = vadd.f32 %v300, %v551
      %553 = vmatmul.bf16.gmra.mxu0 %v340
      %v554 = vpop.f32.mrf.mxu0
      %v555 = vadd.f32 %v300, %v554
      %v556 = vpop.f32.mrf.mxu0
      %v557 = vadd.f32 %v300, %v556
      %558 = vmatmul.bf16.gmra.mxu0 %v341
      %v559 = vpop.f32.mrf.mxu0
      %v560 = vadd.f32 %v300, %v559
      %v561 = vpop.f32.mrf.mxu0
      %v562 = vadd.f32 %v300, %v561
      %563 = vmatmul.bf16.gmra.mxu0 %v342
      %v564 = vpop.f32.mrf.mxu0
      %v565 = vadd.f32 %v300, %v564
      %v566 = vpop.f32.mrf.mxu0
      %v567 = vadd.f32 %v300, %v566
      %568 = vmatmul.bf16.gmra.mxu0 %v343
      %v569 = vpop.f32.mrf.mxu0
      %v570 = vadd.f32 %v300, %v569
      %v571 = vpop.f32.mrf.mxu0
      %v572 = vadd.f32 %v300, %v571
      %573 = vmatmul.bf16.gmra.mxu0 %v344
      %v574 = vpop.f32.mrf.mxu0
      %v575 = vadd.f32 %v300, %v574
      %v576 = vpop.f32.mrf.mxu0
      %v577 = vadd.f32 %v300, %v576
      %578 = vdwg.mxu0
      %579 = vmatpush.bf16.msra.mxu0 %v456
      %580 = vmatpush.bf16.msra.mxu0 %v453
      %581 = vmatpush.bf16.msra.mxu0 %v450
      %582 = vmatpush.bf16.msra.mxu0 %v447
      %583 = vmatpush.bf16.msra.mxu0 %v444
      %584 = vmatpush.bf16.msra.mxu0 %v441
      %585 = vmatpush.bf16.msra.mxu0 %v438
      %586 = vmatpush.bf16.msra.mxu0 %v435
      %587 = vmatmul.bf16.gmra.mxu0 %v337
      %v588 = vpop.f32.mrf.mxu0
      %v589 = vadd.f32 %v301, %v588
      %v590 = vpop.f32.mrf.mxu0
      %v591 = vadd.f32 %v301, %v590
      %592 = vmatmul.bf16.gmra.mxu0 %v338
      %v593 = vpop.f32.mrf.mxu0
      %v594 = vadd.f32 %v301, %v593
      %v595 = vpop.f32.mrf.mxu0
      %v596 = vadd.f32 %v301, %v595
      %597 = vmatmul.bf16.gmra.mxu0 %v339
      %v598 = vpop.f32.mrf.mxu0
      %v599 = vadd.f32 %v301, %v598
      %v600 = vpop.f32.mrf.mxu0
      %v601 = vadd.f32 %v301, %v600
      %602 = vmatmul.bf16.gmra.mxu0 %v340
      %v603 = vpop.f32.mrf.mxu0
      %v604 = vadd.f32 %v301, %v603
      %v605 = vpop.f32.mrf.mxu0
      %v606 = vadd.f32 %v301, %v605
      %607 = vmatmul.bf16.gmra.mxu0 %v341
      %v608 = vpop.f32.mrf.mxu0
      %v609 = vadd.f32 %v301, %v608
      %v610 = vpop.f32.mrf.mxu0
      %v611 = vadd.f32 %v301, %v610
      %612 = vmatmul.bf16.gmra.mxu0 %v342
      %v613 = vpop.f32.mrf.mxu0
      %v614 = vadd.f32 %v301, %v613
      %v615 = vpop.f32.mrf.mxu0
      %v616 = vadd.f32 %v301, %v615
      %617 = vmatmul.bf16.gmra.mxu0 %v343
      %v618 = vpop.f32.mrf.mxu0
      %v619 = vadd.f32 %v301, %v618
      %v620 = vpop.f32.mrf.mxu0
      %v621 = vadd.f32 %v301, %v620
      %622 = vmatmul.bf16.gmra.mxu0 %v344
      %v623 = vpop.f32.mrf.mxu0
      %v624 = vadd.f32 %v301, %v623
      %v625 = vpop.f32.mrf.mxu0
      %v626 = vadd.f32 %v301, %v625
      %627 = vdwg.mxu0
      %v628 = vpack.c.bf16 %v540, %v491
      %v629 = vpack.c.bf16 %v589, %v589
      %v630 = vpack.c.bf16 %v542, %v493
      %v631 = vpack.c.bf16 %v591, %v591
      %v632 = vpack.c.bf16 %v545, %v496
      %v633 = vpack.c.bf16 %v594, %v594
      %v634 = vpack.c.bf16 %v547, %v498
      %v635 = vpack.c.bf16 %v596, %v596
      %v636 = vpack.c.bf16 %v550, %v501
      %v637 = vpack.c.bf16 %v599, %v599
      %v638 = vpack.c.bf16 %v552, %v503
      %v639 = vpack.c.bf16 %v601, %v601
      %v640 = vpack.c.bf16 %v555, %v506
      %v641 = vpack.c.bf16 %v604, %v604
      %v642 = vpack.c.bf16 %v557, %v508
      %v643 = vpack.c.bf16 %v606, %v606
      %v644 = vpack.c.bf16 %v560, %v511
      %v645 = vpack.c.bf16 %v609, %v609
      %v646 = vpack.c.bf16 %v562, %v513
      %v647 = vpack.c.bf16 %v611, %v611
      %v648 = vpack.c.bf16 %v565, %v516
      %v649 = vpack.c.bf16 %v614, %v614
      %v650 = vpack.c.bf16 %v567, %v518
      %v651 = vpack.c.bf16 %v616, %v616
      %v652 = vpack.c.bf16 %v570, %v521
      %v653 = vpack.c.bf16 %v619, %v619
      %v654 = vpack.c.bf16 %v572, %v523
      %v655 = vpack.c.bf16 %v621, %v621
      %v656 = vpack.c.bf16 %v575, %v526
      %v657 = vpack.c.bf16 %v624, %v624
      %v658 = vpack.c.bf16 %v577, %v528
      %v659 = vpack.c.bf16 %v626, %v626
      %660 = vst [vmem:[%s247] sm:$0xff] %v628
      %661 = vst [vmem:[%s247 + $0x8] sm:$0xf] %v629
      %662 = vst [vmem:[%s247 + $0xc] sm:$0xff] %v630
      %663 = vst [vmem:[%s247 + $0x14] sm:$0xf] %v631
      %664 = vst [vmem:[%s247 + $0x18] sm:$0xff] %v632
      %665 = vst [vmem:[%s247 + $0x20] sm:$0xf] %v633
      %666 = vst [vmem:[%s247 + $0x24] sm:$0xff] %v634
      %667 = vst [vmem:[%s247 + $0x2c] sm:$0xf] %v635
      %668 = vst [vmem:[%s247 + $0x30] sm:$0xff] %v636
      %669 = vst [vmem:[%s247 + $0x38] sm:$0xf] %v637
      %670 = vst [vmem:[%s247 + $0x3c] sm:$0xff] %v638
      %671 = vst [vmem:[%s247 + $0x44] sm:$0xf] %v639
      %672 = vst [vmem:[%s247 + $0x48] sm:$0xff] %v640
      %673 = vst [vmem:[%s247 + $0x50] sm:$0xf] %v641
      %674 = vst [vmem:[%s247 + $0x54] sm:$0xff] %v642
      %675 = vst [vmem:[%s247 + $0x5c] sm:$0xf] %v643
      %676 = vst [vmem:[%s247 + $0x60] sm:$0xff] %v644
      %677 = vst [vmem:[%s247 + $0x68] sm:$0xf] %v645
      %678 = vst [vmem:[%s247 + $0x6c] sm:$0xff] %v646
      %679 = vst [vmem:[%s247 + $0x74] sm:$0xf] %v647
      %680 = vst [vmem:[%s247 + $0x78] sm:$0xff] %v648
      %681 = vst [vmem:[%s247 + $0x80] sm:$0xf] %v649
      %682 = vst [vmem:[%s247 + $0x84] sm:$0xff] %v650
      %683 = vst [vmem:[%s247 + $0x8c] sm:$0xf] %v651
      %684 = vst [vmem:[%s247 + $0x90] sm:$0xff] %v652
      %685 = vst [vmem:[%s247 + $0x98] sm:$0xf] %v653
      %686 = vst [vmem:[%s247 + $0x9c] sm:$0xff] %v654
      %687 = vst [vmem:[%s247 + $0xa4] sm:$0xf] %v655
      %688 = vst [vmem:[%s247 + $0xa8] sm:$0xff] %v656
      %689 = vst [vmem:[%s247 + $0xb0] sm:$0xf] %v657
      %690 = vst [vmem:[%s247 + $0xb4] sm:$0xff] %v658
      %691 = vst [vmem:[%s247 + $0xbc] sm:$0xf] %v659
      %s692 = smul.u32 16, %s19
      %p693 = scmp.lt.s32.totalorder %s18, 1
      %s694 = scalar_select %p693, %s18, 1
      %p695 = scmp.lt.s32.totalorder %s692, 15
      %s696 = scalar_select %p695, %s692, 15
      %s697 = smul.addr %s696, 3
      %s698 = smul.addr %s694, 48
      %s699 = sadd.s32 %s697, %s698
      %s700 = smul.addr %s699, 4
      %s701 = scalar_lea.vmem %s3, %s700
      // Predicated region
      $region33: #{encoder_forward.2} parent=31 // pred_check
        %p702 = pneg %p126
      $region34: #{encoder_forward.2} parent=31 // pred_check_branch
        %704 = sbr.rel (%p702) target = $region36
      $region35: #{encoder_forward.2} parent=31 // pred_region
        %s705 = smul.u32 16, %s19
      $region36: #{encoder_forward.2} parent=31 // pred_fallthru
        _
    $region32: #{encoder_forward.2} parent=5 // pred_fallthru
      _
    %p706 = scmp.le.s32.totalorder 2, %s9
    // Predicated region
    $region37: #{encoder_forward.2} parent=5 // pred_check
      %p707 = pneg %p706
    $region38: #{encoder_forward.2} parent=5 // pred_check_branch
      %709 = sbr.rel (%p707) target = $region40
    $region39: #{encoder_forward.2} parent=5 // pred_region
      %s710 = ssub.s32 %s9, 2
      // Predicated region
      $region41: #{encoder_forward.2} parent=39 // pred_check
        %p711 = pneg %p132
      $region42: #{encoder_forward.2} parent=39 // pred_check_branch
        %713 = sbr.rel (%p711) target = $region44
      $region43: #{encoder_forward.2} parent=39 // pred_region
        %s714 = smul.u32 16, %s21
        %p715 = scmp.lt.s32.totalorder %s20, 1
        %s716 = scalar_select %p715, %s20, 1
        %p717 = scmp.lt.s32.totalorder %s714, 15
        %s718 = scalar_select %p717, %s714, 15
        %s719 = smul.addr %s718, 3
        %s720 = smul.addr %s716, 48
        %s721 = sadd.s32 %s719, %s720
        %s722 = smul.addr %s721, 4
        %s723 = scalar_lea.vmem %s3, %s722
      $region44: #{encoder_forward.2} parent=39 // pred_fallthru
        _
    $region40: #{encoder_forward.2} parent=5 // pred_fallthru
      _
  $region6: #{encoder_forward.2} parent=0 // loop_footer
    %s13 = sadd.s32 1, %s9
  $region7: #{encoder_forward.2} parent=0 // loop_footer_branch
    %8 = sbr.rel target = $region3
  $region8: #{encoder_forward.2} parent=0 // loop_exit
    _

// kernel: encoder_forward.3
$region0: #{encoder_forward.3}
  #allocation0 [shape = 'u32[]', space=smem, size = 0x4, offset = 0x4, fixed_abs, tag = 'smem constant byte address 0x4 - core index']
  #allocation1 [shape = 'u32[72,128]{1,0:T(1,128)}', space=vmem, size = 0x9000, scoped, tag = 'internal scratch']
  #allocation2 [shape = 'f32[16,128]{1,0:T(8,128)}', space=vmem, size = 0x2000, scoped, tag = 'scratch operand']
  %s0 = inlined_call_operand.vmem [shape: bf16[2,8,16,384], index: 0, kind: input, shape index: {}]
  %s1 = inlined_call_operand.vmem [shape: bf16[2,128,384], index: 1, kind: input, shape index: {}]
  %s2 = inlined_call_operand.vmem [shape: f32[2,1,128], index: 2, kind: input, shape index: {}]
  %s3 = inlined_call_operand.vmem [shape: s32[16,128], index: 3, kind: input, shape index: {}]
  %s4 = inlined_call_operand.vmem [shape: f32[2,8,16,128], index: 4, kind: output, shape index: {0}]
  %s5 = inlined_call_operand.vmem [shape: f32[2,16,128], index: 5, kind: output, shape index: {1}]
  %6 = xla_tuple %s4, %s5
  %s7 = sld [smem:[#allocation0]]
  $region65: #{encoder_forward.3} parent=0
    _
  %s9 = ssub.s32 1, %s7
  %s10 = scalar_select 0, %s9, %s7
  loop: start=0, step=1, limit=4
  $region2: #{encoder_forward.3} parent=0 // loop_pre_header
    _
  $region3: #{encoder_forward.3} parent=0 // loop_header
    %s12 = sphi 0, %s16
    %p13 = scmp.ge.s32.totalorder %s12, 4
    %s19 = sphi 0, %s31
    %s20 = sphi 0, %s27
    %s21 = sphi 0, %s19
    %s22 = sphi 0, %s20
    %s23 = sphi 0, %s21
    %s24 = sphi 0, %s22
    %s36 = sphi 0, %s38
    %s39 = sphi 0, %s36
    %s40 = sphi 0, %s39
    %s56 = sphi 0, %s40
    %s62 = sphi 0, %s64
    %s65 = sphi 0, %s62
    %s66 = sphi 0, %s65
    %s82 = sphi 0, %s66
    %s88 = sphi 0, %s90
    %s91 = sphi 0, %s88
    %s92 = sphi 0, %s91
    %s108 = sphi 0, %s92
    %s112 = sphi 0, %s112
    %s114 = sphi 0, %s112
    %s115 = sphi 0, %s114
    %s129 = sphi 0, %s115
    %s137 = sphi 0, %s139
    %s140 = sphi 0, %s137
    %s141 = sphi 0, %s140
    %s157 = sphi 0, %s141
    %s163 = sphi 0, %s165
    %s166 = sphi 0, %s163
    %s167 = sphi 0, %s166
    %s183 = sphi 0, %s167
  $region4: #{encoder_forward.3} parent=0 // loop_header_branch
    %15 = sbr.rel (%p13) target = $region8
  $region5: #{encoder_forward.3} parent=0 // loop_body
    %s17 = ssub.s32 %s12, 1
    %s18 = ssub.s32 %s12, 2
    %s25 = sadd.s32 1, %s20
    %p26 = scmp.ge.s32.totalorder %s25, 1
    %s27 = scalar_select %p26, 0, %s25
    %s28 = sadd.s32 1, %s19
    %s29 = scalar_select %p26, %s28, %s19
    %p30 = scmp.ge.s32.totalorder %s29, 2
    %s31 = scalar_select %p30, 0, %s29
    %s32 = ssub.s32 %s19, %s31
    %s33 = ssub.s32 %s20, %s27
    %s34 = sor.u32 %s32, %s33
    %p35 = scmp.eq.s32.totalorder %s34, 0
    %s37 = sadd.s32 %s36, 1
    %s38 = scalar_select %p35, %s36, %s37
    %p41 = pneg %p35
    %p42 = scmp.eq.s32.totalorder %s12, 1
    %p43 = por %p41, %p42
    %p44 = scmp.ne.s32.totalorder %s36, %s39
    %p45 = scmp.eq.s32.totalorder %s12, 0
    %p46 = por %p44, %p45
    %p47 = scmp.ne.s32.totalorder %s36, %s39
    %p48 = scmp.eq.s32.totalorder %s17, 1
    %p49 = por %p47, %p48
    %p50 = scmp.ne.s32.totalorder %s39, %s40
    %p51 = scmp.eq.s32.totalorder %s17, 0
    %p52 = por %p50, %p51
    %p53 = scmp.ne.s32.totalorder %s39, %s40
    %p54 = scmp.eq.s32.totalorder %s18, 1
    %p55 = por %p53, %p54
    %p57 = scmp.ne.s32.totalorder %s40, %s56
    %p58 = scmp.eq.s32.totalorder %s18, 0
    %p59 = por %p57, %p58
    %s60 = ssub.s32 %s19, %s31
    %p61 = scmp.eq.s32.totalorder %s60, 0
    %s63 = sadd.s32 %s62, 1
    %s64 = scalar_select %p61, %s62, %s63
    %p67 = pneg %p61
    %p68 = scmp.eq.s32.totalorder %s12, 1
    %p69 = por %p67, %p68
    %p70 = scmp.ne.s32.totalorder %s62, %s65
    %p71 = scmp.eq.s32.totalorder %s12, 0
    %p72 = por %p70, %p71
    %p73 = scmp.ne.s32.totalorder %s62, %s65
    %p74 = scmp.eq.s32.totalorder %s17, 1
    %p75 = por %p73, %p74
    %p76 = scmp.ne.s32.totalorder %s65, %s66
    %p77 = scmp.eq.s32.totalorder %s17, 0
    %p78 = por %p76, %p77
    %p79 = scmp.ne.s32.totalorder %s65, %s66
    %p80 = scmp.eq.s32.totalorder %s18, 1
    %p81 = por %p79, %p80
    %p83 = scmp.ne.s32.totalorder %s66, %s82
    %p84 = scmp.eq.s32.totalorder %s18, 0
    %p85 = por %p83, %p84
    %s86 = ssub.s32 %s19, %s31
    %p87 = scmp.eq.s32.totalorder %s86, 0
    %s89 = sadd.s32 %s88, 1
    %s90 = scalar_select %p87, %s88, %s89
    %p93 = pneg %p87
    %p94 = scmp.eq.s32.totalorder %s12, 1
    %p95 = por %p93, %p94
    %p96 = scmp.ne.s32.totalorder %s88, %s91
    %p97 = scmp.eq.s32.totalorder %s12, 0
    %p98 = por %p96, %p97
    %p99 = scmp.ne.s32.totalorder %s88, %s91
    %p100 = scmp.eq.s32.totalorder %s17, 1
    %p101 = por %p99, %p100
    %p102 = scmp.ne.s32.totalorder %s91, %s92
    %p103 = scmp.eq.s32.totalorder %s17, 0
    %p104 = por %p102, %p103
    %p105 = scmp.ne.s32.totalorder %s91, %s92
    %p106 = scmp.eq.s32.totalorder %s18, 1
    %p107 = por %p105, %p106
    %p109 = scmp.ne.s32.totalorder %s92, %s108
    %p110 = scmp.eq.s32.totalorder %s18, 0
    %p111 = por %p109, %p110
    %s113 = sadd.s32 %s112, 1
    %p116 = scmp.eq.s32.totalorder %s12, 1
    %p117 = scmp.ne.s32.totalorder %s112, %s114
    %p118 = scmp.eq.s32.totalorder %s12, 0
    %p119 = por %p117, %p118
    %p120 = scmp.ne.s32.totalorder %s112, %s114
    %p121 = scmp.eq.s32.totalorder %s17, 1
    %p122 = por %p120, %p121
    %p123 = scmp.ne.s32.totalorder %s114, %s115
    %p124 = scmp.eq.s32.totalorder %s17, 0
    %p125 = por %p123, %p124
    %p126 = scmp.ne.s32.totalorder %s114, %s115
    %p127 = scmp.eq.s32.totalorder %s18, 1
    %p128 = por %p126, %p127
    %p130 = scmp.ne.s32.totalorder %s115, %s129
    %p131 = scmp.eq.s32.totalorder %s18, 0
    %p132 = por %p130, %p131
    %s133 = ssub.s32 %s19, %s31
    %s134 = ssub.s32 %s20, %s27
    %s135 = sor.u32 %s133, %s134
    %p136 = scmp.eq.s32.totalorder %s135, 0
    %s138 = sadd.s32 %s137, 1
    %s139 = scalar_select %p136, %s137, %s138
    %p142 = pneg %p136
    %p143 = scmp.eq.s32.totalorder %s12, 1
    %p144 = por %p142, %p143
    %p145 = scmp.ne.s32.totalorder %s137, %s140
    %p146 = scmp.eq.s32.totalorder %s12, 0
    %p147 = por %p145, %p146
    %p148 = scmp.ne.s32.totalorder %s137, %s140
    %p149 = scmp.eq.s32.totalorder %s17, 1
    %p150 = por %p148, %p149
    %p151 = scmp.ne.s32.totalorder %s140, %s141
    %p152 = scmp.eq.s32.totalorder %s17, 0
    %p153 = por %p151, %p152
    %p154 = scmp.ne.s32.totalorder %s140, %s141
    %p155 = scmp.eq.s32.totalorder %s18, 1
    %p156 = por %p154, %p155
    %p158 = scmp.ne.s32.totalorder %s141, %s157
    %p159 = scmp.eq.s32.totalorder %s18, 0
    %p160 = por %p158, %p159
    %s161 = ssub.s32 %s19, %s31
    %p162 = scmp.eq.s32.totalorder %s161, 0
    %s164 = sadd.s32 %s163, 1
    %s165 = scalar_select %p162, %s163, %s164
    %p168 = pneg %p162
    %p169 = scmp.eq.s32.totalorder %s12, 1
    %p170 = por %p168, %p169
    %p171 = scmp.ne.s32.totalorder %s163, %s166
    %p172 = scmp.eq.s32.totalorder %s12, 0
    %p173 = por %p171, %p172
    %p174 = scmp.ne.s32.totalorder %s163, %s166
    %p175 = scmp.eq.s32.totalorder %s17, 1
    %p176 = por %p174, %p175
    %p177 = scmp.ne.s32.totalorder %s166, %s167
    %p178 = scmp.eq.s32.totalorder %s17, 0
    %p179 = por %p177, %p178
    %p180 = scmp.ne.s32.totalorder %s166, %s167
    %p181 = scmp.eq.s32.totalorder %s18, 1
    %p182 = por %p180, %p181
    %p184 = scmp.ne.s32.totalorder %s167, %s183
    %p185 = scmp.eq.s32.totalorder %s18, 0
    %p186 = por %p184, %p185
    %p187 = scmp.le.s32.totalorder 1, %s12
    %p188 = scmp.lt.s32.totalorder %s12, 3
    %p189 = pnand %p187, %p188
    %p190 = pneg %p189
    // Predicated region
    $region9: #{encoder_forward.3} parent=5 // pred_check
      _
    $region10: #{encoder_forward.3} parent=5 // pred_check_branch
      %192 = sbr.rel (%p189) target = $region12
    $region11: #{encoder_forward.3} parent=5 // pred_region
      %s193 = ssub.s32 %s12, 1
      // Predicated region
      $region13: #{encoder_forward.3} parent=11 // pred_check
        %p194 = pneg %p125
      $region14: #{encoder_forward.3} parent=11 // pred_check_branch
        %196 = sbr.rel (%p194) target = $region16
      $region15: #{encoder_forward.3} parent=11 // pred_region
        _
      $region16: #{encoder_forward.3} parent=11 // pred_fallthru
        _
    $region12: #{encoder_forward.3} parent=5 // pred_fallthru
      _
    %p197 = scmp.lt.s32.totalorder %s12, 2
    // Predicated region
    $region17: #{encoder_forward.3} parent=5 // pred_check
      %p198 = pneg %p197
    $region18: #{encoder_forward.3} parent=5 // pred_check_branch
      %200 = sbr.rel (%p198) target = $region20
    $region19: #{encoder_forward.3} parent=5 // pred_region
      // Predicated region
      $region21: #{encoder_forward.3} parent=19 // pred_check
        %p201 = pneg %p46
      $region22: #{encoder_forward.3} parent=19 // pred_check_branch
        %203 = sbr.rel (%p201) target = $region24
      $region23: #{encoder_forward.3} parent=19 // pred_region
        %s204 = smul.u32 8, %s20
        %p205 = scmp.lt.s32.totalorder %s19, 1
        %s206 = scalar_select %p205, %s19, 1
        %p207 = scmp.lt.s32.totalorder %s204, 7
        %s208 = scalar_select %p207, %s204, 7
        %s209 = smul.addr %s208, 6
        %s210 = smul.addr %s206, 48
        %s211 = sadd.s32 %s209, %s210
        %s212 = smul.addr %s211, 4
        %s213 = scalar_lea.vmem %s0, %s212
        %s214 = smul.u32 8, %s20
      $region24: #{encoder_forward.3} parent=19 // pred_fallthru
        _
      // Predicated region
      $region25: #{encoder_forward.3} parent=19 // pred_check
        %p215 = pneg %p72
      $region26: #{encoder_forward.3} parent=19 // pred_check_branch
        %217 = sbr.rel (%p215) target = $region28
      $region27: #{encoder_forward.3} parent=19 // pred_region
        %p218 = scmp.lt.s32.totalorder %s19, 1
        %s219 = scalar_select %p218, %s19, 1
        %s220 = smul.addr %s219, 48
        %s221 = smul.addr %s220, 4
        %s222 = scalar_lea.vmem %s1, %s221
      $region28: #{encoder_forward.3} parent=19 // pred_fallthru
        _
      // Predicated region
      $region29: #{encoder_forward.3} parent=19 // pred_check
        %p223 = pneg %p98
      $region30: #{encoder_forward.3} parent=19 // pred_check_branch
        %225 = sbr.rel (%p223) target = $region32
      $region31: #{encoder_forward.3} parent=19 // pred_region
        %p226 = scmp.lt.s32.totalorder %s19, 1
        %s227 = scalar_select %p226, %s19, 1
        %s228 = scalar_lea.vmem %s2, %s227
      $region32: #{encoder_forward.3} parent=19 // pred_fallthru
        _
    $region20: #{encoder_forward.3} parent=5 // pred_fallthru
      _
    %p229 = scmp.le.s32.totalorder 1, %s12
    %p230 = scmp.lt.s32.totalorder %s12, 3
    %p231 = pnand %p229, %p230
    %p232 = pneg %p231
    // Predicated region
    $region33: #{encoder_forward.3} parent=5 // pred_check
      _
    $region34: #{encoder_forward.3} parent=5 // pred_check_branch
      %234 = sbr.rel (%p231) target = $region36
    $region35: #{encoder_forward.3} parent=5 // pred_region
      %s235 = ssub.s32 %s12, 1
      %s236 = smul.u32 8, %s22
      %p237 = scmp.lt.s32.totalorder %s21, 1
      %s238 = scalar_select %p237, %s21, 1
      %p239 = scmp.lt.s32.totalorder %s236, 7
      %s240 = scalar_select %p239, %s236, 7
      %s241 = smul.addr %s240, 6
      %s242 = smul.addr %s238, 48
      %s243 = sadd.s32 %s241, %s242
      %s244 = smul.addr %s243, 4
      %s245 = scalar_lea.vmem %s0, %s244
      %p246 = pneg %p52
      %p247 = pneg %p49
      %p248 = scmp.lt.s32.totalorder %s21, 1
      %s249 = scalar_select %p248, %s21, 1
      %s250 = smul.addr %s249, 48
      %s251 = smul.addr %s250, 4
      %s252 = scalar_lea.vmem %s1, %s251
      %p253 = pneg %p78
      %p254 = pneg %p75
      %p255 = scmp.lt.s32.totalorder %s21, 1
      %s256 = scalar_select %p255, %s21, 1
      %s257 = scalar_lea.vmem %s2, %s256
      %p258 = pneg %p104
      %p259 = pneg %p101
      %p260 = pneg %p125
      %p261 = pneg %p122
      %p262 = pneg %p153
      %p263 = pneg %p150
      %s264 = smul.u32 8, %s22
      %p265 = scmp.lt.s32.totalorder %s21, 1
      %s266 = scalar_select %p265, %s21, 1
      %p267 = scmp.lt.s32.totalorder %s264, 7
      %s268 = scalar_select %p267, %s264, 7
      %s269 = smul.addr %s268, 2
      %s270 = smul.addr %s266, 16
      %s271 = sadd.s32 %s269, %s270
      %s272 = smul.addr %s271, 8
      %s273 = scalar_lea.vmem %s4, %s272
      %p274 = pneg %p179
      %p275 = pneg %p176
      %p276 = scmp.lt.s32.totalorder %s21, 1
      %s277 = scalar_select %p276, %s21, 1
      %s278 = smul.addr %s277, 2
      %s279 = smul.addr %s278, 8
      %s280 = scalar_lea.vmem %s5, %s279
      %s281 = smul.u32 8, %s22
      %p282 = scmp.lt.s32.totalorder %s21, 1
      %s283 = scalar_select %p282, %s21, 1
      %p284 = scmp.lt.s32.totalorder %s281, 7
      %s285 = scalar_select %p284, %s281, 7
      %s286 = smul.addr %s285, 6
      %s287 = smul.addr %s283, 48
      %s288 = sadd.s32 %s286, %s287
      %s289 = smul.addr %s288, 4
      %s290 = scalar_lea.vmem %s0, %s289
      %s291 = smul.u32 8, %s22
      %p292 = scmp.lt.s32.totalorder %s21, 1
      %s293 = scalar_select %p292, %s21, 1
      %s294 = smul.addr %s293, 48
      %s295 = smul.addr %s294, 4
      %s296 = scalar_lea.vmem %s1, %s295
      %p297 = scmp.lt.s32.totalorder %s21, 1
      %s298 = scalar_select %p297, %s21, 1
      %s299 = scalar_lea.vmem %s2, %s298
      %s300 = smul.u32 8, %s22
      %p301 = scmp.lt.s32.totalorder %s21, 1
      %s302 = scalar_select %p301, %s21, 1
      %p303 = scmp.lt.s32.totalorder %s300, 7
      %s304 = scalar_select %p303, %s300, 7
      %s305 = smul.addr %s304, 2
      %s306 = smul.addr %s302, 16
      %s307 = sadd.s32 %s305, %s306
      %s308 = smul.addr %s307, 8
      %s309 = scalar_lea.vmem %s4, %s308
      %s310 = smul.u32 8, %s22
      %p311 = scmp.lt.s32.totalorder %s21, 1
      %s312 = scalar_select %p311, %s21, 1
      %s313 = smul.addr %s312, 2
      %s314 = smul.addr %s313, 8
      %s315 = scalar_lea.vmem %s5, %s314
      %p316 = scmp.eq.s32.totalorder %s22, 0
      // Predicated region
      $region37: #{encoder_forward.3} parent=35 // pred_check
        %p317 = pneg %p316
      $region38: #{encoder_forward.3} parent=35 // pred_check_branch
        %319 = sbr.rel (%p317) target = $region40
      $region39: #{encoder_forward.3} parent=35 // pred_region
        %320 = vst [vmem:[#allocation2] sm:$0xff] 0.0
        %321 = vst [vmem:[#allocation2 + $0x8] sm:$0xff] 0.0
      $region40: #{encoder_forward.3} parent=35 // pred_fallthru
        _
      %v322 = vld [vmem:[%s296] sm:$0xff]
      %v323 = vld [vmem:[%s296 + $0x8] sm:$0xf]
      %v324 = vld [vmem:[%s296 + $0xc] sm:$0xff]
      %v325 = vld [vmem:[%s296 + $0x14] sm:$0xf]
      %v326 = vld [vmem:[%s296 + $0x18] sm:$0xff]
      %v327 = vld [vmem:[%s296 + $0x20] sm:$0xf]
      %v328 = vld [vmem:[%s296 + $0x24] sm:$0xff]
      %v329 = vld [vmem:[%s296 + $0x2c] sm:$0xf]
      %v330 = vld [vmem:[%s296 + $0x30] sm:$0xff]
      %v331 = vld [vmem:[%s296 + $0x38] sm:$0xf]
      %v332 = vld [vmem:[%s296 + $0x3c] sm:$0xff]
      %v333 = vld [vmem:[%s296 + $0x44] sm:$0xf]
      %v334 = vld [vmem:[%s296 + $0x48] sm:$0xff]
      %v335 = vld [vmem:[%s296 + $0x50] sm:$0xf]
      %v336 = vld [vmem:[%s296 + $0x54] sm:$0xff]
      %v337 = vld [vmem:[%s296 + $0x5c] sm:$0xf]
      %v338 = vld [vmem:[%s296 + $0x60] sm:$0xff]
      %v339 = vld [vmem:[%s296 + $0x68] sm:$0xf]
      %v340 = vld [vmem:[%s296 + $0x6c] sm:$0xff]
      %v341 = vld [vmem:[%s296 + $0x74] sm:$0xf]
      %v342 = vld [vmem:[%s296 + $0x78] sm:$0xff]
      %v343 = vld [vmem:[%s296 + $0x80] sm:$0xf]
      %v344 = vld [vmem:[%s296 + $0x84] sm:$0xff]
      %v345 = vld [vmem:[%s296 + $0x8c] sm:$0xf]
      %v346 = vld [vmem:[%s296 + $0x90] sm:$0xff]
      %v347 = vld [vmem:[%s296 + $0x98] sm:$0xf]
      %v348 = vld [vmem:[%s296 + $0x9c] sm:$0xff]
      %v349 = vld [vmem:[%s296 + $0xa4] sm:$0xf]
      %v350 = vld [vmem:[%s296 + $0xa8] sm:$0xff]
      %v351 = vld [vmem:[%s296 + $0xb0] sm:$0xf]
      %v352 = vld [vmem:[%s296 + $0xb4] sm:$0xff]
      %v353 = vld [vmem:[%s296 + $0xbc] sm:$0xf]
      %v354 = vld [vmem:[%s299] sm:$0x1]
      %v355 = vld [vmem:[%s3] sm:$0xff]
      %v356 = vld [vmem:[%s3 + $0x8] sm:$0xff]
      %s357 = smul.u32 %s22, 8
      %v358 = vld [vmem:[#allocation2] sm:$0xff]
      %v359 = vld [vmem:[#allocation2 + $0x8] sm:$0xff]
      %v360 = vld [vmem:[%s290] sm:$0xff]
      %v361 = vld [vmem:[%s290 + $0x8] sm:$0xf]
      %v362 = vld [vmem:[%s290 + $0xc] sm:$0xff]
      %v363 = vld [vmem:[%s290 + $0x14] sm:$0xf]
      %v364 = vunpack.c.l.bf16 %v360
      %v365 = vunpack.c.h.bf16 %v360
      %v366 = vunpack.c.l.bf16 %v361
      %v367 = vunpack.c.l.bf16 %v362
      %v368 = vunpack.c.h.bf16 %v362
      %v369 = vunpack.c.l.bf16 %v363
      %v370 = vpack.c.bf16 %v359, %v358
      %v403 = vunpack.c.l.b16 %v322
      %v404 = vunpack.c.h.b16 %v322
      %v405 = vunpack.c.l.b16 %v323
      %v406 = vunpack.c.l.b16 %v324
      %v407 = vunpack.c.h.b16 %v324
      %v408 = vunpack.c.l.b16 %v325
      %v409 = vunpack.c.l.b16 %v326
      %v410 = vunpack.c.h.b16 %v326
      %v411 = vunpack.c.l.b16 %v327
      %v412 = vunpack.c.l.b16 %v328
      %v413 = vunpack.c.h.b16 %v328
      %v414 = vunpack.c.l.b16 %v329
      %v415 = vunpack.c.l.b16 %v330
      %v416 = vunpack.c.h.b16 %v330
      %v417 = vunpack.c.l.b16 %v331
      %v418 = vunpack.c.l.b16 %v332
      %v419 = vunpack.c.h.b16 %v332
      %v420 = vunpack.c.l.b16 %v333
      %v421 = vunpack.c.l.b16 %v334
      %v422 = vunpack.c.h.b16 %v334
      %v423 = vunpack.c.l.b16 %v335
      %v424 = vunpack.c.l.b16 %v336
      %v425 = vunpack.c.h.b16 %v336
      %v426 = vunpack.c.l.b16 %v337
      %v427 = vunpack.c.l.b16 %v338
      %v428 = vunpack.c.h.b16 %v338
      %v429 = vunpack.c.l.b16 %v339
      %v430 = vunpack.c.l.b16 %v340
      %v431 = vunpack.c.h.b16 %v340
      %v432 = vunpack.c.l.b16 %v341
      %v433 = vunpack.c.l.b16 %v342
      %v434 = vunpack.c.h.b16 %v342
      %v435 = vunpack.c.l.b16 %v343
      %v436 = vunpack.c.l.b16 %v344
      %v437 = vunpack.c.h.b16 %v344
      %v438 = vunpack.c.l.b16 %v345
      %v439 = vunpack.c.l.b16 %v346
      %v440 = vunpack.c.h.b16 %v346
      %v441 = vunpack.c.l.b16 %v347
      %v442 = vunpack.c.l.b16 %v348
      %v443 = vunpack.c.h.b16 %v348
      %v444 = vunpack.c.l.b16 %v349
      %v445 = vunpack.c.l.b16 %v350
      %v446 = vunpack.c.h.b16 %v350
      %v447 = vunpack.c.l.b16 %v351
      %v448 = vunpack.c.l.b16 %v352
      %v449 = vunpack.c.h.b16 %v352
      %v450 = vunpack.c.l.b16 %v353
      %v451 = vpack.c.b16 %v406, %v403
      %v452 = vpack.c.b16 %v407, %v404
      %v453 = vpack.c.b16 %v408, %v405
      %v454 = vpack.c.b16 %v412, %v409
      %v455 = vpack.c.b16 %v413, %v410
      %v456 = vpack.c.b16 %v414, %v411
      %v457 = vpack.c.b16 %v418, %v415
      %v458 = vpack.c.b16 %v419, %v416
      %v459 = vpack.c.b16 %v420, %v417
      %v460 = vpack.c.b16 %v424, %v421
      %v461 = vpack.c.b16 %v425, %v422
      %v462 = vpack.c.b16 %v426, %v423
      %v463 = vpack.c.b16 %v430, %v427
      %v464 = vpack.c.b16 %v431, %v428
      %v465 = vpack.c.b16 %v432, %v429
      %v466 = vpack.c.b16 %v436, %v433
      %v467 = vpack.c.b16 %v437, %v434
      %v468 = vpack.c.b16 %v438, %v435
      %v469 = vpack.c.b16 %v442, %v439
      %v470 = vpack.c.b16 %v443, %v440
      %v471 = vpack.c.b16 %v444, %v441
      %v472 = vpack.c.b16 %v448, %v445
      %v473 = vpack.c.b16 %v449, %v446
      %v474 = vpack.c.b16 %v450, %v447
      %499 = vmatpush.bf16.msra.mxu0 %v472
      %500 = vmatpush.bf16.msra.mxu0 %v469
      %501 = vmatpush.bf16.msra.mxu0 %v466
      %502 = vmatpush.bf16.msra.mxu0 %v463
      %503 = vmatpush.bf16.msra.mxu0 %v460
      %504 = vmatpush.bf16.msra.mxu0 %v457
      %505 = vmatpush.bf16.msra.mxu0 %v454
      %506 = vmatpush.bf16.msra.mxu0 %v451
      %507 = vmatmul.bf16.gmra.mxu0 %v370
      %v508 = vpop.f32.mrf.mxu0
      %v509 = vadd.f32 0.0, %v508
      %v510 = vpop.f32.mrf.mxu0
      %v511 = vadd.f32 0.0, %v510
      %512 = vdwg.mxu0
      %513 = vmatpush.bf16.msra.mxu0 %v473
      %514 = vmatpush.bf16.msra.mxu0 %v470
      %515 = vmatpush.bf16.msra.mxu0 %v467
      %516 = vmatpush.bf16.msra.mxu0 %v464
      %517 = vmatpush.bf16.msra.mxu0 %v461
      %518 = vmatpush.bf16.msra.mxu0 %v458
      %519 = vmatpush.bf16.msra.mxu0 %v455
      %520 = vmatpush.bf16.msra.mxu0 %v452
      %521 = vmatmul.bf16.gmra.mxu0 %v370
      %v522 = vpop.f32.mrf.mxu0
      %v523 = vadd.f32 0.0, %v522
      %v524 = vpop.f32.mrf.mxu0
      %v525 = vadd.f32 0.0, %v524
      %526 = vdwg.mxu0
      %527 = vmatpush.bf16.msra.mxu0 %v474
      %528 = vmatpush.bf16.msra.mxu0 %v471
      %529 = vmatpush.bf16.msra.mxu0 %v468
      %530 = vmatpush.bf16.msra.mxu0 %v465
      %531 = vmatpush.bf16.msra.mxu0 %v462
      %532 = vmatpush.bf16.msra.mxu0 %v459
      %533 = vmatpush.bf16.msra.mxu0 %v456
      %534 = vmatpush.bf16.msra.mxu0 %v453
      %535 = vmatmul.bf16.gmra.mxu0 %v370
      %v536 = vpop.f32.mrf.mxu0
      %v537 = vadd.f32 0.0, %v536
      %v538 = vpop.f32.mrf.mxu0
      %v539 = vadd.f32 0.0, %v538
      %540 = vdwg.mxu0
      %v541 = vadd.f32 %v364, %v509
      %v542 = vadd.f32 %v367, %v511
      %v543 = vxor.u32 %v541, 2147483648
      %v544 = vxor.u32 %v542, 2147483648
      %v545 = vmul.f32 %v543, 1.442695
      %v546 = vpow.pop %v545
      %v547 = vmul.f32 %v544, 1.442695
      %v548 = vpow.pop %v547
      %v549 = vadd.f32 %v546, 1.0
      %v550 = vadd.f32 %v548, 1.0
      %v551 = vrcp.pop %v549
      %v552 = vmul.f32 %v549, %v551
      %v553 = vsub.f32 1.0, %v552
      %v554 = vmul.f32 %v551, %v553
      %v555 = vadd.f32 %v551, %v554
      %vm556 = vweird.f32 %v549
      %vm557 = vweird.f32 %v551
      %vm558 = vmor %vm556, %vm557
      %v559 = vsel %vm558, %v551, %v555
      %v560 = vand.u32 2147483647, %v549
      %vm561 = vcmp.eq.f32.partialorder %v560, 8.507059e+37
      %v562 = vand.u32 %v549, 2147483648
      %v563 = vor.u32 1.1754944e-38, %v562
      %v564 = vsel %vm561, %v563, %v559
      %v565 = vmul.f32 1.0, %v564
      %v566 = vrcp.pop %v550
      %v567 = vmul.f32 %v550, %v566
      %v568 = vsub.f32 1.0, %v567
      %v569 = vmul.f32 %v566, %v568
      %v570 = vadd.f32 %v566, %v569
      %vm571 = vweird.f32 %v550
      %vm572 = vweird.f32 %v566
      %vm573 = vmor %vm571, %vm572
      %v574 = vsel %vm573, %v566, %v570
      %v575 = vand.u32 2147483647, %v550
      %vm576 = vcmp.eq.f32.partialorder %v575, 8.507059e+37
      %v577 = vand.u32 %v550, 2147483648
      %v578 = vor.u32 1.1754944e-38, %v577
      %v579 = vsel %vm576, %v578, %v574
      %v580 = vmul.f32 1.0, %v579
      %v581 = vadd.f32 %v365, %v523
      %v582 = vadd.f32 %v368, %v525
      %v583 = vxor.u32 %v581, 2147483648
      %v584 = vxor.u32 %v582, 2147483648
      %v585 = vmul.f32 %v583, 1.442695
      %v586 = vpow.pop %v585
      %v587 = vmul.f32 %v584, 1.442695
      %v588 = vpow.pop %v587
      %v589 = vadd.f32 %v586, 1.0
      %v590 = vadd.f32 %v588, 1.0
      %v591 = vrcp.pop %v589
      %v592 = vmul.f32 %v589, %v591
      %v593 = vsub.f32 1.0, %v592
      %v594 = vmul.f32 %v591, %v593
      %v595 = vadd.f32 %v591, %v594
      %vm596 = vweird.f32 %v589
      %vm597 = vweird.f32 %v591
      %vm598 = vmor %vm596, %vm597
      %v599 = vsel %vm598, %v591, %v595
      %v600 = vand.u32 2147483647, %v589
      %vm601 = vcmp.eq.f32.partialorder %v600, 8.507059e+37
      %v602 = vand.u32 %v589, 2147483648
      %v603 = vor.u32 1.1754944e-38, %v602
      %v604 = vsel %vm601, %v603, %v599
      %v605 = vmul.f32 1.0, %v604
      %v606 = vrcp.pop %v590
      %v607 = vmul.f32 %v590, %v606
      %v608 = vsub.f32 1.0, %v607
      %v609 = vmul.f32 %v606, %v608
      %v610 = vadd.f32 %v606, %v609
      %vm611 = vweird.f32 %v590
      %vm612 = vweird.f32 %v606
      %vm613 = vmor %vm611, %vm612
      %v614 = vsel %vm613, %v606, %v610
      %v615 = vand.u32 2147483647, %v590
      %vm616 = vcmp.eq.f32.partialorder %v615, 8.507059e+37
      %v617 = vand.u32 %v590, 2147483648
      %v618 = vor.u32 1.1754944e-38, %v617
      %v619 = vsel %vm616, %v618, %v614
      %v620 = vmul.f32 1.0, %v619
      %v622 = vperm.slane %v354, 0
      %v624 = vadd.f32 %v537, %v622
      %v625 = vadd.f32 %v539, %v622
      %v626 = vmul.f32 %v565, %v624
      %v627 = vmul.f32 %v580, %v625
      %v628 = vadd.f32 %v366, %v626
      %v629 = vadd.f32 %v369, %v627
      %v630 = vtanh.pop %v628
      %v631 = vtanh.pop %v629
      %v632 = vsub.f32 1.0, %v605
      %v633 = vsub.f32 1.0, %v620
      %v634 = vmul.f32 %v632, %v630
      %v635 = vmul.f32 %v633, %v631
      %v636 = vmul.f32 %v605, %v358
      %v637 = vmul.f32 %v620, %v359
      %v638 = vadd.f32 %v634, %v636
      %v639 = vadd.f32 %v635, %v637
      %v640 = vstv %s357
      %vm641 = vcmp.gt.s32.totalorder %v355, %v640
      %vm642 = vcmp.gt.s32.totalorder %v356, %v640
      %v643 = vsel %vm641, %v638, 0.0
      %v644 = vsel %vm642, %v639, 0.0
      %645 = vst [vmem:[%s309] sm:$0xff] %v643
      %646 = vst [vmem:[%s309 + $0x8] sm:$0xff] %v644
      %v647 = vsel %vm641, %v638, %v358
      %v648 = vsel %vm642, %v639, %v359
      %s649 = scalar_lea.vmem %s290, 24
      %v650 = vld [vmem:[%s649] sm:$0xff]
      %v651 = vld [vmem:[%s649 + $0x8] sm:$0xf]
      %v652 = vld [vmem:[%s649 + $0xc] sm:$0xff]
      %v653 = vld [vmem:[%s649 + $0x14] sm:$0xf]
      %v654 = vunpack.c.l.bf16 %v650
      %v655 = vunpack.c.h.bf16 %v650
      %v656 = vunpack.c.l.bf16 %v651
      %v657 = vunpack.c.l.bf16 %v652
      %v658 = vunpack.c.h.bf16 %v652
      %v659 = vunpack.c.l.bf16 %v653
      %v660 = vpack.c.bf16 %v648, %v647
      %661 = vmatpush.bf16.msra.mxu0 %v472
      %662 = vmatpush.bf16.msra.mxu0 %v469
      %663 = vmatpush.bf16.msra.mxu0 %v466
      %664 = vmatpush.bf16.msra.mxu0 %v463
      %665 = vmatpush.bf16.msra.mxu0 %v460
      %666 = vmatpush.bf16.msra.mxu0 %v457
      %667 = vmatpush.bf16.msra.mxu0 %v454
      %668 = vmatpush.bf16.msra.mxu0 %v451
      %669 = vmatmul.bf16.gmra.mxu0 %v660
      %v670 = vpop.f32.mrf.mxu0
      %v671 = vadd.f32 0.0, %v670
      %v672 = vpop.f32.mrf.mxu0
      %v673 = vadd.f32 0.0, %v672
      %674 = vdwg.mxu0
      %675 = vmatpush.bf16.msra.mxu0 %v473
      %676 = vmatpush.bf16.msra.mxu0 %v470
      %677 = vmatpush.bf16.msra.mxu0 %v467
      %678 = vmatpush.bf16.msra.mxu0 %v464
      %679 = vmatpush.bf16.msra.mxu0 %v461
      %680 = vmatpush.bf16.msra.mxu0 %v458
      %681 = vmatpush.bf16.msra.mxu0 %v455
      %682 = vmatpush.bf16.msra.mxu0 %v452
      %683 = vmatmul.bf16.gmra.mxu0 %v660
      %v684 = vpop.f32.mrf.mxu0
      %v685 = vadd.f32 0.0, %v684
      %v686 = vpop.f32.mrf.mxu0
      %v687 = vadd.f32 0.0, %v686
      %688 = vdwg.mxu0
      %689 = vmatpush.bf16.msra.mxu0 %v474
      %690 = vmatpush.bf16.msra.mxu0 %v471
      %691 = vmatpush.bf16.msra.mxu0 %v468
      %692 = vmatpush.bf16.msra.mxu0 %v465
      %693 = vmatpush.bf16.msra.mxu0 %v462
      %694 = vmatpush.bf16.msra.mxu0 %v459
      %695 = vmatpush.bf16.msra.mxu0 %v456
      %696 = vmatpush.bf16.msra.mxu0 %v453
      %697 = vmatmul.bf16.gmra.mxu0 %v660
      %v698 = vpop.f32.mrf.mxu0
      %v699 = vadd.f32 0.0, %v698
      %v700 = vpop.f32.mrf.mxu0
      %v701 = vadd.f32 0.0, %v700
      %702 = vdwg.mxu0
      %v703 = vadd.f32 %v654, %v671
      %v704 = vadd.f32 %v657, %v673
      %v705 = vxor.u32 %v703, 2147483648
      %v706 = vxor.u32 %v704, 2147483648
      %v707 = vmul.f32 %v705, 1.442695
      %v708 = vpow.pop %v707
      %v709 = vmul.f32 %v706, 1.442695
      %v710 = vpow.pop %v709
      %v711 = vadd.f32 %v708, 1.0
      %v712 = vadd.f32 %v710, 1.0
      %v713 = vrcp.pop %v711
      %v714 = vmul.f32 %v711, %v713
      %v715 = vsub.f32 1.0, %v714
      %v716 = vmul.f32 %v713, %v715
      %v717 = vadd.f32 %v713, %v716
      %vm718 = vweird.f32 %v711
      %vm719 = vweird.f32 %v713
      %vm720 = vmor %vm718, %vm719
      %v721 = vsel %vm720, %v713, %v717
      %v722 = vand.u32 2147483647, %v711
      %vm723 = vcmp.eq.f32.partialorder %v722, 8.507059e+37
      %v724 = vand.u32 %v711, 2147483648
      %v725 = vor.u32 1.1754944e-38, %v724
      %v726 = vsel %vm723, %v725, %v721
      %v727 = vmul.f32 1.0, %v726
      %v728 = vrcp.pop %v712
      %v729 = vmul.f32 %v712, %v728
      %v730 = vsub.f32 1.0, %v729
      %v731 = vmul.f32 %v728, %v730
      %v732 = vadd.f32 %v728, %v731
      %vm733 = vweird.f32 %v712
      %vm734 = vweird.f32 %v728
      %vm735 = vmor %vm733, %vm734
      %v736 = vsel %vm735, %v728, %v732
      %v737 = vand.u32 2147483647, %v712
      %vm738 = vcmp.eq.f32.partialorder %v737, 8.507059e+37
      %v739 = vand.u32 %v712, 2147483648
      %v740 = vor.u32 1.1754944e-38, %v739
      %v741 = vsel %vm738, %v740, %v736
      %v742 = vmul.f32 1.0, %v741
      %v743 = vadd.f32 %v655, %v685
      %v744 = vadd.f32 %v658, %v687
      %v745 = vxor.u32 %v743, 2147483648
      %v746 = vxor.u32 %v744, 2147483648
      %v747 = vmul.f32 %v745, 1.442695
      %v748 = vpow.pop %v747
      %v749 = vmul.f32 %v746, 1.442695
      %v750 = vpow.pop %v749
      %v751 = vadd.f32 %v748, 1.0
      %v752 = vadd.f32 %v750, 1.0
      %v753 = vrcp.pop %v751
      %v754 = vmul.f32 %v751, %v753
      %v755 = vsub.f32 1.0, %v754
      %v756 = vmul.f32 %v753, %v755
      %v757 = vadd.f32 %v753, %v756
      %vm758 = vweird.f32 %v751
      %vm759 = vweird.f32 %v753
      %vm760 = vmor %vm758, %vm759
      %v761 = vsel %vm760, %v753, %v757
      %v762 = vand.u32 2147483647, %v751
      %vm763 = vcmp.eq.f32.partialorder %v762, 8.507059e+37
      %v764 = vand.u32 %v751, 2147483648
      %v765 = vor.u32 1.1754944e-38, %v764
      %v766 = vsel %vm763, %v765, %v761
      %v767 = vmul.f32 1.0, %v766
      %v768 = vrcp.pop %v752
      %v769 = vmul.f32 %v752, %v768
      %v770 = vsub.f32 1.0, %v769
      %v771 = vmul.f32 %v768, %v770
      %v772 = vadd.f32 %v768, %v771
      %vm773 = vweird.f32 %v752
      %vm774 = vweird.f32 %v768
      %vm775 = vmor %vm773, %vm774
      %v776 = vsel %vm775, %v768, %v772
      %v777 = vand.u32 2147483647, %v752
      %vm778 = vcmp.eq.f32.partialorder %v777, 8.507059e+37
      %v779 = vand.u32 %v752, 2147483648
      %v780 = vor.u32 1.1754944e-38, %v779
      %v781 = vsel %vm778, %v780, %v776
      %v782 = vmul.f32 1.0, %v781
      %v783 = vadd.f32 %v699, %v622
      %v784 = vadd.f32 %v701, %v622
      %v785 = vmul.f32 %v727, %v783
      %v786 = vmul.f32 %v742, %v784
      %v787 = vadd.f32 %v656, %v785
      %v788 = vadd.f32 %v659, %v786
      %v789 = vtanh.pop %v787
      %v790 = vtanh.pop %v788
      %v791 = vsub.f32 1.0, %v767
      %v792 = vsub.f32 1.0, %v782
      %v793 = vmul.f32 %v791, %v789
      %v794 = vmul.f32 %v792, %v790
      %v795 = vmul.f32 %v767, %v647
      %v796 = vmul.f32 %v782, %v648
      %v797 = vadd.f32 %v793, %v795
      %v798 = vadd.f32 %v794, %v796
      %s799 = sadd.s32 %s357, 1
      %v800 = vstv %s799
      %vm801 = vcmp.gt.s32.totalorder %v355, %v800
      %vm802 = vcmp.gt.s32.totalorder %v356, %v800
      %v803 = vsel %vm801, %v797, 0.0
      %v804 = vsel %vm802, %v798, 0.0
      %s805 = scalar_lea.vmem %s309, 16
      %806 = vst [vmem:[%s805] sm:$0xff] %v803
      %807 = vst [vmem:[%s805 + $0x8] sm:$0xff] %v804
      %v808 = vsel %vm801, %v797, %v647
      %v809 = vsel %vm802, %v798, %v648
      %s810 = scalar_lea.vmem %s290, 48
      %v811 = vld [vmem:[%s810] sm:$0xff]
      %v812 = vld [vmem:[%s810 + $0x8] sm:$0xf]
      %v813 = vld [vmem:[%s810 + $0xc] sm:$0xff]
      %v814 = vld [vmem:[%s810 + $0x14] sm:$0xf]
      %v815 = vunpack.c.l.bf16 %v811
      %v816 = vunpack.c.h.bf16 %v811
      %v817 = vunpack.c.l.bf16 %v812
      %v818 = vunpack.c.l.bf16 %v813
      %v819 = vunpack.c.h.bf16 %v813
      %v820 = vunpack.c.l.bf16 %v814
      %v821 = vpack.c.bf16 %v809, %v808
      %822 = vmatpush.bf16.msra.mxu0 %v472
      %823 = vmatpush.bf16.msra.mxu0 %v469
      %824 = vmatpush.bf16.msra.mxu0 %v466
      %825 = vmatpush.bf16.msra.mxu0 %v463
      %826 = vmatpush.bf16.msra.mxu0 %v460
      %827 = vmatpush.bf16.msra.mxu0 %v457
      %828 = vmatpush.bf16.msra.mxu0 %v454
      %829 = vmatpush.bf16.msra.mxu0 %v451
      %830 = vmatmul.bf16.gmra.mxu0 %v821
      %v831 = vpop.f32.mrf.mxu0
      %v832 = vadd.f32 0.0, %v831
      %v833 = vpop.f32.mrf.mxu0
      %v834 = vadd.f32 0.0, %v833
      %835 = vdwg.mxu0
      %836 = vmatpush.bf16.msra.mxu0 %v473
      %837 = vmatpush.bf16.msra.mxu0 %v470
      %838 = vmatpush.bf16.msra.mxu0 %v467
      %839 = vmatpush.bf16.msra.mxu0 %v464
      %840 = vmatpush.bf16.msra.mxu0 %v461
      %841 = vmatpush.bf16.msra.mxu0 %v458
      %842 = vmatpush.bf16.msra.mxu0 %v455
      %843 = vmatpush.bf16.msra.mxu0 %v452
      %844 = vmatmul.bf16.gmra.mxu0 %v821
      %v845 = vpop.f32.mrf.mxu0
      %v846 = vadd.f32 0.0, %v845
      %v847 = vpop.f32.mrf.mxu0
      %v848 = vadd.f32 0.0, %v847
      %849 = vdwg.mxu0
      %850 = vmatpush.bf16.msra.mxu0 %v474
      %851 = vmatpush.bf16.msra.mxu0 %v471
      %852 = vmatpush.bf16.msra.mxu0 %v468
      %853 = vmatpush.bf16.msra.mxu0 %v465
      %854 = vmatpush.bf16.msra.mxu0 %v462
      %855 = vmatpush.bf16.msra.mxu0 %v459
      %856 = vmatpush.bf16.msra.mxu0 %v456
      %857 = vmatpush.bf16.msra.mxu0 %v453
      %858 = vmatmul.bf16.gmra.mxu0 %v821
      %v859 = vpop.f32.mrf.mxu0
      %v860 = vadd.f32 0.0, %v859
      %v861 = vpop.f32.mrf.mxu0
      %v862 = vadd.f32 0.0, %v861
      %863 = vdwg.mxu0
      %v864 = vadd.f32 %v815, %v832
      %v865 = vadd.f32 %v818, %v834
      %v866 = vxor.u32 %v864, 2147483648
      %v867 = vxor.u32 %v865, 2147483648
      %v868 = vmul.f32 %v866, 1.442695
      %v869 = vpow.pop %v868
      %v870 = vmul.f32 %v867, 1.442695
      %v871 = vpow.pop %v870
      %v872 = vadd.f32 %v869, 1.0
      %v873 = vadd.f32 %v871, 1.0
      %v874 = vrcp.pop %v872
      %v875 = vmul.f32 %v872, %v874
      %v876 = vsub.f32 1.0, %v875
      %v877 = vmul.f32 %v874, %v876
      %v878 = vadd.f32 %v874, %v877
      %vm879 = vweird.f32 %v872
      %vm880 = vweird.f32 %v874
      %vm881 = vmor %vm879, %vm880
      %v882 = vsel %vm881, %v874, %v878
      %v883 = vand.u32 2147483647, %v872
      %vm884 = vcmp.eq.f32.partialorder %v883, 8.507059e+37
      %v885 = vand.u32 %v872, 2147483648
      %v886 = vor.u32 1.1754944e-38, %v885
      %v887 = vsel %vm884, %v886, %v882
      %v888 = vmul.f32 1.0, %v887
      %v889 = vrcp.pop %v873
      %v890 = vmul.f32 %v873, %v889
      %v891 = vsub.f32 1.0, %v890
      %v892 = vmul.f32 %v889, %v891
      %v893 = vadd.f32 %v889, %v892
      %vm894 = vweird.f32 %v873
      %vm895 = vweird.f32 %v889
      %vm896 = vmor %vm894, %vm895
      %v897 = vsel %vm896, %v889, %v893
      %v898 = vand.u32 2147483647, %v873
      %vm899 = vcmp.eq.f32.partialorder %v898, 8.507059e+37
      %v900 = vand.u32 %v873, 2147483648
      %v901 = vor.u32 1.1754944e-38, %v900
      %v902 = vsel %vm899, %v901, %v897
      %v903 = vmul.f32 1.0, %v902
      %v904 = vadd.f32 %v816, %v846
      %v905 = vadd.f32 %v819, %v848
      %v906 = vxor.u32 %v904, 2147483648
      %v907 = vxor.u32 %v905, 2147483648
      %v908 = vmul.f32 %v906, 1.442695
      %v909 = vpow.pop %v908
      %v910 = vmul.f32 %v907, 1.442695
      %v911 = vpow.pop %v910
      %v912 = vadd.f32 %v909, 1.0
      %v913 = vadd.f32 %v911, 1.0
      %v914 = vrcp.pop %v912
      %v915 = vmul.f32 %v912, %v914
      %v916 = vsub.f32 1.0, %v915
      %v917 = vmul.f32 %v914, %v916
      %v918 = vadd.f32 %v914, %v917
      %vm919 = vweird.f32 %v912
      %vm920 = vweird.f32 %v914
      %vm921 = vmor %vm919, %vm920
      %v922 = vsel %vm921, %v914, %v918
      %v923 = vand.u32 2147483647, %v912
      %vm924 = vcmp.eq.f32.partialorder %v923, 8.507059e+37
      %v925 = vand.u32 %v912, 2147483648
      %v926 = vor.u32 1.1754944e-38, %v925
      %v927 = vsel %vm924, %v926, %v922
      %v928 = vmul.f32 1.0, %v927
      %v929 = vrcp.pop %v913
      %v930 = vmul.f32 %v913, %v929
      %v931 = vsub.f32 1.0, %v930
      %v932 = vmul.f32 %v929, %v931
      %v933 = vadd.f32 %v929, %v932
      %vm934 = vweird.f32 %v913
      %vm935 = vweird.f32 %v929
      %vm936 = vmor %vm934, %vm935
      %v937 = vsel %vm936, %v929, %v933
      %v938 = vand.u32 2147483647, %v913
      %vm939 = vcmp.eq.f32.partialorder %v938, 8.507059e+37
      %v940 = vand.u32 %v913, 2147483648
      %v941 = vor.u32 1.1754944e-38, %v940
      %v942 = vsel %vm939, %v941, %v937
      %v943 = vmul.f32 1.0, %v942
      %v944 = vadd.f32 %v860, %v622
      %v945 = vadd.f32 %v862, %v622
      %v946 = vmul.f32 %v888, %v944
      %v947 = vmul.f32 %v903, %v945
      %v948 = vadd.f32 %v817, %v946
      %v949 = vadd.f32 %v820, %v947
      %v950 = vtanh.pop %v948
      %v951 = vtanh.pop %v949
      %v952 = vsub.f32 1.0, %v928
      %v953 = vsub.f32 1.0, %v943
      %v954 = vmul.f32 %v952, %v950
      %v955 = vmul.f32 %v953, %v951
      %v956 = vmul.f32 %v928, %v808
      %v957 = vmul.f32 %v943, %v809
      %v958 = vadd.f32 %v954, %v956
      %v959 = vadd.f32 %v955, %v957
      %s960 = sadd.s32 %s357, 2
      %v961 = vstv %s960
      %vm962 = vcmp.gt.s32.totalorder %v355, %v961
      %vm963 = vcmp.gt.s32.totalorder %v356, %v961
      %v964 = vsel %vm962, %v958, 0.0
      %v965 = vsel %vm963, %v959, 0.0
      %s966 = scalar_lea.vmem %s309, 32
      %967 = vst [vmem:[%s966] sm:$0xff] %v964
      %968 = vst [vmem:[%s966 + $0x8] sm:$0xff] %v965
      %v969 = vsel %vm962, %v958, %v808
      %v970 = vsel %vm963, %v959, %v809
      %s971 = scalar_lea.vmem %s290, 72
      %v972 = vld [vmem:[%s971] sm:$0xff]
      %v973 = vld [vmem:[%s971 + $0x8] sm:$0xf]
      %v974 = vld [vmem:[%s971 + $0xc] sm:$0xff]
      %v975 = vld [vmem:[%s971 + $0x14] sm:$0xf]
      %v976 = vunpack.c.l.bf16 %v972
      %v977 = vunpack.c.h.bf16 %v972
      %v978 = vunpack.c.l.bf16 %v973
      %v979 = vunpack.c.l.bf16 %v974
      %v980 = vunpack.c.h.bf16 %v974
      %v981 = vunpack.c.l.bf16 %v975
      %v982 = vpack.c.bf16 %v970, %v969
      %983 = vmatpush.bf16.msra.mxu0 %v472
      %984 = vmatpush.bf16.msra.mxu0 %v469
      %985 = vmatpush.bf16.msra.mxu0 %v466
      %986 = vmatpush.bf16.msra.mxu0 %v463
      %987 = vmatpush.bf16.msra.mxu0 %v460
      %988 = vmatpush.bf16.msra.mxu0 %v457
      %989 = vmatpush.bf16.msra.mxu0 %v454
      %990 = vmatpush.bf16.msra.mxu0 %v451
      %991 = vmatmul.bf16.gmra.mxu0 %v982
      %v992 = vpop.f32.mrf.mxu0
      %v993 = vadd.f32 0.0, %v992
      %v994 = vpop.f32.mrf.mxu0
      %v995 = vadd.f32 0.0, %v994
      %996 = vdwg.mxu0
      %997 = vmatpush.bf16.msra.mxu0 %v473
      %998 = vmatpush.bf16.msra.mxu0 %v470
      %999 = vmatpush.bf16.msra.mxu0 %v467
      %1000 = vmatpush.bf16.msra.mxu0 %v464
      %1001 = vmatpush.bf16.msra.mxu0 %v461
      %1002 = vmatpush.bf16.msra.mxu0 %v458
      %1003 = vmatpush.bf16.msra.mxu0 %v455
      %1004 = vmatpush.bf16.msra.mxu0 %v452
      %1005 = vmatmul.bf16.gmra.mxu0 %v982
      %v1006 = vpop.f32.mrf.mxu0
      %v1007 = vadd.f32 0.0, %v1006
      %v1008 = vpop.f32.mrf.mxu0
      %v1009 = vadd.f32 0.0, %v1008
      %1010 = vdwg.mxu0
      %1011 = vmatpush.bf16.msra.mxu0 %v474
      %1012 = vmatpush.bf16.msra.mxu0 %v471
      %1013 = vmatpush.bf16.msra.mxu0 %v468
      %1014 = vmatpush.bf16.msra.mxu0 %v465
      %1015 = vmatpush.bf16.msra.mxu0 %v462
      %1016 = vmatpush.bf16.msra.mxu0 %v459
      %1017 = vmatpush.bf16.msra.mxu0 %v456
      %1018 = vmatpush.bf16.msra.mxu0 %v453
      %1019 = vmatmul.bf16.gmra.mxu0 %v982
      %v1020 = vpop.f32.mrf.mxu0
      %v1021 = vadd.f32 0.0, %v1020
      %v1022 = vpop.f32.mrf.mxu0
      %v1023 = vadd.f32 0.0, %v1022
      %1024 = vdwg.mxu0
      %v1025 = vadd.f32 %v976, %v993
      %v1026 = vadd.f32 %v979, %v995
      %v1027 = vxor.u32 %v1025, 2147483648
      %v1028 = vxor.u32 %v1026, 2147483648
      %v1029 = vmul.f32 %v1027, 1.442695
      %v1030 = vpow.pop %v1029
      %v1031 = vmul.f32 %v1028, 1.442695
      %v1032 = vpow.pop %v1031
      %v1033 = vadd.f32 %v1030, 1.0
      %v1034 = vadd.f32 %v1032, 1.0
      %v1035 = vrcp.pop %v1033
      %v1036 = vmul.f32 %v1033, %v1035
      %v1037 = vsub.f32 1.0, %v1036
      %v1038 = vmul.f32 %v1035, %v1037
      %v1039 = vadd.f32 %v1035, %v1038
      %vm1040 = vweird.f32 %v1033
      %vm1041 = vweird.f32 %v1035
      %vm1042 = vmor %vm1040, %vm1041
      %v1043 = vsel %vm1042, %v1035, %v1039
      %v1044 = vand.u32 2147483647, %v1033
      %vm1045 = vcmp.eq.f32.partialorder %v1044, 8.507059e+37
      %v1046 = vand.u32 %v1033, 2147483648
      %v1047 = vor.u32 1.1754944e-38, %v1046
      %v1048 = vsel %vm1045, %v1047, %v1043
      %v1049 = vmul.f32 1.0, %v1048
      %v1050 = vrcp.pop %v1034
      %v1051 = vmul.f32 %v1034, %v1050
      %v1052 = vsub.f32 1.0, %v1051
      %v1053 = vmul.f32 %v1050, %v1052
      %v1054 = vadd.f32 %v1050, %v1053
      %vm1055 = vweird.f32 %v1034
      %vm1056 = vweird.f32 %v1050
      %vm1057 = vmor %vm1055, %vm1056
      %v1058 = vsel %vm1057, %v1050, %v1054
      %v1059 = vand.u32 2147483647, %v1034
      %vm1060 = vcmp.eq.f32.partialorder %v1059, 8.507059e+37
      %v1061 = vand.u32 %v1034, 2147483648
      %v1062 = vor.u32 1.1754944e-38, %v1061
      %v1063 = vsel %vm1060, %v1062, %v1058
      %v1064 = vmul.f32 1.0, %v1063
      %v1065 = vadd.f32 %v977, %v1007
      %v1066 = vadd.f32 %v980, %v1009
      %v1067 = vxor.u32 %v1065, 2147483648
      %v1068 = vxor.u32 %v1066, 2147483648
      %v1069 = vmul.f32 %v1067, 1.442695
      %v1070 = vpow.pop %v1069
      %v1071 = vmul.f32 %v1068, 1.442695
      %v1072 = vpow.pop %v1071
      %v1073 = vadd.f32 %v1070, 1.0
      %v1074 = vadd.f32 %v1072, 1.0
      %v1075 = vrcp.pop %v1073
      %v1076 = vmul.f32 %v1073, %v1075
      %v1077 = vsub.f32 1.0, %v1076
      %v1078 = vmul.f32 %v1075, %v1077
      %v1079 = vadd.f32 %v1075, %v1078
      %vm1080 = vweird.f32 %v1073
      %vm1081 = vweird.f32 %v1075
      %vm1082 = vmor %vm1080, %vm1081
      %v1083 = vsel %vm1082, %v1075, %v1079
      %v1084 = vand.u32 2147483647, %v1073
      %vm1085 = vcmp.eq.f32.partialorder %v1084, 8.507059e+37
      %v1086 = vand.u32 %v1073, 2147483648
      %v1087 = vor.u32 1.1754944e-38, %v1086
      %v1088 = vsel %vm1085, %v1087, %v1083
      %v1089 = vmul.f32 1.0, %v1088
      %v1090 = vrcp.pop %v1074
      %v1091 = vmul.f32 %v1074, %v1090
      %v1092 = vsub.f32 1.0, %v1091
      %v1093 = vmul.f32 %v1090, %v1092
      %v1094 = vadd.f32 %v1090, %v1093
      %vm1095 = vweird.f32 %v1074
      %vm1096 = vweird.f32 %v1090
      %vm1097 = vmor %vm1095, %vm1096
      %v1098 = vsel %vm1097, %v1090, %v1094
      %v1099 = vand.u32 2147483647, %v1074
      %vm1100 = vcmp.eq.f32.partialorder %v1099, 8.507059e+37
      %v1101 = vand.u32 %v1074, 2147483648
      %v1102 = vor.u32 1.1754944e-38, %v1101
      %v1103 = vsel %vm1100, %v1102, %v1098
      %v1104 = vmul.f32 1.0, %v1103
      %v1105 = vadd.f32 %v1021, %v622
      %v1106 = vadd.f32 %v1023, %v622
      %v1107 = vmul.f32 %v1049, %v1105
      %v1108 = vmul.f32 %v1064, %v1106
      %v1109 = vadd.f32 %v978, %v1107
      %v1110 = vadd.f32 %v981, %v1108
      %v1111 = vtanh.pop %v1109
      %v1112 = vtanh.pop %v1110
      %v1113 = vsub.f32 1.0, %v1089
      %v1114 = vsub.f32 1.0, %v1104
      %v1115 = vmul.f32 %v1113, %v1111
      %v1116 = vmul.f32 %v1114, %v1112
      %v1117 = vmul.f32 %v1089, %v969
      %v1118 = vmul.f32 %v1104, %v970
      %v1119 = vadd.f32 %v1115, %v1117
      %v1120 = vadd.f32 %v1116, %v1118
      %s1121 = sadd.s32 %s357, 3
      %v1122 = vstv %s1121
      %vm1123 = vcmp.gt.s32.totalorder %v355, %v1122
      %vm1124 = vcmp.gt.s32.totalorder %v356, %v1122
      %v1125 = vsel %vm1123, %v1119, 0.0
      %v1126 = vsel %vm1124, %v1120, 0.0
      %s1127 = scalar_lea.vmem %s309, 48
      %1128 = vst [vmem:[%s1127] sm:$0xff] %v1125
      %1129 = vst [vmem:[%s1127 + $0x8] sm:$0xff] %v1126
      %v1130 = vsel %vm1123, %v1119, %v969
      %v1131 = vsel %vm1124, %v1120, %v970
      %s1132 = scalar_lea.vmem %s290, 96
      %v1133 = vld [vmem:[%s1132] sm:$0xff]
      %v1134 = vld [vmem:[%s1132 + $0x8] sm:$0xf]
      %v1135 = vld [vmem:[%s1132 + $0xc] sm:$0xff]
      %v1136 = vld [vmem:[%s1132 + $0x14] sm:$0xf]
      %v1137 = vunpack.c.l.bf16 %v1133
      %v1138 = vunpack.c.h.bf16 %v1133
      %v1139 = vunpack.c.l.bf16 %v1134
      %v1140 = vunpack.c.l.bf16 %v1135
      %v1141 = vunpack.c.h.bf16 %v1135
      %v1142 = vunpack.c.l.bf16 %v1136
      %v1143 = vpack.c.bf16 %v1131, %v1130
      %1144 = vmatpush.bf16.msra.mxu0 %v472
      %1145 = vmatpush.bf16.msra.mxu0 %v469
      %1146 = vmatpush.bf16.msra.mxu0 %v466
      %1147 = vmatpush.bf16.msra.mxu0 %v463
      %1148 = vmatpush.bf16.msra.mxu0 %v460
      %1149 = vmatpush.bf16.msra.mxu0 %v457
      %1150 = vmatpush.bf16.msra.mxu0 %v454
      %1151 = vmatpush.bf16.msra.mxu0 %v451
      %1152 = vmatmul.bf16.gmra.mxu0 %v1143
      %v1153 = vpop.f32.mrf.mxu0
      %v1154 = vadd.f32 0.0, %v1153
      %v1155 = vpop.f32.mrf.mxu0
      %v1156 = vadd.f32 0.0, %v1155
      %1157 = vdwg.mxu0
      %1158 = vmatpush.bf16.msra.mxu0 %v473
      %1159 = vmatpush.bf16.msra.mxu0 %v470
      %1160 = vmatpush.bf16.msra.mxu0 %v467
      %1161 = vmatpush.bf16.msra.mxu0 %v464
      %1162 = vmatpush.bf16.msra.mxu0 %v461
      %1163 = vmatpush.bf16.msra.mxu0 %v458
      %1164 = vmatpush.bf16.msra.mxu0 %v455
      %1165 = vmatpush.bf16.msra.mxu0 %v452
      %1166 = vmatmul.bf16.gmra.mxu0 %v1143
      %v1167 = vpop.f32.mrf.mxu0
      %v1168 = vadd.f32 0.0, %v1167
      %v1169 = vpop.f32.mrf.mxu0
      %v1170 = vadd.f32 0.0, %v1169
      %1171 = vdwg.mxu0
      %1172 = vmatpush.bf16.msra.mxu0 %v474
      %1173 = vmatpush.bf16.msra.mxu0 %v471
      %1174 = vmatpush.bf16.msra.mxu0 %v468
      %1175 = vmatpush.bf16.msra.mxu0 %v465
      %1176 = vmatpush.bf16.msra.mxu0 %v462
      %1177 = vmatpush.bf16.msra.mxu0 %v459
      %1178 = vmatpush.bf16.msra.mxu0 %v456
      %1179 = vmatpush.bf16.msra.mxu0 %v453
      %1180 = vmatmul.bf16.gmra.mxu0 %v1143
      %v1181 = vpop.f32.mrf.mxu0
      %v1182 = vadd.f32 0.0, %v1181
      %v1183 = vpop.f32.mrf.mxu0
      %v1184 = vadd.f32 0.0, %v1183
      %1185 = vdwg.mxu0
      %v1186 = vadd.f32 %v1137, %v1154
      %v1187 = vadd.f32 %v1140, %v1156
      %v1188 = vxor.u32 %v1186, 2147483648
      %v1189 = vxor.u32 %v1187, 2147483648
      %v1190 = vmul.f32 %v1188, 1.442695
      %v1191 = vpow.pop %v1190
      %v1192 = vmul.f32 %v1189, 1.442695
      %v1193 = vpow.pop %v1192
      %v1194 = vadd.f32 %v1191, 1.0
      %v1195 = vadd.f32 %v1193, 1.0
      %v1196 = vrcp.pop %v1194
      %v1197 = vmul.f32 %v1194, %v1196
      %v1198 = vsub.f32 1.0, %v1197
      %v1199 = vmul.f32 %v1196, %v1198
      %v1200 = vadd.f32 %v1196, %v1199
      %vm1201 = vweird.f32 %v1194
      %vm1202 = vweird.f32 %v1196
      %vm1203 = vmor %vm1201, %vm1202
      %v1204 = vsel %vm1203, %v1196, %v1200
      %v1205 = vand.u32 2147483647, %v1194
      %vm1206 = vcmp.eq.f32.partialorder %v1205, 8.507059e+37
      %v1207 = vand.u32 %v1194, 2147483648
      %v1208 = vor.u32 1.1754944e-38, %v1207
      %v1209 = vsel %vm1206, %v1208, %v1204
      %v1210 = vmul.f32 1.0, %v1209
      %v1211 = vrcp.pop %v1195
      %v1212 = vmul.f32 %v1195, %v1211
      %v1213 = vsub.f32 1.0, %v1212
      %v1214 = vmul.f32 %v1211, %v1213
      %v1215 = vadd.f32 %v1211, %v1214
      %vm1216 = vweird.f32 %v1195
      %vm1217 = vweird.f32 %v1211
      %vm1218 = vmor %vm1216, %vm1217
      %v1219 = vsel %vm1218, %v1211, %v1215
      %v1220 = vand.u32 2147483647, %v1195
      %vm1221 = vcmp.eq.f32.partialorder %v1220, 8.507059e+37
      %v1222 = vand.u32 %v1195, 2147483648
      %v1223 = vor.u32 1.1754944e-38, %v1222
      %v1224 = vsel %vm1221, %v1223, %v1219
      %v1225 = vmul.f32 1.0, %v1224
      %v1226 = vadd.f32 %v1138, %v1168
      %v1227 = vadd.f32 %v1141, %v1170
      %v1228 = vxor.u32 %v1226, 2147483648
      %v1229 = vxor.u32 %v1227, 2147483648
      %v1230 = vmul.f32 %v1228, 1.442695
      %v1231 = vpow.pop %v1230
      %v1232 = vmul.f32 %v1229, 1.442695
      %v1233 = vpow.pop %v1232
      %v1234 = vadd.f32 %v1231, 1.0
      %v1235 = vadd.f32 %v1233, 1.0
      %v1236 = vrcp.pop %v1234
      %v1237 = vmul.f32 %v1234, %v1236
      %v1238 = vsub.f32 1.0, %v1237
      %v1239 = vmul.f32 %v1236, %v1238
      %v1240 = vadd.f32 %v1236, %v1239
      %vm1241 = vweird.f32 %v1234
      %vm1242 = vweird.f32 %v1236
      %vm1243 = vmor %vm1241, %vm1242
      %v1244 = vsel %vm1243, %v1236, %v1240
      %v1245 = vand.u32 2147483647, %v1234
      %vm1246 = vcmp.eq.f32.partialorder %v1245, 8.507059e+37
      %v1247 = vand.u32 %v1234, 2147483648
      %v1248 = vor.u32 1.1754944e-38, %v1247
      %v1249 = vsel %vm1246, %v1248, %v1244
      %v1250 = vmul.f32 1.0, %v1249
      %v1251 = vrcp.pop %v1235
      %v1252 = vmul.f32 %v1235, %v1251
      %v1253 = vsub.f32 1.0, %v1252
      %v1254 = vmul.f32 %v1251, %v1253
      %v1255 = vadd.f32 %v1251, %v1254
      %vm1256 = vweird.f32 %v1235
      %vm1257 = vweird.f32 %v1251
      %vm1258 = vmor %vm1256, %vm1257
      %v1259 = vsel %vm1258, %v1251, %v1255
      %v1260 = vand.u32 2147483647, %v1235
      %vm1261 = vcmp.eq.f32.partialorder %v1260, 8.507059e+37
      %v1262 = vand.u32 %v1235, 2147483648
      %v1263 = vor.u32 1.1754944e-38, %v1262
      %v1264 = vsel %vm1261, %v1263, %v1259
      %v1265 = vmul.f32 1.0, %v1264
      %v1266 = vadd.f32 %v1182, %v622
      %v1267 = vadd.f32 %v1184, %v622
      %v1268 = vmul.f32 %v1210, %v1266
      %v1269 = vmul.f32 %v1225, %v1267
      %v1270 = vadd.f32 %v1139, %v1268
      %v1271 = vadd.f32 %v1142, %v1269
      %v1272 = vtanh.pop %v1270
      %v1273 = vtanh.pop %v1271
      %v1274 = vsub.f32 1.0, %v1250
      %v1275 = vsub.f32 1.0, %v1265
      %v1276 = vmul.f32 %v1274, %v1272
      %v1277 = vmul.f32 %v1275, %v1273
      %v1278 = vmul.f32 %v1250, %v1130
      %v1279 = vmul.f32 %v1265, %v1131
      %v1280 = vadd.f32 %v1276, %v1278
      %v1281 = vadd.f32 %v1277, %v1279
      %s1282 = sadd.s32 %s357, 4
      %v1283 = vstv %s1282
      %vm1284 = vcmp.gt.s32.totalorder %v355, %v1283
      %vm1285 = vcmp.gt.s32.totalorder %v356, %v1283
      %v1286 = vsel %vm1284, %v1280, 0.0
      %v1287 = vsel %vm1285, %v1281, 0.0
      %s1288 = scalar_lea.vmem %s309, 64
      %1289 = vst [vmem:[%s1288] sm:$0xff] %v1286
      %1290 = vst [vmem:[%s1288 + $0x8] sm:$0xff] %v1287
      %v1291 = vsel %vm1284, %v1280, %v1130
      %v1292 = vsel %vm1285, %v1281, %v1131
      %s1293 = scalar_lea.vmem %s290, 120
      %v1294 = vld [vmem:[%s1293] sm:$0xff]
      %v1295 = vld [vmem:[%s1293 + $0x8] sm:$0xf]
      %v1296 = vld [vmem:[%s1293 + $0xc] sm:$0xff]
      %v1297 = vld [vmem:[%s1293 + $0x14] sm:$0xf]
      %v1298 = vunpack.c.l.bf16 %v1294
      %v1299 = vunpack.c.h.bf16 %v1294
      %v1300 = vunpack.c.l.bf16 %v1295
      %v1301 = vunpack.c.l.bf16 %v1296
      %v1302 = vunpack.c.h.bf16 %v1296
      %v1303 = vunpack.c.l.bf16 %v1297
      %v1304 = vpack.c.bf16 %v1292, %v1291
      %1305 = vmatpush.bf16.msra.mxu0 %v472
      %1306 = vmatpush.bf16.msra.mxu0 %v469
      %1307 = vmatpush.bf16.msra.mxu0 %v466
      %1308 = vmatpush.bf16.msra.mxu0 %v463
      %1309 = vmatpush.bf16.msra.mxu0 %v460
      %1310 = vmatpush.bf16.msra.mxu0 %v457
      %1311 = vmatpush.bf16.msra.mxu0 %v454
      %1312 = vmatpush.bf16.msra.mxu0 %v451
      %1313 = vmatmul.bf16.gmra.mxu0 %v1304
      %v1314 = vpop.f32.mrf.mxu0
      %v1315 = vadd.f32 0.0, %v1314
      %v1316 = vpop.f32.mrf.mxu0
      %v1317 = vadd.f32 0.0, %v1316
      %1318 = vdwg.mxu0
      %1319 = vmatpush.bf16.msra.mxu0 %v473
      %1320 = vmatpush.bf16.msra.mxu0 %v470
      %1321 = vmatpush.bf16.msra.mxu0 %v467
      %1322 = vmatpush.bf16.msra.mxu0 %v464
      %1323 = vmatpush.bf16.msra.mxu0 %v461
      %1324 = vmatpush.bf16.msra.mxu0 %v458
      %1325 = vmatpush.bf16.msra.mxu0 %v455
      %1326 = vmatpush.bf16.msra.mxu0 %v452
      %1327 = vmatmul.bf16.gmra.mxu0 %v1304
      %v1328 = vpop.f32.mrf.mxu0
      %v1329 = vadd.f32 0.0, %v1328
      %v1330 = vpop.f32.mrf.mxu0
      %v1331 = vadd.f32 0.0, %v1330
      %1332 = vdwg.mxu0
      %1333 = vmatpush.bf16.msra.mxu0 %v474
      %1334 = vmatpush.bf16.msra.mxu0 %v471
      %1335 = vmatpush.bf16.msra.mxu0 %v468
      %1336 = vmatpush.bf16.msra.mxu0 %v465
      %1337 = vmatpush.bf16.msra.mxu0 %v462
      %1338 = vmatpush.bf16.msra.mxu0 %v459
      %1339 = vmatpush.bf16.msra.mxu0 %v456
      %1340 = vmatpush.bf16.msra.mxu0 %v453
      %1341 = vmatmul.bf16.gmra.mxu0 %v1304
      %v1342 = vpop.f32.mrf.mxu0
      %v1343 = vadd.f32 0.0, %v1342
      %v1344 = vpop.f32.mrf.mxu0
      %v1345 = vadd.f32 0.0, %v1344
      %1346 = vdwg.mxu0
      %v1347 = vadd.f32 %v1298, %v1315
      %v1348 = vadd.f32 %v1301, %v1317
      %v1349 = vxor.u32 %v1347, 2147483648
      %v1350 = vxor.u32 %v1348, 2147483648
      %v1351 = vmul.f32 %v1349, 1.442695
      %v1352 = vpow.pop %v1351
      %v1353 = vmul.f32 %v1350, 1.442695
      %v1354 = vpow.pop %v1353
      %v1355 = vadd.f32 %v1352, 1.0
      %v1356 = vadd.f32 %v1354, 1.0
      %v1357 = vrcp.pop %v1355
      %v1358 = vmul.f32 %v1355, %v1357
      %v1359 = vsub.f32 1.0, %v1358
      %v1360 = vmul.f32 %v1357, %v1359
      %v1361 = vadd.f32 %v1357, %v1360
      %vm1362 = vweird.f32 %v1355
      %vm1363 = vweird.f32 %v1357
      %vm1364 = vmor %vm1362, %vm1363
      %v1365 = vsel %vm1364, %v1357, %v1361
      %v1366 = vand.u32 2147483647, %v1355
      %vm1367 = vcmp.eq.f32.partialorder %v1366, 8.507059e+37
      %v1368 = vand.u32 %v1355, 2147483648
      %v1369 = vor.u32 1.1754944e-38, %v1368
      %v1370 = vsel %vm1367, %v1369, %v1365
      %v1371 = vmul.f32 1.0, %v1370
      %v1372 = vrcp.pop %v1356
      %v1373 = vmul.f32 %v1356, %v1372
      %v1374 = vsub.f32 1.0, %v1373
      %v1375 = vmul.f32 %v1372, %v1374
      %v1376 = vadd.f32 %v1372, %v1375
      %vm1377 = vweird.f32 %v1356
      %vm1378 = vweird.f32 %v1372
      %vm1379 = vmor %vm1377, %vm1378
      %v1380 = vsel %vm1379, %v1372, %v1376
      %v1381 = vand.u32 2147483647, %v1356
      %vm1382 = vcmp.eq.f32.partialorder %v1381, 8.507059e+37
      %v1383 = vand.u32 %v1356, 2147483648
      %v1384 = vor.u32 1.1754944e-38, %v1383
      %v1385 = vsel %vm1382, %v1384, %v1380
      %v1386 = vmul.f32 1.0, %v1385
      %v1387 = vadd.f32 %v1299, %v1329
      %v1388 = vadd.f32 %v1302, %v1331
      %v1389 = vxor.u32 %v1387, 2147483648
      %v1390 = vxor.u32 %v1388, 2147483648
      %v1391 = vmul.f32 %v1389, 1.442695
      %v1392 = vpow.pop %v1391
      %v1393 = vmul.f32 %v1390, 1.442695
      %v1394 = vpow.pop %v1393
      %v1395 = vadd.f32 %v1392, 1.0
      %v1396 = vadd.f32 %v1394, 1.0
      %v1397 = vrcp.pop %v1395
      %v1398 = vmul.f32 %v1395, %v1397
      %v1399 = vsub.f32 1.0, %v1398
      %v1400 = vmul.f32 %v1397, %v1399
      %v1401 = vadd.f32 %v1397, %v1400
      %vm1402 = vweird.f32 %v1395
      %vm1403 = vweird.f32 %v1397
      %vm1404 = vmor %vm1402, %vm1403
      %v1405 = vsel %vm1404, %v1397, %v1401
      %v1406 = vand.u32 2147483647, %v1395
      %vm1407 = vcmp.eq.f32.partialorder %v1406, 8.507059e+37
      %v1408 = vand.u32 %v1395, 2147483648
      %v1409 = vor.u32 1.1754944e-38, %v1408
      %v1410 = vsel %vm1407, %v1409, %v1405
      %v1411 = vmul.f32 1.0, %v1410
      %v1412 = vrcp.pop %v1396
      %v1413 = vmul.f32 %v1396, %v1412
      %v1414 = vsub.f32 1.0, %v1413
      %v1415 = vmul.f32 %v1412, %v1414
      %v1416 = vadd.f32 %v1412, %v1415
      %vm1417 = vweird.f32 %v1396
      %vm1418 = vweird.f32 %v1412
      %vm1419 = vmor %vm1417, %vm1418
      %v1420 = vsel %vm1419, %v1412, %v1416
      %v1421 = vand.u32 2147483647, %v1396
      %vm1422 = vcmp.eq.f32.partialorder %v1421, 8.507059e+37
      %v1423 = vand.u32 %v1396, 2147483648
      %v1424 = vor.u32 1.1754944e-38, %v1423
      %v1425 = vsel %vm1422, %v1424, %v1420
      %v1426 = vmul.f32 1.0, %v1425
      %v1427 = vadd.f32 %v1343, %v622
      %v1428 = vadd.f32 %v1345, %v622
      %v1429 = vmul.f32 %v1371, %v1427
      %v1430 = vmul.f32 %v1386, %v1428
      %v1431 = vadd.f32 %v1300, %v1429
      %v1432 = vadd.f32 %v1303, %v1430
      %v1433 = vtanh.pop %v1431
      %v1434 = vtanh.pop %v1432
      %v1435 = vsub.f32 1.0, %v1411
      %v1436 = vsub.f32 1.0, %v1426
      %v1437 = vmul.f32 %v1435, %v1433
      %v1438 = vmul.f32 %v1436, %v1434
      %v1439 = vmul.f32 %v1411, %v1291
      %v1440 = vmul.f32 %v1426, %v1292
      %v1441 = vadd.f32 %v1437, %v1439
      %v1442 = vadd.f32 %v1438, %v1440
      %s1443 = sadd.s32 %s357, 5
      %v1444 = vstv %s1443
      %vm1445 = vcmp.gt.s32.totalorder %v355, %v1444
      %vm1446 = vcmp.gt.s32.totalorder %v356, %v1444
      %v1447 = vsel %vm1445, %v1441, 0.0
      %v1448 = vsel %vm1446, %v1442, 0.0
      %s1449 = scalar_lea.vmem %s309, 80
      %1450 = vst [vmem:[%s1449] sm:$0xff] %v1447
      %1451 = vst [vmem:[%s1449 + $0x8] sm:$0xff] %v1448
      %v1452 = vsel %vm1445, %v1441, %v1291
      %v1453 = vsel %vm1446, %v1442, %v1292
      %s1454 = scalar_lea.vmem %s290, 144
      %v1455 = vld [vmem:[%s1454] sm:$0xff]
      %v1456 = vld [vmem:[%s1454 + $0x8] sm:$0xf]
      %v1457 = vld [vmem:[%s1454 + $0xc] sm:$0xff]
      %v1458 = vld [vmem:[%s1454 + $0x14] sm:$0xf]
      %v1459 = vunpack.c.l.bf16 %v1455
      %v1460 = vunpack.c.h.bf16 %v1455
      %v1461 = vunpack.c.l.bf16 %v1456
      %v1462 = vunpack.c.l.bf16 %v1457
      %v1463 = vunpack.c.h.bf16 %v1457
      %v1464 = vunpack.c.l.bf16 %v1458
      %v1465 = vpack.c.bf16 %v1453, %v1452
      %1466 = vmatpush.bf16.msra.mxu0 %v472
      %1467 = vmatpush.bf16.msra.mxu0 %v469
      %1468 = vmatpush.bf16.msra.mxu0 %v466
      %1469 = vmatpush.bf16.msra.mxu0 %v463
      %1470 = vmatpush.bf16.msra.mxu0 %v460
      %1471 = vmatpush.bf16.msra.mxu0 %v457
      %1472 = vmatpush.bf16.msra.mxu0 %v454
      %1473 = vmatpush.bf16.msra.mxu0 %v451
      %1474 = vmatmul.bf16.gmra.mxu0 %v1465
      %v1475 = vpop.f32.mrf.mxu0
      %v1476 = vadd.f32 0.0, %v1475
      %v1477 = vpop.f32.mrf.mxu0
      %v1478 = vadd.f32 0.0, %v1477
      %1479 = vdwg.mxu0
      %1480 = vmatpush.bf16.msra.mxu0 %v473
      %1481 = vmatpush.bf16.msra.mxu0 %v470
      %1482 = vmatpush.bf16.msra.mxu0 %v467
      %1483 = vmatpush.bf16.msra.mxu0 %v464
      %1484 = vmatpush.bf16.msra.mxu0 %v461
      %1485 = vmatpush.bf16.msra.mxu0 %v458
      %1486 = vmatpush.bf16.msra.mxu0 %v455
      %1487 = vmatpush.bf16.msra.mxu0 %v452
      %1488 = vmatmul.bf16.gmra.mxu0 %v1465
      %v1489 = vpop.f32.mrf.mxu0
      %v1490 = vadd.f32 0.0, %v1489
      %v1491 = vpop.f32.mrf.mxu0
      %v1492 = vadd.f32 0.0, %v1491
      %1493 = vdwg.mxu0
      %1494 = vmatpush.bf16.msra.mxu0 %v474
      %1495 = vmatpush.bf16.msra.mxu0 %v471
      %1496 = vmatpush.bf16.msra.mxu0 %v468
      %1497 = vmatpush.bf16.msra.mxu0 %v465
      %1498 = vmatpush.bf16.msra.mxu0 %v462
      %1499 = vmatpush.bf16.msra.mxu0 %v459
      %1500 = vmatpush.bf16.msra.mxu0 %v456
      %1501 = vmatpush.bf16.msra.mxu0 %v453
      %1502 = vmatmul.bf16.gmra.mxu0 %v1465
      %v1503 = vpop.f32.mrf.mxu0
      %v1504 = vadd.f32 0.0, %v1503
      %v1505 = vpop.f32.mrf.mxu0
      %v1506 = vadd.f32 0.0, %v1505
      %1507 = vdwg.mxu0
      %v1508 = vadd.f32 %v1459, %v1476
      %v1509 = vadd.f32 %v1462, %v1478
      %v1510 = vxor.u32 %v1508, 2147483648
      %v1511 = vxor.u32 %v1509, 2147483648
      %v1512 = vmul.f32 %v1510, 1.442695
      %v1513 = vpow.pop %v1512
      %v1514 = vmul.f32 %v1511, 1.442695
      %v1515 = vpow.pop %v1514
      %v1516 = vadd.f32 %v1513, 1.0
      %v1517 = vadd.f32 %v1515, 1.0
      %v1518 = vrcp.pop %v1516
      %v1519 = vmul.f32 %v1516, %v1518
      %v1520 = vsub.f32 1.0, %v1519
      %v1521 = vmul.f32 %v1518, %v1520
      %v1522 = vadd.f32 %v1518, %v1521
      %vm1523 = vweird.f32 %v1516
      %vm1524 = vweird.f32 %v1518
      %vm1525 = vmor %vm1523, %vm1524
      %v1526 = vsel %vm1525, %v1518, %v1522
      %v1527 = vand.u32 2147483647, %v1516
      %vm1528 = vcmp.eq.f32.partialorder %v1527, 8.507059e+37
      %v1529 = vand.u32 %v1516, 2147483648
      %v1530 = vor.u32 1.1754944e-38, %v1529
      %v1531 = vsel %vm1528, %v1530, %v1526
      %v1532 = vmul.f32 1.0, %v1531
      %v1533 = vrcp.pop %v1517
      %v1534 = vmul.f32 %v1517, %v1533
      %v1535 = vsub.f32 1.0, %v1534
      %v1536 = vmul.f32 %v1533, %v1535
      %v1537 = vadd.f32 %v1533, %v1536
      %vm1538 = vweird.f32 %v1517
      %vm1539 = vweird.f32 %v1533
      %vm1540 = vmor %vm1538, %vm1539
      %v1541 = vsel %vm1540, %v1533, %v1537
      %v1542 = vand.u32 2147483647, %v1517
      %vm1543 = vcmp.eq.f32.partialorder %v1542, 8.507059e+37
      %v1544 = vand.u32 %v1517, 2147483648
      %v1545 = vor.u32 1.1754944e-38, %v1544
      %v1546 = vsel %vm1543, %v1545, %v1541
      %v1547 = vmul.f32 1.0, %v1546
      %v1548 = vadd.f32 %v1460, %v1490
      %v1549 = vadd.f32 %v1463, %v1492
      %v1550 = vxor.u32 %v1548, 2147483648
      %v1551 = vxor.u32 %v1549, 2147483648
      %v1552 = vmul.f32 %v1550, 1.442695
      %v1553 = vpow.pop %v1552
      %v1554 = vmul.f32 %v1551, 1.442695
      %v1555 = vpow.pop %v1554
      %v1556 = vadd.f32 %v1553, 1.0
      %v1557 = vadd.f32 %v1555, 1.0
      %v1558 = vrcp.pop %v1556
      %v1559 = vmul.f32 %v1556, %v1558
      %v1560 = vsub.f32 1.0, %v1559
      %v1561 = vmul.f32 %v1558, %v1560
      %v1562 = vadd.f32 %v1558, %v1561
      %vm1563 = vweird.f32 %v1556
      %vm1564 = vweird.f32 %v1558
      %vm1565 = vmor %vm1563, %vm1564
      %v1566 = vsel %vm1565, %v1558, %v1562
      %v1567 = vand.u32 2147483647, %v1556
      %vm1568 = vcmp.eq.f32.partialorder %v1567, 8.507059e+37
      %v1569 = vand.u32 %v1556, 2147483648
      %v1570 = vor.u32 1.1754944e-38, %v1569
      %v1571 = vsel %vm1568, %v1570, %v1566
      %v1572 = vmul.f32 1.0, %v1571
      %v1573 = vrcp.pop %v1557
      %v1574 = vmul.f32 %v1557, %v1573
      %v1575 = vsub.f32 1.0, %v1574
      %v1576 = vmul.f32 %v1573, %v1575
      %v1577 = vadd.f32 %v1573, %v1576
      %vm1578 = vweird.f32 %v1557
      %vm1579 = vweird.f32 %v1573
      %vm1580 = vmor %vm1578, %vm1579
      %v1581 = vsel %vm1580, %v1573, %v1577
      %v1582 = vand.u32 2147483647, %v1557
      %vm1583 = vcmp.eq.f32.partialorder %v1582, 8.507059e+37
      %v1584 = vand.u32 %v1557, 2147483648
      %v1585 = vor.u32 1.1754944e-38, %v1584
      %v1586 = vsel %vm1583, %v1585, %v1581
      %v1587 = vmul.f32 1.0, %v1586
      %v1588 = vadd.f32 %v1504, %v622
      %v1589 = vadd.f32 %v1506, %v622
      %v1590 = vmul.f32 %v1532, %v1588
      %v1591 = vmul.f32 %v1547, %v1589
      %v1592 = vadd.f32 %v1461, %v1590
      %v1593 = vadd.f32 %v1464, %v1591
      %v1594 = vtanh.pop %v1592
      %v1595 = vtanh.pop %v1593
      %v1596 = vsub.f32 1.0, %v1572
      %v1597 = vsub.f32 1.0, %v1587
      %v1598 = vmul.f32 %v1596, %v1594
      %v1599 = vmul.f32 %v1597, %v1595
      %v1600 = vmul.f32 %v1572, %v1452
      %v1601 = vmul.f32 %v1587, %v1453
      %v1602 = vadd.f32 %v1598, %v1600
      %v1603 = vadd.f32 %v1599, %v1601
      %s1604 = sadd.s32 %s357, 6
      %v1605 = vstv %s1604
      %vm1606 = vcmp.gt.s32.totalorder %v355, %v1605
      %vm1607 = vcmp.gt.s32.totalorder %v356, %v1605
      %v1608 = vsel %vm1606, %v1602, 0.0
      %v1609 = vsel %vm1607, %v1603, 0.0
      %s1610 = scalar_lea.vmem %s309, 96
      %1611 = vst [vmem:[%s1610] sm:$0xff] %v1608
      %1612 = vst [vmem:[%s1610 + $0x8] sm:$0xff] %v1609
      %v1613 = vsel %vm1606, %v1602, %v1452
      %v1614 = vsel %vm1607, %v1603, %v1453
      %s1615 = scalar_lea.vmem %s290, 168
      %v1616 = vld [vmem:[%s1615] sm:$0xff]
      %v1617 = vld [vmem:[%s1615 + $0x8] sm:$0xf]
      %v1618 = vld [vmem:[%s1615 + $0xc] sm:$0xff]
      %v1619 = vld [vmem:[%s1615 + $0x14] sm:$0xf]
      %v1620 = vunpack.c.l.bf16 %v1616
      %v1621 = vunpack.c.h.bf16 %v1616
      %v1622 = vunpack.c.l.bf16 %v1617
      %v1623 = vunpack.c.l.bf16 %v1618
      %v1624 = vunpack.c.h.bf16 %v1618
      %v1625 = vunpack.c.l.bf16 %v1619
      %v1626 = vpack.c.bf16 %v1614, %v1613
      %1627 = vmatpush.bf16.msra.mxu0 %v472
      %1628 = vmatpush.bf16.msra.mxu0 %v469
      %1629 = vmatpush.bf16.msra.mxu0 %v466
      %1630 = vmatpush.bf16.msra.mxu0 %v463
      %1631 = vmatpush.bf16.msra.mxu0 %v460
      %1632 = vmatpush.bf16.msra.mxu0 %v457
      %1633 = vmatpush.bf16.msra.mxu0 %v454
      %1634 = vmatpush.bf16.msra.mxu0 %v451
      %1635 = vmatmul.bf16.gmra.mxu0 %v1626
      %v1636 = vpop.f32.mrf.mxu0
      %v1637 = vadd.f32 0.0, %v1636
      %v1638 = vpop.f32.mrf.mxu0
      %v1639 = vadd.f32 0.0, %v1638
      %1640 = vdwg.mxu0
      %1641 = vmatpush.bf16.msra.mxu0 %v473
      %1642 = vmatpush.bf16.msra.mxu0 %v470
      %1643 = vmatpush.bf16.msra.mxu0 %v467
      %1644 = vmatpush.bf16.msra.mxu0 %v464
      %1645 = vmatpush.bf16.msra.mxu0 %v461
      %1646 = vmatpush.bf16.msra.mxu0 %v458
      %1647 = vmatpush.bf16.msra.mxu0 %v455
      %1648 = vmatpush.bf16.msra.mxu0 %v452
      %1649 = vmatmul.bf16.gmra.mxu0 %v1626
      %v1650 = vpop.f32.mrf.mxu0
      %v1651 = vadd.f32 0.0, %v1650
      %v1652 = vpop.f32.mrf.mxu0
      %v1653 = vadd.f32 0.0, %v1652
      %1654 = vdwg.mxu0
      %1655 = vmatpush.bf16.msra.mxu0 %v474
      %1656 = vmatpush.bf16.msra.mxu0 %v471
      %1657 = vmatpush.bf16.msra.mxu0 %v468
      %1658 = vmatpush.bf16.msra.mxu0 %v465
      %1659 = vmatpush.bf16.msra.mxu0 %v462
      %1660 = vmatpush.bf16.msra.mxu0 %v459
      %1661 = vmatpush.bf16.msra.mxu0 %v456
      %1662 = vmatpush.bf16.msra.mxu0 %v453
      %1663 = vmatmul.bf16.gmra.mxu0 %v1626
      %v1664 = vpop.f32.mrf.mxu0
      %v1665 = vadd.f32 0.0, %v1664
      %v1666 = vpop.f32.mrf.mxu0
      %v1667 = vadd.f32 0.0, %v1666
      %1668 = vdwg.mxu0
      %v1669 = vadd.f32 %v1620, %v1637
      %v1670 = vadd.f32 %v1623, %v1639
      %v1671 = vxor.u32 %v1669, 2147483648
      %v1672 = vxor.u32 %v1670, 2147483648
      %v1673 = vmul.f32 %v1671, 1.442695
      %v1674 = vpow.pop %v1673
      %v1675 = vmul.f32 %v1672, 1.442695
      %v1676 = vpow.pop %v1675
      %v1677 = vadd.f32 %v1674, 1.0
      %v1678 = vadd.f32 %v1676, 1.0
      %v1679 = vrcp.pop %v1677
      %v1680 = vmul.f32 %v1677, %v1679
      %v1681 = vsub.f32 1.0, %v1680
      %v1682 = vmul.f32 %v1679, %v1681
      %v1683 = vadd.f32 %v1679, %v1682
      %vm1684 = vweird.f32 %v1677
      %vm1685 = vweird.f32 %v1679
      %vm1686 = vmor %vm1684, %vm1685
      %v1687 = vsel %vm1686, %v1679, %v1683
      %v1688 = vand.u32 2147483647, %v1677
      %vm1689 = vcmp.eq.f32.partialorder %v1688, 8.507059e+37
      %v1690 = vand.u32 %v1677, 2147483648
      %v1691 = vor.u32 1.1754944e-38, %v1690
      %v1692 = vsel %vm1689, %v1691, %v1687
      %v1693 = vmul.f32 1.0, %v1692
      %v1694 = vrcp.pop %v1678
      %v1695 = vmul.f32 %v1678, %v1694
      %v1696 = vsub.f32 1.0, %v1695
      %v1697 = vmul.f32 %v1694, %v1696
      %v1698 = vadd.f32 %v1694, %v1697
      %vm1699 = vweird.f32 %v1678
      %vm1700 = vweird.f32 %v1694
      %vm1701 = vmor %vm1699, %vm1700
      %v1702 = vsel %vm1701, %v1694, %v1698
      %v1703 = vand.u32 2147483647, %v1678
      %vm1704 = vcmp.eq.f32.partialorder %v1703, 8.507059e+37
      %v1705 = vand.u32 %v1678, 2147483648
      %v1706 = vor.u32 1.1754944e-38, %v1705
      %v1707 = vsel %vm1704, %v1706, %v1702
      %v1708 = vmul.f32 1.0, %v1707
      %v1709 = vadd.f32 %v1621, %v1651
      %v1710 = vadd.f32 %v1624, %v1653
      %v1711 = vxor.u32 %v1709, 2147483648
      %v1712 = vxor.u32 %v1710, 2147483648
      %v1713 = vmul.f32 %v1711, 1.442695
      %v1714 = vpow.pop %v1713
      %v1715 = vmul.f32 %v1712, 1.442695
      %v1716 = vpow.pop %v1715
      %v1717 = vadd.f32 %v1714, 1.0
      %v1718 = vadd.f32 %v1716, 1.0
      %v1719 = vrcp.pop %v1717
      %v1720 = vmul.f32 %v1717, %v1719
      %v1721 = vsub.f32 1.0, %v1720
      %v1722 = vmul.f32 %v1719, %v1721
      %v1723 = vadd.f32 %v1719, %v1722
      %vm1724 = vweird.f32 %v1717
      %vm1725 = vweird.f32 %v1719
      %vm1726 = vmor %vm1724, %vm1725
      %v1727 = vsel %vm1726, %v1719, %v1723
      %v1728 = vand.u32 2147483647, %v1717
      %vm1729 = vcmp.eq.f32.partialorder %v1728, 8.507059e+37
      %v1730 = vand.u32 %v1717, 2147483648
      %v1731 = vor.u32 1.1754944e-38, %v1730
      %v1732 = vsel %vm1729, %v1731, %v1727
      %v1733 = vmul.f32 1.0, %v1732
      %v1734 = vrcp.pop %v1718
      %v1735 = vmul.f32 %v1718, %v1734
      %v1736 = vsub.f32 1.0, %v1735
      %v1737 = vmul.f32 %v1734, %v1736
      %v1738 = vadd.f32 %v1734, %v1737
      %vm1739 = vweird.f32 %v1718
      %vm1740 = vweird.f32 %v1734
      %vm1741 = vmor %vm1739, %vm1740
      %v1742 = vsel %vm1741, %v1734, %v1738
      %v1743 = vand.u32 2147483647, %v1718
      %vm1744 = vcmp.eq.f32.partialorder %v1743, 8.507059e+37
      %v1745 = vand.u32 %v1718, 2147483648
      %v1746 = vor.u32 1.1754944e-38, %v1745
      %v1747 = vsel %vm1744, %v1746, %v1742
      %v1748 = vmul.f32 1.0, %v1747
      %v1749 = vadd.f32 %v1665, %v622
      %v1750 = vadd.f32 %v1667, %v622
      %v1751 = vmul.f32 %v1693, %v1749
      %v1752 = vmul.f32 %v1708, %v1750
      %v1753 = vadd.f32 %v1622, %v1751
      %v1754 = vadd.f32 %v1625, %v1752
      %v1755 = vtanh.pop %v1753
      %v1756 = vtanh.pop %v1754
      %v1757 = vsub.f32 1.0, %v1733
      %v1758 = vsub.f32 1.0, %v1748
      %v1759 = vmul.f32 %v1757, %v1755
      %v1760 = vmul.f32 %v1758, %v1756
      %v1761 = vmul.f32 %v1733, %v1613
      %v1762 = vmul.f32 %v1748, %v1614
      %v1763 = vadd.f32 %v1759, %v1761
      %v1764 = vadd.f32 %v1760, %v1762
      %s1765 = sadd.s32 %s357, 7
      %v1766 = vstv %s1765
      %vm1767 = vcmp.gt.s32.totalorder %v355, %v1766
      %vm1768 = vcmp.gt.s32.totalorder %v356, %v1766
      %v1769 = vsel %vm1767, %v1763, 0.0
      %v1770 = vsel %vm1768, %v1764, 0.0
      %s1771 = scalar_lea.vmem %s309, 112
      %1772 = vst [vmem:[%s1771] sm:$0xff] %v1769
      %1773 = vst [vmem:[%s1771 + $0x8] sm:$0xff] %v1770
      %v1774 = vsel %vm1767, %v1763, %v1613
      %v1775 = vsel %vm1768, %v1764, %v1614
      %1776 = vst [vmem:[#allocation2] sm:$0xff] %v1774
      %1777 = vst [vmem:[#allocation2 + $0x8] sm:$0xff] %v1775
      // Predicated region
      $region41: #{encoder_forward.3} parent=35 // pred_check
        %p1778 = pneg %p316
      $region42: #{encoder_forward.3} parent=35 // pred_check_branch
        %1780 = sbr.rel (%p1778) target = $region44
      $region43: #{encoder_forward.3} parent=35 // pred_region
        %1781 = vst [vmem:[%s315] sm:$0xff] %v1774
        %1782 = vst [vmem:[%s315 + $0x8] sm:$0xff] %v1775
      $region44: #{encoder_forward.3} parent=35 // pred_fallthru
        _
      %s1783 = smul.u32 8, %s22
      %p1784 = scmp.lt.s32.totalorder %s21, 1
      %s1785 = scalar_select %p1784, %s21, 1
      %p1786 = scmp.lt.s32.totalorder %s1783, 7
      %s1787 = scalar_select %p1786, %s1783, 7
      %s1788 = smul.addr %s1787, 2
      %s1789 = smul.addr %s1785, 16
      %s1790 = sadd.s32 %s1788, %s1789
      %s1791 = smul.addr %s1790, 8
      %s1792 = scalar_lea.vmem %s4, %s1791
      %p1793 = scmp.lt.s32.totalorder %s21, 1
      %s1794 = scalar_select %p1793, %s21, 1
      %s1795 = smul.addr %s1794, 2
      %s1796 = smul.addr %s1795, 8
      %s1797 = scalar_lea.vmem %s5, %s1796
      // Predicated region
      $region45: #{encoder_forward.3} parent=35 // pred_check
        %p1798 = pneg %p150
      $region46: #{encoder_forward.3} parent=35 // pred_check_branch
        %1800 = sbr.rel (%p1798) target = $region48
      $region47: #{encoder_forward.3} parent=35 // pred_region
        %s1801 = smul.u32 8, %s22
      $region48: #{encoder_forward.3} parent=35 // pred_fallthru
        _
      // Predicated region
      $region49: #{encoder_forward.3} parent=35 // pred_check
        %p1802 = pneg %p176
      $region50: #{encoder_forward.3} parent=35 // pred_check_branch
        %1804 = sbr.rel (%p1802) target = $region52
      $region51: #{encoder_forward.3} parent=35 // pred_region
        _
      $region52: #{encoder_forward.3} parent=35 // pred_fallthru
        _
    $region36: #{encoder_forward.3} parent=5 // pred_fallthru
      _
    %p1805 = scmp.le.s32.totalorder 2, %s12
    // Predicated region
    $region53: #{encoder_forward.3} parent=5 // pred_check
      %p1806 = pneg %p1805
    $region54: #{encoder_forward.3} parent=5 // pred_check_branch
      %1808 = sbr.rel (%p1806) target = $region56
    $region55: #{encoder_forward.3} parent=5 // pred_region
      %s1809 = ssub.s32 %s12, 2
      // Predicated region
      $region57: #{encoder_forward.3} parent=55 // pred_check
        %p1810 = pneg %p156
      $region58: #{encoder_forward.3} parent=55 // pred_check_branch
        %1812 = sbr.rel (%p1810) target = $region60
      $region59: #{encoder_forward.3} parent=55 // pred_region
        %s1813 = smul.u32 8, %s24
        %p1814 = scmp.lt.s32.totalorder %s23, 1
        %s1815 = scalar_select %p1814, %s23, 1
        %p1816 = scmp.lt.s32.totalorder %s1813, 7
        %s1817 = scalar_select %p1816, %s1813, 7
        %s1818 = smul.addr %s1817, 2
        %s1819 = smul.addr %s1815, 16
        %s1820 = sadd.s32 %s1818, %s1819
        %s1821 = smul.addr %s1820, 8
        %s1822 = scalar_lea.vmem %s4, %s1821
      $region60: #{encoder_forward.3} parent=55 // pred_fallthru
        _
      // Predicated region
      $region61: #{encoder_forward.3} parent=55 // pred_check
        %p1823 = pneg %p182
      $region62: #{encoder_forward.3} parent=55 // pred_check_branch
        %1825 = sbr.rel (%p1823) target = $region64
      $region63: #{encoder_forward.3} parent=55 // pred_region
        %p1826 = scmp.lt.s32.totalorder %s23, 1
        %s1827 = scalar_select %p1826, %s23, 1
        %s1828 = smul.addr %s1827, 2
        %s1829 = smul.addr %s1828, 8
        %s1830 = scalar_lea.vmem %s5, %s1829
      $region64: #{encoder_forward.3} parent=55 // pred_fallthru
        _
    $region56: #{encoder_forward.3} parent=5 // pred_fallthru
      _
  $region6: #{encoder_forward.3} parent=0 // loop_footer
    %s16 = sadd.s32 1, %s12
  $region7: #{encoder_forward.3} parent=0 // loop_footer_branch
    %11 = sbr.rel target = $region3
  $region8: #{encoder_forward.3} parent=0 // loop_exit
    _

</llo_original>
